<compile_context>
chip_gen: v7x
topology: tpu7x:2x2x1
jax: 0.10.0
libtpu: 0.0.40
codegen_flags: <defaults>
</compile_context>

<pallas_src>
import math

import numpy as np
import jax
import jax.numpy as jnp
from jax import lax
from jax.scipy.special import erf as jax_erf
from jax.experimental import pallas as pl
from jax.experimental.pallas import tpu as pltpu


# ----------------------------------------------------------------------------
# helpers
# ----------------------------------------------------------------------------
def _make_divisible(v, divisor=8, min_value=None):
    # torchvision's _make_divisible (SE squeeze channels)
    if min_value is None:
        min_value = divisor
    new_v = max(min_value, int(v + divisor / 2) // divisor * divisor)
    if new_v < 0.9 * v:
        new_v += divisor
    return new_v


def _erf(x):
    # erf via Abramowitz & Stegun 7.1.26, |abs err| <= 1.5e-7 (~ f32 ulp).
    # The exp lands on the EUP (free slot); the rest is a short VPU chain.
    a1, a2, a3, a4, a5 = 0.254829592, -0.284496736, 1.421413741, -1.453152027, 1.061405429
    p = 0.3275911
    s = jnp.where(x >= 0.0, 1.0, -1.0)
    ax = jnp.abs(x)
    t = 1.0 / (1.0 + p * ax)
    poly = ((((a5 * t + a4) * t + a3) * t + a2) * t + a1) * t
    return s * (1.0 - poly * jnp.exp(-ax * ax))


def _mxu(a, w_bf16):
    # activations cast in-kernel; weights already arrive as bf16 from HBM.
    # bf16 operands + f32 accumulation is the native MXU path on v5e/v6e/v7x.
    return jnp.dot(a.astype(jnp.bfloat16), w_bf16, preferred_element_type=jnp.float32)


# ----------------------------------------------------------------------------
# the fused LDPBlock kernel (Bt batch elements per grid step)
# ----------------------------------------------------------------------------
def _make_ldp_kernel(*, H, W, C, Bt, eps=1e-5):
    P1 = H * W
    Ho = (H - 1) // 2 + 1
    Wo = (W - 1) // 2 + 1
    P2 = Ho * Wo

    def _layer_norm(z, g, b):
        mu = jnp.mean(z, axis=-1, keepdims=True)
        var = jnp.mean(jnp.square(z - mu), axis=-1, keepdims=True)
        return (z - mu) * lax.rsqrt(var + eps) * g + b

    def _hardswish(z):
        return z * (jnp.clip(z + 3.0, 0.0, 6.0) * (1.0 / 6.0))

    def _hardsigmoid(z):
        return jnp.clip(z + 3.0, 0.0, 6.0) * (1.0 / 6.0)

    def kernel(x_ref,
               w1_ref, b1_ref, w2_ref, b2_ref,
               dwA_ref, g1A_ref, be1A_ref, sw1A_ref, sb1A_ref,
               sw2A_ref, sb2A_ref, pwA_ref, g2A_ref, be2A_ref,
               dwB_ref, g1B_ref, be1B_ref, sw1B_ref, sb1B_ref,
               sw2B_ref, sb2B_ref, pwB_ref, g2B_ref, be2B_ref,
               o_ref, pad_ref, flat_ref):
        # ---- zero ONLY the 1-pixel border ring of the padded scratch, every step ----
        # (Not gated on program_id==0: each TensorCore has its own scratch under
        #  megacore "parallel" splitting, so only one core would ever see step 0.
        #  Ring-only zeroing keeps the cost negligible; the interior [1:H+1,1:W+1] is
        #  fully rewritten before every tap read -- see INVARIANT below.)
        zrow = jnp.zeros((1, W + 2, C), jnp.float32)
        zcol = jnp.zeros((H + 2, 1, C), jnp.float32)
        pad_ref[pl.ds(0, 1), :, :] = zrow
        pad_ref[pl.ds(H + 1, 1), :, :] = zrow
        pad_ref[:, pl.ds(0, 1), :] = zcol
        pad_ref[:, pl.ds(W + 1, 1), :] = zcol

        # ---- token MLP batched over all Bt images: Linear -> GELU(exact) -> Linear ----
        inc = x_ref.shape[-1]
        x = x_ref[...].reshape(Bt * P1, inc)                         # merge batch rows
        h = _mxu(x, w1_ref[...]) + b1_ref[...]
        h = 0.5 * h * (1.0 + _erf(h * 0.7071067811865476))           # exact GELU
        y = _mxu(h, w2_ref[...]) + b2_ref[...]                       # (Bt*P1, C): NHWC rows

        blkA = (dwA_ref, g1A_ref[...], be1A_ref[...], sw1A_ref[...], sb1A_ref[...],
                sw2A_ref[...], sb2A_ref[...], pwA_ref[...], g2A_ref[...], be2A_ref[...])
        blkB = (dwB_ref, g1B_ref[...], be1B_ref[...], sw1B_ref[...], sb1B_ref[...],
                sw2B_ref[...], sb2B_ref[...], pwB_ref[...], g2B_ref[...], be2B_ref[...])

        def inverted_residual(z_flat, dw_ref, g1, be1, sw1, sb1, sw2, sb2, pw, g2, be2,
                              *, stride2):
            # ---- depthwise 3x3 (pad=1, bias=False): write interior once, 9 shifted taps
            # INVARIANT: the interior is fully rewritten here before any tap read below;
            # only the (persistently zero) border ring is read without being rewritten.
            pad_ref[pl.ds(1, H), pl.ds(1, W), :] = z_flat.reshape(H, W, C)
            Hs, Ws = (Ho, Wo) if stride2 else (H, W)
            acc = jnp.zeros((Hs, Ws, C), jnp.float32)
            for di in range(3):
                for dj in range(3):
                    k = 3 * di + dj
                    if stride2:
                        # stride-2 conv = sample the taps directly (strided reads):
                        # 4x less FMA than conv-then-downsample, exact f32, no MXU push.
                        tap = pad_ref[pl.ds(di, Ho, stride=2),
                                      pl.ds(dj, Wo, stride=2), :]
                    else:
                        tap = pad_ref[pl.ds(di, H), pl.ds(dj, W), :]
                    dwk = dw_ref[pl.ds(k, 1), :].reshape(1, 1, C)
                    acc = acc + tap * dwk
            if stride2:
                # (Ho, Wo, C) -> (P2, C) through VMEM: Wo is not a multiple of the
                # 8-row sublane tile, so flatten with explicit row stores instead of an
                # in-register reshape (which would need a sublane repack).
                for i in range(Ho):
                    flat_ref[pl.ds(i * Wo, Wo), :] = acc[i]
                c = flat_ref[...]
            else:
                c = acc.reshape(P1, C)        # W is a multiple of 8 -> free merge

            # ---- LayerNormAct2d (channel LN, no act) -> Hardswish ----
            a = _hardswish(_layer_norm(c, g1, be1))

            # ---- Squeeze-Excitation entirely on VPU/XLU (tiny GEMVs; keep off the MXU)
            pooled = jnp.mean(a, axis=0, keepdims=True)                # (1, C)
            s1 = jnp.sum(sw1 * pooled, axis=-1, keepdims=True) + sb1   # (SQ, 1)
            s1 = jnp.maximum(s1, 0.0)                                  # ReLU
            s2 = jnp.sum(sw2 * s1, axis=0, keepdims=True) + sb2        # (1, C)
            a = a * _hardsigmoid(s2)                                   # Hardsigmoid gate

            # ---- 1x1 projection (one MXU matmul, bf16 weights / f32 acc) -> LN ----
            out = _layer_norm(_mxu(a, pw), g2, be2)
            if not stride2:                                            # use_res_connect
                out = out + z_flat
            return out

        outs = []
        for b in range(Bt):                    # Bt is small & static -> unrolled
            z0 = y[b * P1:(b + 1) * P1]
            z1 = inverted_residual(z0, *blkA, stride2=False)
            z2 = inverted_residual(z1, *blkB, stride2=True)
            outs.append(z2.reshape(1, P2, C))
        z = outs[0] if Bt == 1 else jnp.concatenate(outs, axis=0)
        # single (Bt, P2, C) block store per grid step (lane-masked only while C < 128;
        # at production C >= 128 the store is already lane-dense).
        o_ref[...] = z.astype(o_ref.dtype)

    return kernel


def _block_arg_list(bp):
    return [bp["dw"], bp["g1"], bp["b1"], bp["sw1"], bp["sb1"],
            bp["sw2"], bp["sb2"], bp["pw"], bp["g2"], bp["b2"]]


def _pick_batch_tile(B):
    # biggest Bt <= 4 that divides B and still leaves >= 2 grid steps (megacore);
    # fall back to one step holding the whole (tiny) batch.
    for d in (4, 3, 2, 1):
        if B % d == 0 and B // d >= 2:
            return d
    return B


@jax.jit
def ldp_block_forward(x, params):
    B, N, INC = x.shape
    H = W = int(math.isqrt(N))
    assert H * W == N, "token count must be a perfect square"
    OUC = params["w1"].shape[1]
    Ho = (H - 1) // 2 + 1
    Wo = (W - 1) // 2 + 1
    P2 = Ho * Wo
    Bt = _pick_batch_tile(B)
    grid = (B // Bt,)

    # MXU weights travel as bf16 (halves weight DMA / VMEM residency); LN / SE params
    # and biases stay f32.  .astype is a no-op if the params are already stored bf16.
    def bf16(w):
        return w.astype(jnp.bfloat16)

    def prep_block(bp):
        bp = dict(bp)
        bp["pw"] = bf16(bp["pw"])
        return bp

    weights = [bf16(params["w1"]), params["b1"], bf16(params["w2"]), params["b2"]] \
        + _block_arg_list(prep_block(params["blk1"])) \
        + _block_arg_list(prep_block(params["blk2"]))

    def wspec(shape):
        return pl.BlockSpec(shape, lambda g: tuple(0 for _ in shape))

    kernel = _make_ldp_kernel(H=H, W=W, C=OUC, Bt=Bt)

    weight_bytes = sum(int(w.size) * w.dtype.itemsize for w in weights)
    io_bytes = (Bt * N * INC + Bt * P2 * OUC) * 4
    scratch_bytes = ((H + 2) * (W + 2) * OUC + P2 * OUC) * 4
    vmem_limit = int(min(64 << 20,
                         max(16 << 20,
                             2 * weight_bytes + 4 * io_bytes + scratch_bytes + (4 << 20))))

    flops = 2 * B * (N * INC * OUC + N * OUC * OUC        # token MLP
                     + 9 * N * OUC + N * OUC * OUC        # block A depthwise + 1x1
                     + 9 * P2 * OUC + P2 * OUC * OUC)     # block B depthwise + 1x1
    cost = pl.CostEstimate(
        flops=int(flops),
        transcendentals=int(B * N * OUC),                 # exp inside the GELU erf
        bytes_accessed=int(x.size * x.dtype.itemsize + weight_bytes + B * P2 * OUC * 4))

    out = pl.pallas_call(
        kernel,
        grid=grid,
        in_specs=[pl.BlockSpec((Bt, N, INC), lambda g: (g, 0, 0))]
                 + [wspec(w.shape) for w in weights],
        out_specs=pl.BlockSpec((Bt, P2, OUC), lambda g: (g, 0, 0)),
        out_shape=jax.ShapeDtypeStruct((B, P2, OUC), jnp.float32),
        scratch_shapes=[pltpu.VMEM((H + 2, W + 2, OUC), jnp.float32),   # zero-ring pad
                        pltpu.VMEM((P2, OUC), jnp.float32)],            # stride-2 flatten
        compiler_params=pltpu.CompilerParams(
            dimension_semantics=("parallel",),
            vmem_limit_bytes=vmem_limit),
        cost_estimate=cost,
    )(x, *weights)
    return out


# ----------------------------------------------------------------------------
# pure-JAX reference (same math via XLA ops) for correctness checking.
# The MXU call sites mirror the kernel's bf16-operand / f32-accumulation rounding.
# ----------------------------------------------------------------------------
def _bf16_mm(subscripts, a, b):
    return jnp.einsum(subscripts, a.astype(jnp.bfloat16), b.astype(jnp.bfloat16),
                      preferred_element_type=jnp.float32)


def _ref_ln(x, g, b, eps=1e-5):
    mu = jnp.mean(x, axis=-1, keepdims=True)
    var = jnp.mean(jnp.square(x - mu), axis=-1, keepdims=True)
    return (x - mu) / jnp.sqrt(var + eps) * g + b


def _ref_ir(x, bp, *, stride, residual):
    B, H, W, C = x.shape
    dw = bp["dw"].reshape(3, 3, 1, C)                            # HWIO depthwise
    y = lax.conv_general_dilated(
        x, dw, window_strides=(stride, stride), padding=((1, 1), (1, 1)),
        dimension_numbers=("NHWC", "HWIO", "NHWC"), feature_group_count=C,
        precision=lax.Precision.HIGHEST)
    y = _ref_ln(y, bp["g1"], bp["b1"])
    y = y * jnp.clip(y + 3.0, 0.0, 6.0) / 6.0                    # Hardswish
    pooled = jnp.mean(y, axis=(1, 2), keepdims=True)             # (B,1,1,C)
    s = jnp.einsum("bijc,sc->bijs", pooled, bp["sw1"],
                   precision=lax.Precision.HIGHEST) + bp["sb1"].reshape(-1)
    s = jnp.maximum(s, 0.0)
    s = jnp.einsum("bijs,sc->bijc", s, bp["sw2"],
                   precision=lax.Precision.HIGHEST) + bp["sb2"]
    y = y * (jnp.clip(s + 3.0, 0.0, 6.0) / 6.0)                  # Hardsigmoid scale
    y = _bf16_mm("bhwc,cd->bhwd", y, bp["pw"])                   # 1x1 projection
    y = _ref_ln(y, bp["g2"], bp["b2"])
    if residual:
        y = y + x
    return y


def reference_forward(x, p):
    y = _bf16_mm("bnc,cd->bnd", x, p["w1"]) + p["b1"]
    y = 0.5 * y * (1.0 + jax_erf(y / jnp.sqrt(2.0)))             # exact GELU
    y = _bf16_mm("bnc,cd->bnd", y, p["w2"]) + p["b2"]
    B, N, C = y.shape
    h = int(math.isqrt(N))
    y = y.reshape(B, h, h, C)
    y = _ref_ir(y, p["blk1"], stride=1, residual=True)
    y = _ref_ir(y, p["blk2"], stride=2, residual=False)
    Bo, Ho, Wo, C = y.shape
    return y.reshape(Bo, Ho * Wo, C)


# ----------------------------------------------------------------------------
# deterministic parameter construction (synthetic weights, no checkpoint)
# ----------------------------------------------------------------------------
def _nrm(k, shape, scale=0.1):
    return (scale * jax.random.normal(k, shape)).astype(jnp.float32)


def make_block_params(keys, C, SQ):
    # layouts vs PyTorch:
    #   dw[3*di+dj, c] = depthwise.weight[c, 0, di, dj]        (bias=False)
    #   sw1[q, c] = se.fc1.weight[q, c, 0, 0],  sb1[q, 0] = se.fc1.bias[q]
    #   sw2[q, c] = se.fc2.weight[c, q, 0, 0]^T, sb2[0, c] = se.fc2.bias[c]
    #   pw[ci, co] = project.weight[co, ci, 0, 0]^T            (bias=False, stored bf16)
    return {
        "dw":  _nrm(keys[0], (9, C), 0.2),
        "g1":  jnp.ones((1, C), jnp.float32) + _nrm(keys[1], (1, C), 0.05),
        "b1":  _nrm(keys[2], (1, C), 0.05),
        "sw1": _nrm(keys[3], (SQ, C), 0.2),
        "sb1": _nrm(keys[4], (SQ, 1), 0.05),
        "sw2": _nrm(keys[5], (SQ, C), 0.2),
        "sb2": _nrm(keys[6], (1, C), 0.05),
        "pw":  _nrm(keys[7], (C, C), 0.2).astype(jnp.bfloat16),
        "g2":  jnp.ones((1, C), jnp.float32) + _nrm(keys[8], (1, C), 0.05),
        "b2":  _nrm(keys[9], (1, C), 0.05),
    }


if __name__ == "__main__":
    # small shapes: mm_hidden_size=64, hidden_size=32, 64 image tokens (8x8), batch 4
    # (batch 4 -> Bt=2 per grid step, grid=(2,): exercises batching + multi-step ring).
    B, N, INC, OUC = 4, 64, 64, 32          # OUC divisible by 8 (width_mult=1 no-op)
    SQ = _make_divisible(OUC // 4, 8)       # SE squeeze channels = 8

    key = jax.random.PRNGKey(0)
    ks = jax.random.split(key, 25)
    params = {
        "w1": _nrm(ks[0], (INC, OUC)).astype(jnp.bfloat16),   # Linear1 weight^T (bf16)
        "b1": _nrm(ks[1], (1, OUC), 0.02),
        "w2": _nrm(ks[2], (OUC, OUC)).astype(jnp.bfloat16),   # Linear2 weight^T (bf16)
        "b2": _nrm(ks[3], (1, OUC), 0.02),
        "blk1": make_block_params(ks[4:14], OUC, SQ),
        "blk2": make_block_params(ks[14:24], OUC, SQ),
    }
    x = jax.random.normal(ks[24], (B, N, INC), jnp.float32)

    out = jax.block_until_ready(ldp_block_forward(x, params))
    ref = reference_forward(x, params)

    h = int(math.isqrt(N))
    assert out.shape == (B, ((h - 1) // 2 + 1) ** 2, OUC), out.shape
    # 2e-3 catches structural errors; slack covers the (matched) bf16 MXU operand
    # rounding plus erf-poly / rsqrt / accumulation-order deltas.
    np.testing.assert_allclose(np.asarray(out), np.asarray(ref), rtol=2e-3, atol=2e-3)

    print("KERNEL_OK")
</pallas_src>

<mosaic_0001>
module attributes {stable_mosaic.version = 11 : i64} {
  func.func @kernel(%arg0: i32, %arg1: memref<2x64x64xf32, #tpu.memory_space<vmem>>, %arg2: memref<64x32xbf16, #tpu.memory_space<vmem>>, %arg3: memref<1x32xf32, #tpu.memory_space<vmem>>, %arg4: memref<32x32xbf16, #tpu.memory_space<vmem>>, %arg5: memref<1x32xf32, #tpu.memory_space<vmem>>, %arg6: memref<9x32xf32, #tpu.memory_space<vmem>>, %arg7: memref<1x32xf32, #tpu.memory_space<vmem>>, %arg8: memref<1x32xf32, #tpu.memory_space<vmem>>, %arg9: memref<8x32xf32, #tpu.memory_space<vmem>>, %arg10: memref<8x1xf32, #tpu.memory_space<vmem>>, %arg11: memref<8x32xf32, #tpu.memory_space<vmem>>, %arg12: memref<1x32xf32, #tpu.memory_space<vmem>>, %arg13: memref<32x32xbf16, #tpu.memory_space<vmem>>, %arg14: memref<1x32xf32, #tpu.memory_space<vmem>>, %arg15: memref<1x32xf32, #tpu.memory_space<vmem>>, %arg16: memref<9x32xf32, #tpu.memory_space<vmem>>, %arg17: memref<1x32xf32, #tpu.memory_space<vmem>>, %arg18: memref<1x32xf32, #tpu.memory_space<vmem>>, %arg19: memref<8x32xf32, #tpu.memory_space<vmem>>, %arg20: memref<8x1xf32, #tpu.memory_space<vmem>>, %arg21: memref<8x32xf32, #tpu.memory_space<vmem>>, %arg22: memref<1x32xf32, #tpu.memory_space<vmem>>, %arg23: memref<32x32xbf16, #tpu.memory_space<vmem>>, %arg24: memref<1x32xf32, #tpu.memory_space<vmem>>, %arg25: memref<1x32xf32, #tpu.memory_space<vmem>>, %arg26: memref<2x16x32xf32, #tpu.memory_space<vmem>>, %arg27: memref<10x10x32xf32, #tpu.memory_space<vmem>>, %arg28: memref<16x32xf32, #tpu.memory_space<vmem>>) attributes {dimension_semantics = [#tpu.dimension_semantics<parallel>], iteration_bounds = array<i64: 2>, scalar_prefetch = 0 : i64, scratch_operands = 2 : i64, tpu.core_type = #tpu.core_type<tc>, window_params = [{transform_indices = @transform_0, window_bounds = array<i64: 2, 64, 64>}, {pipeline_mode = #tpu.pipeline_mode<synchronous>, transform_indices = @transform_1, window_bounds = array<i64: 64, 32>}, {pipeline_mode = #tpu.pipeline_mode<synchronous>, transform_indices = @transform_2, window_bounds = array<i64: 1, 32>}, {pipeline_mode = #tpu.pipeline_mode<synchronous>, transform_indices = @transform_3, window_bounds = array<i64: 32, 32>}, {pipeline_mode = #tpu.pipeline_mode<synchronous>, transform_indices = @transform_4, window_bounds = array<i64: 1, 32>}, {pipeline_mode = #tpu.pipeline_mode<synchronous>, transform_indices = @transform_5, window_bounds = array<i64: 9, 32>}, {pipeline_mode = #tpu.pipeline_mode<synchronous>, transform_indices = @transform_6, window_bounds = array<i64: 1, 32>}, {pipeline_mode = #tpu.pipeline_mode<synchronous>, transform_indices = @transform_7, window_bounds = array<i64: 1, 32>}, {pipeline_mode = #tpu.pipeline_mode<synchronous>, transform_indices = @transform_8, window_bounds = array<i64: 8, 32>}, {pipeline_mode = #tpu.pipeline_mode<synchronous>, transform_indices = @transform_9, window_bounds = array<i64: 8, 1>}, {pipeline_mode = #tpu.pipeline_mode<synchronous>, transform_indices = @transform_10, window_bounds = array<i64: 8, 32>}, {pipeline_mode = #tpu.pipeline_mode<synchronous>, transform_indices = @transform_11, window_bounds = array<i64: 1, 32>}, {pipeline_mode = #tpu.pipeline_mode<synchronous>, transform_indices = @transform_12, window_bounds = array<i64: 32, 32>}, {pipeline_mode = #tpu.pipeline_mode<synchronous>, transform_indices = @transform_13, window_bounds = array<i64: 1, 32>}, {pipeline_mode = #tpu.pipeline_mode<synchronous>, transform_indices = @transform_14, window_bounds = array<i64: 1, 32>}, {pipeline_mode = #tpu.pipeline_mode<synchronous>, transform_indices = @transform_15, window_bounds = array<i64: 9, 32>}, {pipeline_mode = #tpu.pipeline_mode<synchronous>, transform_indices = @transform_16, window_bounds = array<i64: 1, 32>}, {pipeline_mode = #tpu.pipeline_mode<synchronous>, transform_indices = @transform_17, window_bounds = array<i64: 1, 32>}, {pipeline_mode = #tpu.pipeline_mode<synchronous>, transform_indices = @transform_18, window_bounds = array<i64: 8, 32>}, {pipeline_mode = #tpu.pipeline_mode<synchronous>, transform_indices = @transform_19, window_bounds = array<i64: 8, 1>}, {pipeline_mode = #tpu.pipeline_mode<synchronous>, transform_indices = @transform_20, window_bounds = array<i64: 8, 32>}, {pipeline_mode = #tpu.pipeline_mode<synchronous>, transform_indices = @transform_21, window_bounds = array<i64: 1, 32>}, {pipeline_mode = #tpu.pipeline_mode<synchronous>, transform_indices = @transform_22, window_bounds = array<i64: 32, 32>}, {pipeline_mode = #tpu.pipeline_mode<synchronous>, transform_indices = @transform_23, window_bounds = array<i64: 1, 32>}, {pipeline_mode = #tpu.pipeline_mode<synchronous>, transform_indices = @transform_24, window_bounds = array<i64: 1, 32>}, {transform_indices = @transform_25, window_bounds = array<i64: 2, 16, 32>}]} {
    %cst = arith.constant 0.000000e+00 : f32
    %0 = vector.broadcast %cst : f32 to vector<1x10x32xf32>
    %cst_0 = arith.constant 0.000000e+00 : f32
    %1 = vector.broadcast %cst_0 : f32 to vector<10x1x32xf32>
    %c0 = arith.constant 0 : index
    %c0_1 = arith.constant 0 : index
    %c0_2 = arith.constant 0 : index
    %2 = vector.load %arg27[%c0, %c0_1, %c0_2] : memref<10x10x32xf32, #tpu.memory_space<vmem>>, vector<1x10x32xf32>
    tpu.vector_store %arg27[%c0, %c0_1, %c0_2], %0 {strides = array<i32>} : memref<10x10x32xf32, #tpu.memory_space<vmem>>, vector<1x10x32xf32>,
    %c9 = arith.constant 9 : index
    %c0_3 = arith.constant 0 : index
    %c0_4 = arith.constant 0 : index
    %3 = vector.load %arg27[%c9, %c0_3, %c0_4] : memref<10x10x32xf32, #tpu.memory_space<vmem>>, vector<1x10x32xf32>
    tpu.vector_store %arg27[%c9, %c0_3, %c0_4], %0 {strides = array<i32>} : memref<10x10x32xf32, #tpu.memory_space<vmem>>, vector<1x10x32xf32>,
    %c0_5 = arith.constant 0 : index
    %c0_6 = arith.constant 0 : index
    %c0_7 = arith.constant 0 : index
    %4 = vector.load %arg27[%c0_5, %c0_6, %c0_7] : memref<10x10x32xf32, #tpu.memory_space<vmem>>, vector<10x1x32xf32>
    tpu.vector_store %arg27[%c0_5, %c0_6, %c0_7], %1 {strides = array<i32>} : memref<10x10x32xf32, #tpu.memory_space<vmem>>, vector<10x1x32xf32>,
    %c0_8 = arith.constant 0 : index
    %c9_9 = arith.constant 9 : index
    %c0_10 = arith.constant 0 : index
    %5 = vector.load %arg27[%c0_8, %c9_9, %c0_10] : memref<10x10x32xf32, #tpu.memory_space<vmem>>, vector<10x1x32xf32>
    tpu.vector_store %arg27[%c0_8, %c9_9, %c0_10], %1 {strides = array<i32>} : memref<10x10x32xf32, #tpu.memory_space<vmem>>, vector<10x1x32xf32>,
    %c0_11 = arith.constant 0 : index
    %c0_12 = arith.constant 0 : index
    %c0_13 = arith.constant 0 : index
    %6 = vector.load %arg1[%c0_11, %c0_12, %c0_13] : memref<2x64x64xf32, #tpu.memory_space<vmem>>, vector<2x64x64xf32>
    %7 = vector.shape_cast %6 : vector<2x64x64xf32> to vector<128x64xf32>
    %c0_14 = arith.constant 0 : index
    %c0_15 = arith.constant 0 : index
    %8 = vector.load %arg2[%c0_14, %c0_15] : memref<64x32xbf16, #tpu.memory_space<vmem>>, vector<64x32xbf16>
    %9 = arith.truncf %7 : vector<128x64xf32> to vector<128x64xbf16>
    %cst_16 = arith.constant dense<0.000000e+00> : vector<128x32xf32>
    %10 = tpu.matmul %9, %8, %cst_16 {dimension_numbers = #tpu.dot_dimension_numbers<[1], [0], [0], [1], [0, 0, 1, 1], [], []>} : vector<128x64xbf16>, vector<64x32xbf16>, vector<128x32xf32> -> vector<128x32xf32>
    %c0_17 = arith.constant 0 : index
    %c0_18 = arith.constant 0 : index
    %11 = vector.load %arg3[%c0_17, %c0_18] : memref<1x32xf32, #tpu.memory_space<vmem>>, vector<1x32xf32>
    %12 = vector.broadcast %11 : vector<1x32xf32> to vector<128x32xf32>
    %13 = arith.addf %10, %12 : vector<128x32xf32>
    %cst_19 = arith.constant 5.000000e-01 : f32
    %14 = vector.broadcast %cst_19 : f32 to vector<128x32xf32>
    %15 = arith.mulf %14, %13 : vector<128x32xf32>
    %cst_20 = arith.constant 0.707106769 : f32
    %16 = vector.broadcast %cst_20 : f32 to vector<128x32xf32>
    %17 = arith.mulf %13, %16 : vector<128x32xf32>
    %cst_21 = arith.constant 0.000000e+00 : f32
    %18 = vector.broadcast %cst_21 : f32 to vector<128x32xf32>
    %19 = arith.cmpf oge, %17, %18 : vector<128x32xf32>
    %cst_22 = arith.constant 1.000000e+00 : f32
    %cst_23 = arith.constant -1.000000e+00 : f32
    %20 = vector.broadcast %cst_22 : f32 to vector<128x32xf32>
    %21 = vector.broadcast %cst_23 : f32 to vector<128x32xf32>
    %22 = arith.select %19, %20, %21 : vector<128x32xi1>, vector<128x32xf32>
    %23 = math.absf %17 : vector<128x32xf32>
    %cst_24 = arith.constant 0.327591091 : f32
    %24 = vector.broadcast %cst_24 : f32 to vector<128x32xf32>
    %25 = arith.mulf %24, %23 : vector<128x32xf32>
    %cst_25 = arith.constant 1.000000e+00 : f32
    %26 = vector.broadcast %cst_25 : f32 to vector<128x32xf32>
    %27 = arith.addf %26, %25 : vector<128x32xf32>
    %cst_26 = arith.constant 1.000000e+00 : f32
    %28 = vector.broadcast %cst_26 : f32 to vector<128x32xf32>
    %29 = arith.divf %28, %27 : vector<128x32xf32>
    %cst_27 = arith.constant 1.06140542 : f32
    %30 = vector.broadcast %cst_27 : f32 to vector<128x32xf32>
    %31 = arith.mulf %30, %29 : vector<128x32xf32>
    %cst_28 = arith.constant -1.45315206 : f32
    %32 = vector.broadcast %cst_28 : f32 to vector<128x32xf32>
    %33 = arith.addf %31, %32 : vector<128x32xf32>
    %34 = arith.mulf %33, %29 : vector<128x32xf32>
    %cst_29 = arith.constant 1.42141378 : f32
    %35 = vector.broadcast %cst_29 : f32 to vector<128x32xf32>
    %36 = arith.addf %34, %35 : vector<128x32xf32>
    %37 = arith.mulf %36, %29 : vector<128x32xf32>
    %cst_30 = arith.constant -0.284496725 : f32
    %38 = vector.broadcast %cst_30 : f32 to vector<128x32xf32>
    %39 = arith.addf %37, %38 : vector<128x32xf32>
    %40 = arith.mulf %39, %29 : vector<128x32xf32>
    %cst_31 = arith.constant 0.254829586 : f32
    %41 = vector.broadcast %cst_31 : f32 to vector<128x32xf32>
    %42 = arith.addf %40, %41 : vector<128x32xf32>
    %43 = arith.mulf %42, %29 : vector<128x32xf32>
    %cst_32 = arith.constant 0.000000e+00 : f32
    %44 = vector.broadcast %cst_32 : f32 to vector<128x32xf32>
    %45 = arith.subf %44, %23 : vector<128x32xf32>
    %46 = arith.mulf %45, %23 : vector<128x32xf32>
    %47 = math.exp %46 : vector<128x32xf32>
    %48 = arith.mulf %43, %47 : vector<128x32xf32>
    %cst_33 = arith.constant 1.000000e+00 : f32
    %49 = vector.broadcast %cst_33 : f32 to vector<128x32xf32>
    %50 = arith.subf %49, %48 : vector<128x32xf32>
    %51 = arith.mulf %22, %50 : vector<128x32xf32>
    %cst_34 = arith.constant 1.000000e+00 : f32
    %52 = vector.broadcast %cst_34 : f32 to vector<128x32xf32>
    %53 = arith.addf %52, %51 : vector<128x32xf32>
    %54 = arith.mulf %15, %53 : vector<128x32xf32>
    %c0_35 = arith.constant 0 : index
    %c0_36 = arith.constant 0 : index
    %55 = vector.load %arg4[%c0_35, %c0_36] : memref<32x32xbf16, #tpu.memory_space<vmem>>, vector<32x32xbf16>
    %56 = arith.truncf %54 : vector<128x32xf32> to vector<128x32xbf16>
    %cst_37 = arith.constant dense<0.000000e+00> : vector<128x32xf32>
    %57 = tpu.matmul %56, %55, %cst_37 {dimension_numbers = #tpu.dot_dimension_numbers<[1], [0], [0], [1], [0, 0, 1, 1], [], []>} : vector<128x32xbf16>, vector<32x32xbf16>, vector<128x32xf32> -> vector<128x32xf32>
    %c0_38 = arith.constant 0 : index
    %c0_39 = arith.constant 0 : index
    %58 = vector.load %arg5[%c0_38, %c0_39] : memref<1x32xf32, #tpu.memory_space<vmem>>, vector<1x32xf32>
    %59 = vector.broadcast %58 : vector<1x32xf32> to vector<128x32xf32>
    %60 = arith.addf %57, %59 : vector<128x32xf32>
    %c0_40 = arith.constant 0 : index
    %c0_41 = arith.constant 0 : index
    %61 = vector.load %arg7[%c0_40, %c0_41] : memref<1x32xf32, #tpu.memory_space<vmem>>, vector<1x32xf32>
    %c0_42 = arith.constant 0 : index
    %c0_43 = arith.constant 0 : index
    %62 = vector.load %arg8[%c0_42, %c0_43] : memref<1x32xf32, #tpu.memory_space<vmem>>, vector<1x32xf32>
    %c0_44 = arith.constant 0 : index
    %c0_45 = arith.constant 0 : index
    %63 = vector.load %arg9[%c0_44, %c0_45] : memref<8x32xf32, #tpu.memory_space<vmem>>, vector<8x32xf32>
    %c0_46 = arith.constant 0 : index
    %c0_47 = arith.constant 0 : index
    %64 = vector.load %arg10[%c0_46, %c0_47] : memref<8x1xf32, #tpu.memory_space<vmem>>, vector<8x1xf32>
    %c0_48 = arith.constant 0 : index
    %c0_49 = arith.constant 0 : index
    %65 = vector.load %arg11[%c0_48, %c0_49] : memref<8x32xf32, #tpu.memory_space<vmem>>, vector<8x32xf32>
    %c0_50 = arith.constant 0 : index
    %c0_51 = arith.constant 0 : index
    %66 = vector.load %arg12[%c0_50, %c0_51] : memref<1x32xf32, #tpu.memory_space<vmem>>, vector<1x32xf32>
    %c0_52 = arith.constant 0 : index
    %c0_53 = arith.constant 0 : index
    %67 = vector.load %arg13[%c0_52, %c0_53] : memref<32x32xbf16, #tpu.memory_space<vmem>>, vector<32x32xbf16>
    %c0_54 = arith.constant 0 : index
    %c0_55 = arith.constant 0 : index
    %68 = vector.load %arg14[%c0_54, %c0_55] : memref<1x32xf32, #tpu.memory_space<vmem>>, vector<1x32xf32>
    %c0_56 = arith.constant 0 : index
    %c0_57 = arith.constant 0 : index
    %69 = vector.load %arg15[%c0_56, %c0_57] : memref<1x32xf32, #tpu.memory_space<vmem>>, vector<1x32xf32>
    %c0_58 = arith.constant 0 : index
    %c0_59 = arith.constant 0 : index
    %70 = vector.load %arg17[%c0_58, %c0_59] : memref<1x32xf32, #tpu.memory_space<vmem>>, vector<1x32xf32>
    %c0_60 = arith.constant 0 : index
    %c0_61 = arith.constant 0 : index
    %71 = vector.load %arg18[%c0_60, %c0_61] : memref<1x32xf32, #tpu.memory_space<vmem>>, vector<1x32xf32>
    %c0_62 = arith.constant 0 : index
    %c0_63 = arith.constant 0 : index
    %72 = vector.load %arg19[%c0_62, %c0_63] : memref<8x32xf32, #tpu.memory_space<vmem>>, vector<8x32xf32>
    %c0_64 = arith.constant 0 : index
    %c0_65 = arith.constant 0 : index
    %73 = vector.load %arg20[%c0_64, %c0_65] : memref<8x1xf32, #tpu.memory_space<vmem>>, vector<8x1xf32>
    %c0_66 = arith.constant 0 : index
    %c0_67 = arith.constant 0 : index
    %74 = vector.load %arg21[%c0_66, %c0_67] : memref<8x32xf32, #tpu.memory_space<vmem>>, vector<8x32xf32>
    %c0_68 = arith.constant 0 : index
    %c0_69 = arith.constant 0 : index
    %75 = vector.load %arg22[%c0_68, %c0_69] : memref<1x32xf32, #tpu.memory_space<vmem>>, vector<1x32xf32>
    %c0_70 = arith.constant 0 : index
    %c0_71 = arith.constant 0 : index
    %76 = vector.load %arg23[%c0_70, %c0_71] : memref<32x32xbf16, #tpu.memory_space<vmem>>, vector<32x32xbf16>
    %c0_72 = arith.constant 0 : index
    %c0_73 = arith.constant 0 : index
    %77 = vector.load %arg24[%c0_72, %c0_73] : memref<1x32xf32, #tpu.memory_space<vmem>>, vector<1x32xf32>
    %c0_74 = arith.constant 0 : index
    %c0_75 = arith.constant 0 : index
    %78 = vector.load %arg25[%c0_74, %c0_75] : memref<1x32xf32, #tpu.memory_space<vmem>>, vector<1x32xf32>
    %79 = vector.extract_strided_slice %60 {offsets = [0, 0], sizes = [64, 32], strides = [1, 1]} : vector<128x32xf32> to vector<64x32xf32>
    %80 = vector.shape_cast %79 : vector<64x32xf32> to vector<8x8x32xf32>
    %c1 = arith.constant 1 : index
    %c1_76 = arith.constant 1 : index
    %c0_77 = arith.constant 0 : index
    %81 = vector.load %arg27[%c1, %c1_76, %c0_77] : memref<10x10x32xf32, #tpu.memory_space<vmem>>, vector<8x8x32xf32>
    tpu.vector_store %arg27[%c1, %c1_76, %c0_77], %80 {strides = array<i32>} : memref<10x10x32xf32, #tpu.memory_space<vmem>>, vector<8x8x32xf32>,
    %cst_78 = arith.constant 0.000000e+00 : f32
    %82 = vector.broadcast %cst_78 : f32 to vector<8x8x32xf32>
    %c0_79 = arith.constant 0 : index
    %c0_80 = arith.constant 0 : index
    %c0_81 = arith.constant 0 : index
    %83 = vector.load %arg27[%c0_79, %c0_80, %c0_81] : memref<10x10x32xf32, #tpu.memory_space<vmem>>, vector<8x8x32xf32>
    %c0_82 = arith.constant 0 : index
    %c0_83 = arith.constant 0 : index
    %84 = vector.load %arg6[%c0_82, %c0_83] : memref<9x32xf32, #tpu.memory_space<vmem>>, vector<1x32xf32>
    %85 = vector.shape_cast %84 : vector<1x32xf32> to vector<1x1x32xf32>
    %86 = vector.broadcast %85 : vector<1x1x32xf32> to vector<8x8x32xf32>
    %87 = arith.mulf %83, %86 : vector<8x8x32xf32>
    %88 = arith.addf %82, %87 : vector<8x8x32xf32>
    %c0_84 = arith.constant 0 : index
    %c1_85 = arith.constant 1 : index
    %c0_86 = arith.constant 0 : index
    %89 = vector.load %arg27[%c0_84, %c1_85, %c0_86] : memref<10x10x32xf32, #tpu.memory_space<vmem>>, vector<8x8x32xf32>
    %c1_87 = arith.constant 1 : index
    %c0_88 = arith.constant 0 : index
    %90 = vector.load %arg6[%c1_87, %c0_88] : memref<9x32xf32, #tpu.memory_space<vmem>>, vector<1x32xf32>
    %91 = vector.shape_cast %90 : vector<1x32xf32> to vector<1x1x32xf32>
    %92 = vector.broadcast %91 : vector<1x1x32xf32> to vector<8x8x32xf32>
    %93 = arith.mulf %89, %92 : vector<8x8x32xf32>
    %94 = arith.addf %88, %93 : vector<8x8x32xf32>
    %c0_89 = arith.constant 0 : index
    %c2 = arith.constant 2 : index
    %c0_90 = arith.constant 0 : index
    %95 = vector.load %arg27[%c0_89, %c2, %c0_90] : memref<10x10x32xf32, #tpu.memory_space<vmem>>, vector<8x8x32xf32>
    %c2_91 = arith.constant 2 : index
    %c0_92 = arith.constant 0 : index
    %96 = vector.load %arg6[%c2_91, %c0_92] : memref<9x32xf32, #tpu.memory_space<vmem>>, vector<1x32xf32>
    %97 = vector.shape_cast %96 : vector<1x32xf32> to vector<1x1x32xf32>
    %98 = vector.broadcast %97 : vector<1x1x32xf32> to vector<8x8x32xf32>
    %99 = arith.mulf %95, %98 : vector<8x8x32xf32>
    %100 = arith.addf %94, %99 : vector<8x8x32xf32>
    %c1_93 = arith.constant 1 : index
    %c0_94 = arith.constant 0 : index
    %c0_95 = arith.constant 0 : index
    %101 = vector.load %arg27[%c1_93, %c0_94, %c0_95] : memref<10x10x32xf32, #tpu.memory_space<vmem>>, vector<8x8x32xf32>
    %c3 = arith.constant 3 : index
    %c0_96 = arith.constant 0 : index
    %102 = vector.load %arg6[%c3, %c0_96] : memref<9x32xf32, #tpu.memory_space<vmem>>, vector<1x32xf32>
    %103 = vector.shape_cast %102 : vector<1x32xf32> to vector<1x1x32xf32>
    %104 = vector.broadcast %103 : vector<1x1x32xf32> to vector<8x8x32xf32>
    %105 = arith.mulf %101, %104 : vector<8x8x32xf32>
    %106 = arith.addf %100, %105 : vector<8x8x32xf32>
    %c1_97 = arith.constant 1 : index
    %c1_98 = arith.constant 1 : index
    %c0_99 = arith.constant 0 : index
    %107 = vector.load %arg27[%c1_97, %c1_98, %c0_99] : memref<10x10x32xf32, #tpu.memory_space<vmem>>, vector<8x8x32xf32>
    %c4 = arith.constant 4 : index
    %c0_100 = arith.constant 0 : index
    %108 = vector.load %arg6[%c4, %c0_100] : memref<9x32xf32, #tpu.memory_space<vmem>>, vector<1x32xf32>
    %109 = vector.shape_cast %108 : vector<1x32xf32> to vector<1x1x32xf32>
    %110 = vector.broadcast %109 : vector<1x1x32xf32> to vector<8x8x32xf32>
    %111 = arith.mulf %107, %110 : vector<8x8x32xf32>
    %112 = arith.addf %106, %111 : vector<8x8x32xf32>
    %c1_101 = arith.constant 1 : index
    %c2_102 = arith.constant 2 : index
    %c0_103 = arith.constant 0 : index
    %113 = vector.load %arg27[%c1_101, %c2_102, %c0_103] : memref<10x10x32xf32, #tpu.memory_space<vmem>>, vector<8x8x32xf32>
    %c5 = arith.constant 5 : index
    %c0_104 = arith.constant 0 : index
    %114 = vector.load %arg6[%c5, %c0_104] : memref<9x32xf32, #tpu.memory_space<vmem>>, vector<1x32xf32>
    %115 = vector.shape_cast %114 : vector<1x32xf32> to vector<1x1x32xf32>
    %116 = vector.broadcast %115 : vector<1x1x32xf32> to vector<8x8x32xf32>
    %117 = arith.mulf %113, %116 : vector<8x8x32xf32>
    %118 = arith.addf %112, %117 : vector<8x8x32xf32>
    %c2_105 = arith.constant 2 : index
    %c0_106 = arith.constant 0 : index
    %c0_107 = arith.constant 0 : index
    %119 = vector.load %arg27[%c2_105, %c0_106, %c0_107] : memref<10x10x32xf32, #tpu.memory_space<vmem>>, vector<8x8x32xf32>
    %c6 = arith.constant 6 : index
    %c0_108 = arith.constant 0 : index
    %120 = vector.load %arg6[%c6, %c0_108] : memref<9x32xf32, #tpu.memory_space<vmem>>, vector<1x32xf32>
    %121 = vector.shape_cast %120 : vector<1x32xf32> to vector<1x1x32xf32>
    %122 = vector.broadcast %121 : vector<1x1x32xf32> to vector<8x8x32xf32>
    %123 = arith.mulf %119, %122 : vector<8x8x32xf32>
    %124 = arith.addf %118, %123 : vector<8x8x32xf32>
    %c2_109 = arith.constant 2 : index
    %c1_110 = arith.constant 1 : index
    %c0_111 = arith.constant 0 : index
    %125 = vector.load %arg27[%c2_109, %c1_110, %c0_111] : memref<10x10x32xf32, #tpu.memory_space<vmem>>, vector<8x8x32xf32>
    %c7 = arith.constant 7 : index
    %c0_112 = arith.constant 0 : index
    %126 = vector.load %arg6[%c7, %c0_112] : memref<9x32xf32, #tpu.memory_space<vmem>>, vector<1x32xf32>
    %127 = vector.shape_cast %126 : vector<1x32xf32> to vector<1x1x32xf32>
    %128 = vector.broadcast %127 : vector<1x1x32xf32> to vector<8x8x32xf32>
    %129 = arith.mulf %125, %128 : vector<8x8x32xf32>
    %130 = arith.addf %124, %129 : vector<8x8x32xf32>
    %c2_113 = arith.constant 2 : index
    %c2_114 = arith.constant 2 : index
    %c0_115 = arith.constant 0 : index
    %131 = vector.load %arg27[%c2_113, %c2_114, %c0_115] : memref<10x10x32xf32, #tpu.memory_space<vmem>>, vector<8x8x32xf32>
    %c8 = arith.constant 8 : index
    %c0_116 = arith.constant 0 : index
    %132 = vector.load %arg6[%c8, %c0_116] : memref<9x32xf32, #tpu.memory_space<vmem>>, vector<1x32xf32>
    %133 = vector.shape_cast %132 : vector<1x32xf32> to vector<1x1x32xf32>
    %134 = vector.broadcast %133 : vector<1x1x32xf32> to vector<8x8x32xf32>
    %135 = arith.mulf %131, %134 : vector<8x8x32xf32>
    %136 = arith.addf %130, %135 : vector<8x8x32xf32>
    %137 = vector.shape_cast %136 : vector<8x8x32xf32> to vector<64x32xf32>
    %cst_117 = arith.constant dense<0.000000e+00> : vector<64xf32>
    %138 = vector.multi_reduction <add>, %137, %cst_117 [1] : vector<64x32xf32> to vector<64xf32>
    %139 = vector.shape_cast %138 : vector<64xf32> to vector<64x1xf32>
    %cst_118 = arith.constant 3.200000e+01 : f32
    %140 = vector.broadcast %cst_118 : f32 to vector<64x1xf32>
    %141 = arith.divf %139, %140 : vector<64x1xf32>
    %142 = vector.broadcast %141 : vector<64x1xf32> to vector<64x32xf32>
    %143 = arith.subf %137, %142 : vector<64x32xf32>
    %144 = arith.mulf %143, %143 : vector<64x32xf32>
    %cst_119 = arith.constant dense<0.000000e+00> : vector<64xf32>
    %145 = vector.multi_reduction <add>, %144, %cst_119 [1] : vector<64x32xf32> to vector<64xf32>
    %146 = vector.shape_cast %145 : vector<64xf32> to vector<64x1xf32>
    %cst_120 = arith.constant 3.200000e+01 : f32
    %147 = vector.broadcast %cst_120 : f32 to vector<64x1xf32>
    %148 = arith.divf %146, %147 : vector<64x1xf32>
    %149 = vector.broadcast %141 : vector<64x1xf32> to vector<64x32xf32>
    %150 = arith.subf %137, %149 : vector<64x32xf32>
    %cst_121 = arith.constant 9.99999974E-6 : f32
    %151 = vector.broadcast %cst_121 : f32 to vector<64x1xf32>
    %152 = arith.addf %148, %151 : vector<64x1xf32>
    %153 = math.rsqrt %152 : vector<64x1xf32>
    %154 = vector.broadcast %153 : vector<64x1xf32> to vector<64x32xf32>
    %155 = arith.mulf %150, %154 : vector<64x32xf32>
    %156 = vector.broadcast %61 : vector<1x32xf32> to vector<64x32xf32>
    %157 = arith.mulf %155, %156 : vector<64x32xf32>
    %158 = vector.broadcast %62 : vector<1x32xf32> to vector<64x32xf32>
    %159 = arith.addf %157, %158 : vector<64x32xf32>
    %cst_122 = arith.constant 3.000000e+00 : f32
    %160 = vector.broadcast %cst_122 : f32 to vector<64x32xf32>
    %161 = arith.addf %159, %160 : vector<64x32xf32>
    %cst_123 = arith.constant 0.000000e+00 : f32
    %cst_124 = arith.constant 6.000000e+00 : f32
    %162 = vector.broadcast %cst_123 : f32 to vector<64x32xf32>
    %163 = arith.maximumf %162, %161 : vector<64x32xf32>
    %164 = vector.broadcast %cst_124 : f32 to vector<64x32xf32>
    %165 = arith.minimumf %164, %163 : vector<64x32xf32>
    %cst_125 = arith.constant 0.166666672 : f32
    %166 = vector.broadcast %cst_125 : f32 to vector<64x32xf32>
    %167 = arith.mulf %165, %166 : vector<64x32xf32>
    %168 = arith.mulf %159, %167 : vector<64x32xf32>
    %cst_126 = arith.constant dense<0.000000e+00> : vector<32xf32>
    %169 = vector.multi_reduction <add>, %168, %cst_126 [0] : vector<64x32xf32> to vector<32xf32>
    %170 = vector.shape_cast %169 : vector<32xf32> to vector<1x32xf32>
    %cst_127 = arith.constant 6.400000e+01 : f32
    %171 = vector.broadcast %cst_127 : f32 to vector<1x32xf32>
    %172 = arith.divf %170, %171 : vector<1x32xf32>
    %173 = vector.broadcast %172 : vector<1x32xf32> to vector<8x32xf32>
    %174 = arith.mulf %63, %173 : vector<8x32xf32>
    %cst_128 = arith.constant dense<0.000000e+00> : vector<8xf32>
    %175 = vector.multi_reduction <add>, %174, %cst_128 [1] : vector<8x32xf32> to vector<8xf32>
    %176 = vector.shape_cast %175 : vector<8xf32> to vector<8x1xf32>
    %177 = arith.addf %176, %64 : vector<8x1xf32>
    %cst_129 = arith.constant 0.000000e+00 : f32
    %178 = vector.broadcast %cst_129 : f32 to vector<8x1xf32>
    %179 = arith.maximumf %177, %178 : vector<8x1xf32>
    %180 = vector.broadcast %179 : vector<8x1xf32> to vector<8x32xf32>
    %181 = arith.mulf %65, %180 : vector<8x32xf32>
    %cst_130 = arith.constant dense<0.000000e+00> : vector<32xf32>
    %182 = vector.multi_reduction <add>, %181, %cst_130 [0] : vector<8x32xf32> to vector<32xf32>
    %183 = vector.shape_cast %182 : vector<32xf32> to vector<1x32xf32>
    %184 = arith.addf %183, %66 : vector<1x32xf32>
    %cst_131 = arith.constant 3.000000e+00 : f32
    %185 = vector.broadcast %cst_131 : f32 to vector<1x32xf32>
    %186 = arith.addf %184, %185 : vector<1x32xf32>
    %cst_132 = arith.constant 0.000000e+00 : f32
    %cst_133 = arith.constant 6.000000e+00 : f32
    %187 = vector.broadcast %cst_132 : f32 to vector<1x32xf32>
    %188 = arith.maximumf %187, %186 : vector<1x32xf32>
    %189 = vector.broadcast %cst_133 : f32 to vector<1x32xf32>
    %190 = arith.minimumf %189, %188 : vector<1x32xf32>
    %cst_134 = arith.constant 0.166666672 : f32
    %191 = vector.broadcast %cst_134 : f32 to vector<1x32xf32>
    %192 = arith.mulf %190, %191 : vector<1x32xf32>
    %193 = vector.broadcast %192 : vector<1x32xf32> to vector<64x32xf32>
    %194 = arith.mulf %168, %193 : vector<64x32xf32>
    %195 = arith.truncf %194 : vector<64x32xf32> to vector<64x32xbf16>
    %cst_135 = arith.constant dense<0.000000e+00> : vector<64x32xf32>
    %196 = tpu.matmul %195, %67, %cst_135 {dimension_numbers = #tpu.dot_dimension_numbers<[1], [0], [0], [1], [0, 0, 1, 1], [], []>} : vector<64x32xbf16>, vector<32x32xbf16>, vector<64x32xf32> -> vector<64x32xf32>
    %cst_136 = arith.constant dense<0.000000e+00> : vector<64xf32>
    %197 = vector.multi_reduction <add>, %196, %cst_136 [1] : vector<64x32xf32> to vector<64xf32>
    %198 = vector.shape_cast %197 : vector<64xf32> to vector<64x1xf32>
    %cst_137 = arith.constant 3.200000e+01 : f32
    %199 = vector.broadcast %cst_137 : f32 to vector<64x1xf32>
    %200 = arith.divf %198, %199 : vector<64x1xf32>
    %201 = vector.broadcast %200 : vector<64x1xf32> to vector<64x32xf32>
    %202 = arith.subf %196, %201 : vector<64x32xf32>
    %203 = arith.mulf %202, %202 : vector<64x32xf32>
    %cst_138 = arith.constant dense<0.000000e+00> : vector<64xf32>
    %204 = vector.multi_reduction <add>, %203, %cst_138 [1] : vector<64x32xf32> to vector<64xf32>
    %205 = vector.shape_cast %204 : vector<64xf32> to vector<64x1xf32>
    %cst_139 = arith.constant 3.200000e+01 : f32
    %206 = vector.broadcast %cst_139 : f32 to vector<64x1xf32>
    %207 = arith.divf %205, %206 : vector<64x1xf32>
    %208 = vector.broadcast %200 : vector<64x1xf32> to vector<64x32xf32>
    %209 = arith.subf %196, %208 : vector<64x32xf32>
    %cst_140 = arith.constant 9.99999974E-6 : f32
    %210 = vector.broadcast %cst_140 : f32 to vector<64x1xf32>
    %211 = arith.addf %207, %210 : vector<64x1xf32>
    %212 = math.rsqrt %211 : vector<64x1xf32>
    %213 = vector.broadcast %212 : vector<64x1xf32> to vector<64x32xf32>
    %214 = arith.mulf %209, %213 : vector<64x32xf32>
    %215 = vector.broadcast %68 : vector<1x32xf32> to vector<64x32xf32>
    %216 = arith.mulf %214, %215 : vector<64x32xf32>
    %217 = vector.broadcast %69 : vector<1x32xf32> to vector<64x32xf32>
    %218 = arith.addf %216, %217 : vector<64x32xf32>
    %219 = arith.addf %218, %79 : vector<64x32xf32>
    %220 = vector.shape_cast %219 : vector<64x32xf32> to vector<8x8x32xf32>
    %c1_141 = arith.constant 1 : index
    %c1_142 = arith.constant 1 : index
    %c0_143 = arith.constant 0 : index
    %221 = vector.load %arg27[%c1_141, %c1_142, %c0_143] : memref<10x10x32xf32, #tpu.memory_space<vmem>>, vector<8x8x32xf32>
    tpu.vector_store %arg27[%c1_141, %c1_142, %c0_143], %220 {strides = array<i32>} : memref<10x10x32xf32, #tpu.memory_space<vmem>>, vector<8x8x32xf32>,
    %cst_144 = arith.constant 0.000000e+00 : f32
    %222 = vector.broadcast %cst_144 : f32 to vector<4x4x32xf32>
    %c0_145 = arith.constant 0 : index
    %c0_146 = arith.constant 0 : index
    %c0_147 = arith.constant 0 : index
    %223 = tpu.strided_load %arg27[%c0_145, %c0_146, %c0_147] {strides = array<i32: 2, 2, 1>} : memref<10x10x32xf32, #tpu.memory_space<vmem>>, vector<4x4x32xf32>
    %c0_148 = arith.constant 0 : index
    %c0_149 = arith.constant 0 : index
    %224 = vector.load %arg16[%c0_148, %c0_149] : memref<9x32xf32, #tpu.memory_space<vmem>>, vector<1x32xf32>
    %225 = vector.shape_cast %224 : vector<1x32xf32> to vector<1x1x32xf32>
    %226 = vector.broadcast %225 : vector<1x1x32xf32> to vector<4x4x32xf32>
    %227 = arith.mulf %223, %226 : vector<4x4x32xf32>
    %228 = arith.addf %222, %227 : vector<4x4x32xf32>
    %c0_150 = arith.constant 0 : index
    %c1_151 = arith.constant 1 : index
    %c0_152 = arith.constant 0 : index
    %229 = tpu.strided_load %arg27[%c0_150, %c1_151, %c0_152] {strides = array<i32: 2, 2, 1>} : memref<10x10x32xf32, #tpu.memory_space<vmem>>, vector<4x4x32xf32>
    %c1_153 = arith.constant 1 : index
    %c0_154 = arith.constant 0 : index
    %230 = vector.load %arg16[%c1_153, %c0_154] : memref<9x32xf32, #tpu.memory_space<vmem>>, vector<1x32xf32>
    %231 = vector.shape_cast %230 : vector<1x32xf32> to vector<1x1x32xf32>
    %232 = vector.broadcast %231 : vector<1x1x32xf32> to vector<4x4x32xf32>
    %233 = arith.mulf %229, %232 : vector<4x4x32xf32>
    %234 = arith.addf %228, %233 : vector<4x4x32xf32>
    %c0_155 = arith.constant 0 : index
    %c2_156 = arith.constant 2 : index
    %c0_157 = arith.constant 0 : index
    %235 = tpu.strided_load %arg27[%c0_155, %c2_156, %c0_157] {strides = array<i32: 2, 2, 1>} : memref<10x10x32xf32, #tpu.memory_space<vmem>>, vector<4x4x32xf32>
    %c2_158 = arith.constant 2 : index
    %c0_159 = arith.constant 0 : index
    %236 = vector.load %arg16[%c2_158, %c0_159] : memref<9x32xf32, #tpu.memory_space<vmem>>, vector<1x32xf32>
    %237 = vector.shape_cast %236 : vector<1x32xf32> to vector<1x1x32xf32>
    %238 = vector.broadcast %237 : vector<1x1x32xf32> to vector<4x4x32xf32>
    %239 = arith.mulf %235, %238 : vector<4x4x32xf32>
    %240 = arith.addf %234, %239 : vector<4x4x32xf32>
    %c1_160 = arith.constant 1 : index
    %c0_161 = arith.constant 0 : index
    %c0_162 = arith.constant 0 : index
    %241 = tpu.strided_load %arg27[%c1_160, %c0_161, %c0_162] {strides = array<i32: 2, 2, 1>} : memref<10x10x32xf32, #tpu.memory_space<vmem>>, vector<4x4x32xf32>
    %c3_163 = arith.constant 3 : index
    %c0_164 = arith.constant 0 : index
    %242 = vector.load %arg16[%c3_163, %c0_164] : memref<9x32xf32, #tpu.memory_space<vmem>>, vector<1x32xf32>
    %243 = vector.shape_cast %242 : vector<1x32xf32> to vector<1x1x32xf32>
    %244 = vector.broadcast %243 : vector<1x1x32xf32> to vector<4x4x32xf32>
    %245 = arith.mulf %241, %244 : vector<4x4x32xf32>
    %246 = arith.addf %240, %245 : vector<4x4x32xf32>
    %c1_165 = arith.constant 1 : index
    %c1_166 = arith.constant 1 : index
    %c0_167 = arith.constant 0 : index
    %247 = tpu.strided_load %arg27[%c1_165, %c1_166, %c0_167] {strides = array<i32: 2, 2, 1>} : memref<10x10x32xf32, #tpu.memory_space<vmem>>, vector<4x4x32xf32>
    %c4_168 = arith.constant 4 : index
    %c0_169 = arith.constant 0 : index
    %248 = vector.load %arg16[%c4_168, %c0_169] : memref<9x32xf32, #tpu.memory_space<vmem>>, vector<1x32xf32>
    %249 = vector.shape_cast %248 : vector<1x32xf32> to vector<1x1x32xf32>
    %250 = vector.broadcast %249 : vector<1x1x32xf32> to vector<4x4x32xf32>
    %251 = arith.mulf %247, %250 : vector<4x4x32xf32>
    %252 = arith.addf %246, %251 : vector<4x4x32xf32>
    %c1_170 = arith.constant 1 : index
    %c2_171 = arith.constant 2 : index
    %c0_172 = arith.constant 0 : index
    %253 = tpu.strided_load %arg27[%c1_170, %c2_171, %c0_172] {strides = array<i32: 2, 2, 1>} : memref<10x10x32xf32, #tpu.memory_space<vmem>>, vector<4x4x32xf32>
    %c5_173 = arith.constant 5 : index
    %c0_174 = arith.constant 0 : index
    %254 = vector.load %arg16[%c5_173, %c0_174] : memref<9x32xf32, #tpu.memory_space<vmem>>, vector<1x32xf32>
    %255 = vector.shape_cast %254 : vector<1x32xf32> to vector<1x1x32xf32>
    %256 = vector.broadcast %255 : vector<1x1x32xf32> to vector<4x4x32xf32>
    %257 = arith.mulf %253, %256 : vector<4x4x32xf32>
    %258 = arith.addf %252, %257 : vector<4x4x32xf32>
    %c2_175 = arith.constant 2 : index
    %c0_176 = arith.constant 0 : index
    %c0_177 = arith.constant 0 : index
    %259 = tpu.strided_load %arg27[%c2_175, %c0_176, %c0_177] {strides = array<i32: 2, 2, 1>} : memref<10x10x32xf32, #tpu.memory_space<vmem>>, vector<4x4x32xf32>
    %c6_178 = arith.constant 6 : index
    %c0_179 = arith.constant 0 : index
    %260 = vector.load %arg16[%c6_178, %c0_179] : memref<9x32xf32, #tpu.memory_space<vmem>>, vector<1x32xf32>
    %261 = vector.shape_cast %260 : vector<1x32xf32> to vector<1x1x32xf32>
    %262 = vector.broadcast %261 : vector<1x1x32xf32> to vector<4x4x32xf32>
    %263 = arith.mulf %259, %262 : vector<4x4x32xf32>
    %264 = arith.addf %258, %263 : vector<4x4x32xf32>
    %c2_180 = arith.constant 2 : index
    %c1_181 = arith.constant 1 : index
    %c0_182 = arith.constant 0 : index
    %265 = tpu.strided_load %arg27[%c2_180, %c1_181, %c0_182] {strides = array<i32: 2, 2, 1>} : memref<10x10x32xf32, #tpu.memory_space<vmem>>, vector<4x4x32xf32>
    %c7_183 = arith.constant 7 : index
    %c0_184 = arith.constant 0 : index
    %266 = vector.load %arg16[%c7_183, %c0_184] : memref<9x32xf32, #tpu.memory_space<vmem>>, vector<1x32xf32>
    %267 = vector.shape_cast %266 : vector<1x32xf32> to vector<1x1x32xf32>
    %268 = vector.broadcast %267 : vector<1x1x32xf32> to vector<4x4x32xf32>
    %269 = arith.mulf %265, %268 : vector<4x4x32xf32>
    %270 = arith.addf %264, %269 : vector<4x4x32xf32>
    %c2_185 = arith.constant 2 : index
    %c2_186 = arith.constant 2 : index
    %c0_187 = arith.constant 0 : index
    %271 = tpu.strided_load %arg27[%c2_185, %c2_186, %c0_187] {strides = array<i32: 2, 2, 1>} : memref<10x10x32xf32, #tpu.memory_space<vmem>>, vector<4x4x32xf32>
    %c8_188 = arith.constant 8 : index
    %c0_189 = arith.constant 0 : index
    %272 = vector.load %arg16[%c8_188, %c0_189] : memref<9x32xf32, #tpu.memory_space<vmem>>, vector<1x32xf32>
    %273 = vector.shape_cast %272 : vector<1x32xf32> to vector<1x1x32xf32>
    %274 = vector.broadcast %273 : vector<1x1x32xf32> to vector<4x4x32xf32>
    %275 = arith.mulf %271, %274 : vector<4x4x32xf32>
    %276 = arith.addf %270, %275 : vector<4x4x32xf32>
    %277 = vector.extract_strided_slice %276 {offsets = [0, 0, 0], sizes = [1, 4, 32], strides = [1, 1, 1]} : vector<4x4x32xf32> to vector<1x4x32xf32>
    %278 = vector.shape_cast %277 : vector<1x4x32xf32> to vector<4x32xf32>
    %c0_190 = arith.constant 0 : index
    %c0_191 = arith.constant 0 : index
    %279 = vector.load %arg28[%c0_190, %c0_191] : memref<16x32xf32, #tpu.memory_space<vmem>>, vector<4x32xf32>
    tpu.vector_store %arg28[%c0_190, %c0_191], %278 {strides = array<i32>} : memref<16x32xf32, #tpu.memory_space<vmem>>, vector<4x32xf32>,
    %280 = vector.extract_strided_slice %276 {offsets = [1, 0, 0], sizes = [1, 4, 32], strides = [1, 1, 1]} : vector<4x4x32xf32> to vector<1x4x32xf32>
    %281 = vector.shape_cast %280 : vector<1x4x32xf32> to vector<4x32xf32>
    %c4_192 = arith.constant 4 : index
    %c0_193 = arith.constant 0 : index
    %282 = vector.load %arg28[%c4_192, %c0_193] : memref<16x32xf32, #tpu.memory_space<vmem>>, vector<4x32xf32>
    tpu.vector_store %arg28[%c4_192, %c0_193], %281 {strides = array<i32>} : memref<16x32xf32, #tpu.memory_space<vmem>>, vector<4x32xf32>,
    %283 = vector.extract_strided_slice %276 {offsets = [2, 0, 0], sizes = [1, 4, 32], strides = [1, 1, 1]} : vector<4x4x32xf32> to vector<1x4x32xf32>
    %284 = vector.shape_cast %283 : vector<1x4x32xf32> to vector<4x32xf32>
    %c8_194 = arith.constant 8 : index
    %c0_195 = arith.constant 0 : index
    %285 = vector.load %arg28[%c8_194, %c0_195] : memref<16x32xf32, #tpu.memory_space<vmem>>, vector<4x32xf32>
    tpu.vector_store %arg28[%c8_194, %c0_195], %284 {strides = array<i32>} : memref<16x32xf32, #tpu.memory_space<vmem>>, vector<4x32xf32>,
    %286 = vector.extract_strided_slice %276 {offsets = [3, 0, 0], sizes = [1, 4, 32], strides = [1, 1, 1]} : vector<4x4x32xf32> to vector<1x4x32xf32>
    %287 = vector.shape_cast %286 : vector<1x4x32xf32> to vector<4x32xf32>
    %c12 = arith.constant 12 : index
    %c0_196 = arith.constant 0 : index
    %288 = vector.load %arg28[%c12, %c0_196] : memref<16x32xf32, #tpu.memory_space<vmem>>, vector<4x32xf32>
    tpu.vector_store %arg28[%c12, %c0_196], %287 {strides = array<i32>} : memref<16x32xf32, #tpu.memory_space<vmem>>, vector<4x32xf32>,
    %c0_197 = arith.constant 0 : index
    %c0_198 = arith.constant 0 : index
    %289 = vector.load %arg28[%c0_197, %c0_198] : memref<16x32xf32, #tpu.memory_space<vmem>>, vector<16x32xf32>
    %cst_199 = arith.constant dense<0.000000e+00> : vector<16xf32>
    %290 = vector.multi_reduction <add>, %289, %cst_199 [1] : vector<16x32xf32> to vector<16xf32>
    %291 = vector.shape_cast %290 : vector<16xf32> to vector<16x1xf32>
    %cst_200 = arith.constant 3.200000e+01 : f32
    %292 = vector.broadcast %cst_200 : f32 to vector<16x1xf32>
    %293 = arith.divf %291, %292 : vector<16x1xf32>
    %294 = vector.broadcast %293 : vector<16x1xf32> to vector<16x32xf32>
    %295 = arith.subf %289, %294 : vector<16x32xf32>
    %296 = arith.mulf %295, %295 : vector<16x32xf32>
    %cst_201 = arith.constant dense<0.000000e+00> : vector<16xf32>
    %297 = vector.multi_reduction <add>, %296, %cst_201 [1] : vector<16x32xf32> to vector<16xf32>
    %298 = vector.shape_cast %297 : vector<16xf32> to vector<16x1xf32>
    %cst_202 = arith.constant 3.200000e+01 : f32
    %299 = vector.broadcast %cst_202 : f32 to vector<16x1xf32>
    %300 = arith.divf %298, %299 : vector<16x1xf32>
    %301 = vector.broadcast %293 : vector<16x1xf32> to vector<16x32xf32>
    %302 = arith.subf %289, %301 : vector<16x32xf32>
    %cst_203 = arith.constant 9.99999974E-6 : f32
    %303 = vector.broadcast %cst_203 : f32 to vector<16x1xf32>
    %304 = arith.addf %300, %303 : vector<16x1xf32>
    %305 = math.rsqrt %304 : vector<16x1xf32>
    %306 = vector.broadcast %305 : vector<16x1xf32> to vector<16x32xf32>
    %307 = arith.mulf %302, %306 : vector<16x32xf32>
    %308 = vector.broadcast %70 : vector<1x32xf32> to vector<16x32xf32>
    %309 = arith.mulf %307, %308 : vector<16x32xf32>
    %310 = vector.broadcast %71 : vector<1x32xf32> to vector<16x32xf32>
    %311 = arith.addf %309, %310 : vector<16x32xf32>
    %cst_204 = arith.constant 3.000000e+00 : f32
    %312 = vector.broadcast %cst_204 : f32 to vector<16x32xf32>
    %313 = arith.addf %311, %312 : vector<16x32xf32>
    %cst_205 = arith.constant 0.000000e+00 : f32
    %cst_206 = arith.constant 6.000000e+00 : f32
    %314 = vector.broadcast %cst_205 : f32 to vector<16x32xf32>
    %315 = arith.maximumf %314, %313 : vector<16x32xf32>
    %316 = vector.broadcast %cst_206 : f32 to vector<16x32xf32>
    %317 = arith.minimumf %316, %315 : vector<16x32xf32>
    %cst_207 = arith.constant 0.166666672 : f32
    %318 = vector.broadcast %cst_207 : f32 to vector<16x32xf32>
    %319 = arith.mulf %317, %318 : vector<16x32xf32>
    %320 = arith.mulf %311, %319 : vector<16x32xf32>
    %cst_208 = arith.constant dense<0.000000e+00> : vector<32xf32>
    %321 = vector.multi_reduction <add>, %320, %cst_208 [0] : vector<16x32xf32> to vector<32xf32>
    %322 = vector.shape_cast %321 : vector<32xf32> to vector<1x32xf32>
    %cst_209 = arith.constant 1.600000e+01 : f32
    %323 = vector.broadcast %cst_209 : f32 to vector<1x32xf32>
    %324 = arith.divf %322, %323 : vector<1x32xf32>
    %325 = vector.broadcast %324 : vector<1x32xf32> to vector<8x32xf32>
    %326 = arith.mulf %72, %325 : vector<8x32xf32>
    %cst_210 = arith.constant dense<0.000000e+00> : vector<8xf32>
    %327 = vector.multi_reduction <add>, %326, %cst_210 [1] : vector<8x32xf32> to vector<8xf32>
    %328 = vector.shape_cast %327 : vector<8xf32> to vector<8x1xf32>
    %329 = arith.addf %328, %73 : vector<8x1xf32>
    %cst_211 = arith.constant 0.000000e+00 : f32
    %330 = vector.broadcast %cst_211 : f32 to vector<8x1xf32>
    %331 = arith.maximumf %329, %330 : vector<8x1xf32>
    %332 = vector.broadcast %331 : vector<8x1xf32> to vector<8x32xf32>
    %333 = arith.mulf %74, %332 : vector<8x32xf32>
    %cst_212 = arith.constant dense<0.000000e+00> : vector<32xf32>
    %334 = vector.multi_reduction <add>, %333, %cst_212 [0] : vector<8x32xf32> to vector<32xf32>
    %335 = vector.shape_cast %334 : vector<32xf32> to vector<1x32xf32>
    %336 = arith.addf %335, %75 : vector<1x32xf32>
    %cst_213 = arith.constant 3.000000e+00 : f32
    %337 = vector.broadcast %cst_213 : f32 to vector<1x32xf32>
    %338 = arith.addf %336, %337 : vector<1x32xf32>
    %cst_214 = arith.constant 0.000000e+00 : f32
    %cst_215 = arith.constant 6.000000e+00 : f32
    %339 = vector.broadcast %cst_214 : f32 to vector<1x32xf32>
    %340 = arith.maximumf %339, %338 : vector<1x32xf32>
    %341 = vector.broadcast %cst_215 : f32 to vector<1x32xf32>
    %342 = arith.minimumf %341, %340 : vector<1x32xf32>
    %cst_216 = arith.constant 0.166666672 : f32
    %343 = vector.broadcast %cst_216 : f32 to vector<1x32xf32>
    %344 = arith.mulf %342, %343 : vector<1x32xf32>
    %345 = vector.broadcast %344 : vector<1x32xf32> to vector<16x32xf32>
    %346 = arith.mulf %320, %345 : vector<16x32xf32>
    %347 = arith.truncf %346 : vector<16x32xf32> to vector<16x32xbf16>
    %cst_217 = arith.constant dense<0.000000e+00> : vector<16x32xf32>
    %348 = tpu.matmul %347, %76, %cst_217 {dimension_numbers = #tpu.dot_dimension_numbers<[1], [0], [0], [1], [0, 0, 1, 1], [], []>} : vector<16x32xbf16>, vector<32x32xbf16>, vector<16x32xf32> -> vector<16x32xf32>
    %cst_218 = arith.constant dense<0.000000e+00> : vector<16xf32>
    %349 = vector.multi_reduction <add>, %348, %cst_218 [1] : vector<16x32xf32> to vector<16xf32>
    %350 = vector.shape_cast %349 : vector<16xf32> to vector<16x1xf32>
    %cst_219 = arith.constant 3.200000e+01 : f32
    %351 = vector.broadcast %cst_219 : f32 to vector<16x1xf32>
    %352 = arith.divf %350, %351 : vector<16x1xf32>
    %353 = vector.broadcast %352 : vector<16x1xf32> to vector<16x32xf32>
    %354 = arith.subf %348, %353 : vector<16x32xf32>
    %355 = arith.mulf %354, %354 : vector<16x32xf32>
    %cst_220 = arith.constant dense<0.000000e+00> : vector<16xf32>
    %356 = vector.multi_reduction <add>, %355, %cst_220 [1] : vector<16x32xf32> to vector<16xf32>
    %357 = vector.shape_cast %356 : vector<16xf32> to vector<16x1xf32>
    %cst_221 = arith.constant 3.200000e+01 : f32
    %358 = vector.broadcast %cst_221 : f32 to vector<16x1xf32>
    %359 = arith.divf %357, %358 : vector<16x1xf32>
    %360 = vector.broadcast %352 : vector<16x1xf32> to vector<16x32xf32>
    %361 = arith.subf %348, %360 : vector<16x32xf32>
    %cst_222 = arith.constant 9.99999974E-6 : f32
    %362 = vector.broadcast %cst_222 : f32 to vector<16x1xf32>
    %363 = arith.addf %359, %362 : vector<16x1xf32>
    %364 = math.rsqrt %363 : vector<16x1xf32>
    %365 = vector.broadcast %364 : vector<16x1xf32> to vector<16x32xf32>
    %366 = arith.mulf %361, %365 : vector<16x32xf32>
    %367 = vector.broadcast %77 : vector<1x32xf32> to vector<16x32xf32>
    %368 = arith.mulf %366, %367 : vector<16x32xf32>
    %369 = vector.broadcast %78 : vector<1x32xf32> to vector<16x32xf32>
    %370 = arith.addf %368, %369 : vector<16x32xf32>
    %371 = vector.shape_cast %370 : vector<16x32xf32> to vector<1x16x32xf32>
    %372 = vector.extract_strided_slice %60 {offsets = [64, 0], sizes = [64, 32], strides = [1, 1]} : vector<128x32xf32> to vector<64x32xf32>
    %373 = vector.shape_cast %372 : vector<64x32xf32> to vector<8x8x32xf32>
    %c1_223 = arith.constant 1 : index
    %c1_224 = arith.constant 1 : index
    %c0_225 = arith.constant 0 : index
    %374 = vector.load %arg27[%c1_223, %c1_224, %c0_225] : memref<10x10x32xf32, #tpu.memory_space<vmem>>, vector<8x8x32xf32>
    tpu.vector_store %arg27[%c1_223, %c1_224, %c0_225], %373 {strides = array<i32>} : memref<10x10x32xf32, #tpu.memory_space<vmem>>, vector<8x8x32xf32>,
    %cst_226 = arith.constant 0.000000e+00 : f32
    %375 = vector.broadcast %cst_226 : f32 to vector<8x8x32xf32>
    %c0_227 = arith.constant 0 : index
    %c0_228 = arith.constant 0 : index
    %c0_229 = arith.constant 0 : index
    %376 = vector.load %arg27[%c0_227, %c0_228, %c0_229] : memref<10x10x32xf32, #tpu.memory_space<vmem>>, vector<8x8x32xf32>
    %c0_230 = arith.constant 0 : index
    %c0_231 = arith.constant 0 : index
    %377 = vector.load %arg6[%c0_230, %c0_231] : memref<9x32xf32, #tpu.memory_space<vmem>>, vector<1x32xf32>
    %378 = vector.shape_cast %377 : vector<1x32xf32> to vector<1x1x32xf32>
    %379 = vector.broadcast %378 : vector<1x1x32xf32> to vector<8x8x32xf32>
    %380 = arith.mulf %376, %379 : vector<8x8x32xf32>
    %381 = arith.addf %375, %380 : vector<8x8x32xf32>
    %c0_232 = arith.constant 0 : index
    %c1_233 = arith.constant 1 : index
    %c0_234 = arith.constant 0 : index
    %382 = vector.load %arg27[%c0_232, %c1_233, %c0_234] : memref<10x10x32xf32, #tpu.memory_space<vmem>>, vector<8x8x32xf32>
    %c1_235 = arith.constant 1 : index
    %c0_236 = arith.constant 0 : index
    %383 = vector.load %arg6[%c1_235, %c0_236] : memref<9x32xf32, #tpu.memory_space<vmem>>, vector<1x32xf32>
    %384 = vector.shape_cast %383 : vector<1x32xf32> to vector<1x1x32xf32>
    %385 = vector.broadcast %384 : vector<1x1x32xf32> to vector<8x8x32xf32>
    %386 = arith.mulf %382, %385 : vector<8x8x32xf32>
    %387 = arith.addf %381, %386 : vector<8x8x32xf32>
    %c0_237 = arith.constant 0 : index
    %c2_238 = arith.constant 2 : index
    %c0_239 = arith.constant 0 : index
    %388 = vector.load %arg27[%c0_237, %c2_238, %c0_239] : memref<10x10x32xf32, #tpu.memory_space<vmem>>, vector<8x8x32xf32>
    %c2_240 = arith.constant 2 : index
    %c0_241 = arith.constant 0 : index
    %389 = vector.load %arg6[%c2_240, %c0_241] : memref<9x32xf32, #tpu.memory_space<vmem>>, vector<1x32xf32>
    %390 = vector.shape_cast %389 : vector<1x32xf32> to vector<1x1x32xf32>
    %391 = vector.broadcast %390 : vector<1x1x32xf32> to vector<8x8x32xf32>
    %392 = arith.mulf %388, %391 : vector<8x8x32xf32>
    %393 = arith.addf %387, %392 : vector<8x8x32xf32>
    %c1_242 = arith.constant 1 : index
    %c0_243 = arith.constant 0 : index
    %c0_244 = arith.constant 0 : index
    %394 = vector.load %arg27[%c1_242, %c0_243, %c0_244] : memref<10x10x32xf32, #tpu.memory_space<vmem>>, vector<8x8x32xf32>
    %c3_245 = arith.constant 3 : index
    %c0_246 = arith.constant 0 : index
    %395 = vector.load %arg6[%c3_245, %c0_246] : memref<9x32xf32, #tpu.memory_space<vmem>>, vector<1x32xf32>
    %396 = vector.shape_cast %395 : vector<1x32xf32> to vector<1x1x32xf32>
    %397 = vector.broadcast %396 : vector<1x1x32xf32> to vector<8x8x32xf32>
    %398 = arith.mulf %394, %397 : vector<8x8x32xf32>
    %399 = arith.addf %393, %398 : vector<8x8x32xf32>
    %c1_247 = arith.constant 1 : index
    %c1_248 = arith.constant 1 : index
    %c0_249 = arith.constant 0 : index
    %400 = vector.load %arg27[%c1_247, %c1_248, %c0_249] : memref<10x10x32xf32, #tpu.memory_space<vmem>>, vector<8x8x32xf32>
    %c4_250 = arith.constant 4 : index
    %c0_251 = arith.constant 0 : index
    %401 = vector.load %arg6[%c4_250, %c0_251] : memref<9x32xf32, #tpu.memory_space<vmem>>, vector<1x32xf32>
    %402 = vector.shape_cast %401 : vector<1x32xf32> to vector<1x1x32xf32>
    %403 = vector.broadcast %402 : vector<1x1x32xf32> to vector<8x8x32xf32>
    %404 = arith.mulf %400, %403 : vector<8x8x32xf32>
    %405 = arith.addf %399, %404 : vector<8x8x32xf32>
    %c1_252 = arith.constant 1 : index
    %c2_253 = arith.constant 2 : index
    %c0_254 = arith.constant 0 : index
    %406 = vector.load %arg27[%c1_252, %c2_253, %c0_254] : memref<10x10x32xf32, #tpu.memory_space<vmem>>, vector<8x8x32xf32>
    %c5_255 = arith.constant 5 : index
    %c0_256 = arith.constant 0 : index
    %407 = vector.load %arg6[%c5_255, %c0_256] : memref<9x32xf32, #tpu.memory_space<vmem>>, vector<1x32xf32>
    %408 = vector.shape_cast %407 : vector<1x32xf32> to vector<1x1x32xf32>
    %409 = vector.broadcast %408 : vector<1x1x32xf32> to vector<8x8x32xf32>
    %410 = arith.mulf %406, %409 : vector<8x8x32xf32>
    %411 = arith.addf %405, %410 : vector<8x8x32xf32>
    %c2_257 = arith.constant 2 : index
    %c0_258 = arith.constant 0 : index
    %c0_259 = arith.constant 0 : index
    %412 = vector.load %arg27[%c2_257, %c0_258, %c0_259] : memref<10x10x32xf32, #tpu.memory_space<vmem>>, vector<8x8x32xf32>
    %c6_260 = arith.constant 6 : index
    %c0_261 = arith.constant 0 : index
    %413 = vector.load %arg6[%c6_260, %c0_261] : memref<9x32xf32, #tpu.memory_space<vmem>>, vector<1x32xf32>
    %414 = vector.shape_cast %413 : vector<1x32xf32> to vector<1x1x32xf32>
    %415 = vector.broadcast %414 : vector<1x1x32xf32> to vector<8x8x32xf32>
    %416 = arith.mulf %412, %415 : vector<8x8x32xf32>
    %417 = arith.addf %411, %416 : vector<8x8x32xf32>
    %c2_262 = arith.constant 2 : index
    %c1_263 = arith.constant 1 : index
    %c0_264 = arith.constant 0 : index
    %418 = vector.load %arg27[%c2_262, %c1_263, %c0_264] : memref<10x10x32xf32, #tpu.memory_space<vmem>>, vector<8x8x32xf32>
    %c7_265 = arith.constant 7 : index
    %c0_266 = arith.constant 0 : index
    %419 = vector.load %arg6[%c7_265, %c0_266] : memref<9x32xf32, #tpu.memory_space<vmem>>, vector<1x32xf32>
    %420 = vector.shape_cast %419 : vector<1x32xf32> to vector<1x1x32xf32>
    %421 = vector.broadcast %420 : vector<1x1x32xf32> to vector<8x8x32xf32>
    %422 = arith.mulf %418, %421 : vector<8x8x32xf32>
    %423 = arith.addf %417, %422 : vector<8x8x32xf32>
    %c2_267 = arith.constant 2 : index
    %c2_268 = arith.constant 2 : index
    %c0_269 = arith.constant 0 : index
    %424 = vector.load %arg27[%c2_267, %c2_268, %c0_269] : memref<10x10x32xf32, #tpu.memory_space<vmem>>, vector<8x8x32xf32>
    %c8_270 = arith.constant 8 : index
    %c0_271 = arith.constant 0 : index
    %425 = vector.load %arg6[%c8_270, %c0_271] : memref<9x32xf32, #tpu.memory_space<vmem>>, vector<1x32xf32>
    %426 = vector.shape_cast %425 : vector<1x32xf32> to vector<1x1x32xf32>
    %427 = vector.broadcast %426 : vector<1x1x32xf32> to vector<8x8x32xf32>
    %428 = arith.mulf %424, %427 : vector<8x8x32xf32>
    %429 = arith.addf %423, %428 : vector<8x8x32xf32>
    %430 = vector.shape_cast %429 : vector<8x8x32xf32> to vector<64x32xf32>
    %cst_272 = arith.constant dense<0.000000e+00> : vector<64xf32>
    %431 = vector.multi_reduction <add>, %430, %cst_272 [1] : vector<64x32xf32> to vector<64xf32>
    %432 = vector.shape_cast %431 : vector<64xf32> to vector<64x1xf32>
    %cst_273 = arith.constant 3.200000e+01 : f32
    %433 = vector.broadcast %cst_273 : f32 to vector<64x1xf32>
    %434 = arith.divf %432, %433 : vector<64x1xf32>
    %435 = vector.broadcast %434 : vector<64x1xf32> to vector<64x32xf32>
    %436 = arith.subf %430, %435 : vector<64x32xf32>
    %437 = arith.mulf %436, %436 : vector<64x32xf32>
    %cst_274 = arith.constant dense<0.000000e+00> : vector<64xf32>
    %438 = vector.multi_reduction <add>, %437, %cst_274 [1] : vector<64x32xf32> to vector<64xf32>
    %439 = vector.shape_cast %438 : vector<64xf32> to vector<64x1xf32>
    %cst_275 = arith.constant 3.200000e+01 : f32
    %440 = vector.broadcast %cst_275 : f32 to vector<64x1xf32>
    %441 = arith.divf %439, %440 : vector<64x1xf32>
    %442 = vector.broadcast %434 : vector<64x1xf32> to vector<64x32xf32>
    %443 = arith.subf %430, %442 : vector<64x32xf32>
    %cst_276 = arith.constant 9.99999974E-6 : f32
    %444 = vector.broadcast %cst_276 : f32 to vector<64x1xf32>
    %445 = arith.addf %441, %444 : vector<64x1xf32>
    %446 = math.rsqrt %445 : vector<64x1xf32>
    %447 = vector.broadcast %446 : vector<64x1xf32> to vector<64x32xf32>
    %448 = arith.mulf %443, %447 : vector<64x32xf32>
    %449 = vector.broadcast %61 : vector<1x32xf32> to vector<64x32xf32>
    %450 = arith.mulf %448, %449 : vector<64x32xf32>
    %451 = vector.broadcast %62 : vector<1x32xf32> to vector<64x32xf32>
    %452 = arith.addf %450, %451 : vector<64x32xf32>
    %cst_277 = arith.constant 3.000000e+00 : f32
    %453 = vector.broadcast %cst_277 : f32 to vector<64x32xf32>
    %454 = arith.addf %452, %453 : vector<64x32xf32>
    %cst_278 = arith.constant 0.000000e+00 : f32
    %cst_279 = arith.constant 6.000000e+00 : f32
    %455 = vector.broadcast %cst_278 : f32 to vector<64x32xf32>
    %456 = arith.maximumf %455, %454 : vector<64x32xf32>
    %457 = vector.broadcast %cst_279 : f32 to vector<64x32xf32>
    %458 = arith.minimumf %457, %456 : vector<64x32xf32>
    %cst_280 = arith.constant 0.166666672 : f32
    %459 = vector.broadcast %cst_280 : f32 to vector<64x32xf32>
    %460 = arith.mulf %458, %459 : vector<64x32xf32>
    %461 = arith.mulf %452, %460 : vector<64x32xf32>
    %cst_281 = arith.constant dense<0.000000e+00> : vector<32xf32>
    %462 = vector.multi_reduction <add>, %461, %cst_281 [0] : vector<64x32xf32> to vector<32xf32>
    %463 = vector.shape_cast %462 : vector<32xf32> to vector<1x32xf32>
    %cst_282 = arith.constant 6.400000e+01 : f32
    %464 = vector.broadcast %cst_282 : f32 to vector<1x32xf32>
    %465 = arith.divf %463, %464 : vector<1x32xf32>
    %466 = vector.broadcast %465 : vector<1x32xf32> to vector<8x32xf32>
    %467 = arith.mulf %63, %466 : vector<8x32xf32>
    %cst_283 = arith.constant dense<0.000000e+00> : vector<8xf32>
    %468 = vector.multi_reduction <add>, %467, %cst_283 [1] : vector<8x32xf32> to vector<8xf32>
    %469 = vector.shape_cast %468 : vector<8xf32> to vector<8x1xf32>
    %470 = arith.addf %469, %64 : vector<8x1xf32>
    %cst_284 = arith.constant 0.000000e+00 : f32
    %471 = vector.broadcast %cst_284 : f32 to vector<8x1xf32>
    %472 = arith.maximumf %470, %471 : vector<8x1xf32>
    %473 = vector.broadcast %472 : vector<8x1xf32> to vector<8x32xf32>
    %474 = arith.mulf %65, %473 : vector<8x32xf32>
    %cst_285 = arith.constant dense<0.000000e+00> : vector<32xf32>
    %475 = vector.multi_reduction <add>, %474, %cst_285 [0] : vector<8x32xf32> to vector<32xf32>
    %476 = vector.shape_cast %475 : vector<32xf32> to vector<1x32xf32>
    %477 = arith.addf %476, %66 : vector<1x32xf32>
    %cst_286 = arith.constant 3.000000e+00 : f32
    %478 = vector.broadcast %cst_286 : f32 to vector<1x32xf32>
    %479 = arith.addf %477, %478 : vector<1x32xf32>
    %cst_287 = arith.constant 0.000000e+00 : f32
    %cst_288 = arith.constant 6.000000e+00 : f32
    %480 = vector.broadcast %cst_287 : f32 to vector<1x32xf32>
    %481 = arith.maximumf %480, %479 : vector<1x32xf32>
    %482 = vector.broadcast %cst_288 : f32 to vector<1x32xf32>
    %483 = arith.minimumf %482, %481 : vector<1x32xf32>
    %cst_289 = arith.constant 0.166666672 : f32
    %484 = vector.broadcast %cst_289 : f32 to vector<1x32xf32>
    %485 = arith.mulf %483, %484 : vector<1x32xf32>
    %486 = vector.broadcast %485 : vector<1x32xf32> to vector<64x32xf32>
    %487 = arith.mulf %461, %486 : vector<64x32xf32>
    %488 = arith.truncf %487 : vector<64x32xf32> to vector<64x32xbf16>
    %cst_290 = arith.constant dense<0.000000e+00> : vector<64x32xf32>
    %489 = tpu.matmul %488, %67, %cst_290 {dimension_numbers = #tpu.dot_dimension_numbers<[1], [0], [0], [1], [0, 0, 1, 1], [], []>} : vector<64x32xbf16>, vector<32x32xbf16>, vector<64x32xf32> -> vector<64x32xf32>
    %cst_291 = arith.constant dense<0.000000e+00> : vector<64xf32>
    %490 = vector.multi_reduction <add>, %489, %cst_291 [1] : vector<64x32xf32> to vector<64xf32>
    %491 = vector.shape_cast %490 : vector<64xf32> to vector<64x1xf32>
    %cst_292 = arith.constant 3.200000e+01 : f32
    %492 = vector.broadcast %cst_292 : f32 to vector<64x1xf32>
    %493 = arith.divf %491, %492 : vector<64x1xf32>
    %494 = vector.broadcast %493 : vector<64x1xf32> to vector<64x32xf32>
    %495 = arith.subf %489, %494 : vector<64x32xf32>
    %496 = arith.mulf %495, %495 : vector<64x32xf32>
    %cst_293 = arith.constant dense<0.000000e+00> : vector<64xf32>
    %497 = vector.multi_reduction <add>, %496, %cst_293 [1] : vector<64x32xf32> to vector<64xf32>
    %498 = vector.shape_cast %497 : vector<64xf32> to vector<64x1xf32>
    %cst_294 = arith.constant 3.200000e+01 : f32
    %499 = vector.broadcast %cst_294 : f32 to vector<64x1xf32>
    %500 = arith.divf %498, %499 : vector<64x1xf32>
    %501 = vector.broadcast %493 : vector<64x1xf32> to vector<64x32xf32>
    %502 = arith.subf %489, %501 : vector<64x32xf32>
    %cst_295 = arith.constant 9.99999974E-6 : f32
    %503 = vector.broadcast %cst_295 : f32 to vector<64x1xf32>
    %504 = arith.addf %500, %503 : vector<64x1xf32>
    %505 = math.rsqrt %504 : vector<64x1xf32>
    %506 = vector.broadcast %505 : vector<64x1xf32> to vector<64x32xf32>
    %507 = arith.mulf %502, %506 : vector<64x32xf32>
    %508 = vector.broadcast %68 : vector<1x32xf32> to vector<64x32xf32>
    %509 = arith.mulf %507, %508 : vector<64x32xf32>
    %510 = vector.broadcast %69 : vector<1x32xf32> to vector<64x32xf32>
    %511 = arith.addf %509, %510 : vector<64x32xf32>
    %512 = arith.addf %511, %372 : vector<64x32xf32>
    %513 = vector.shape_cast %512 : vector<64x32xf32> to vector<8x8x32xf32>
    %c1_296 = arith.constant 1 : index
    %c1_297 = arith.constant 1 : index
    %c0_298 = arith.constant 0 : index
    %514 = vector.load %arg27[%c1_296, %c1_297, %c0_298] : memref<10x10x32xf32, #tpu.memory_space<vmem>>, vector<8x8x32xf32>
    tpu.vector_store %arg27[%c1_296, %c1_297, %c0_298], %513 {strides = array<i32>} : memref<10x10x32xf32, #tpu.memory_space<vmem>>, vector<8x8x32xf32>,
    %cst_299 = arith.constant 0.000000e+00 : f32
    %515 = vector.broadcast %cst_299 : f32 to vector<4x4x32xf32>
    %c0_300 = arith.constant 0 : index
    %c0_301 = arith.constant 0 : index
    %c0_302 = arith.constant 0 : index
    %516 = tpu.strided_load %arg27[%c0_300, %c0_301, %c0_302] {strides = array<i32: 2, 2, 1>} : memref<10x10x32xf32, #tpu.memory_space<vmem>>, vector<4x4x32xf32>
    %c0_303 = arith.constant 0 : index
    %c0_304 = arith.constant 0 : index
    %517 = vector.load %arg16[%c0_303, %c0_304] : memref<9x32xf32, #tpu.memory_space<vmem>>, vector<1x32xf32>
    %518 = vector.shape_cast %517 : vector<1x32xf32> to vector<1x1x32xf32>
    %519 = vector.broadcast %518 : vector<1x1x32xf32> to vector<4x4x32xf32>
    %520 = arith.mulf %516, %519 : vector<4x4x32xf32>
    %521 = arith.addf %515, %520 : vector<4x4x32xf32>
    %c0_305 = arith.constant 0 : index
    %c1_306 = arith.constant 1 : index
    %c0_307 = arith.constant 0 : index
    %522 = tpu.strided_load %arg27[%c0_305, %c1_306, %c0_307] {strides = array<i32: 2, 2, 1>} : memref<10x10x32xf32, #tpu.memory_space<vmem>>, vector<4x4x32xf32>
    %c1_308 = arith.constant 1 : index
    %c0_309 = arith.constant 0 : index
    %523 = vector.load %arg16[%c1_308, %c0_309] : memref<9x32xf32, #tpu.memory_space<vmem>>, vector<1x32xf32>
    %524 = vector.shape_cast %523 : vector<1x32xf32> to vector<1x1x32xf32>
    %525 = vector.broadcast %524 : vector<1x1x32xf32> to vector<4x4x32xf32>
    %526 = arith.mulf %522, %525 : vector<4x4x32xf32>
    %527 = arith.addf %521, %526 : vector<4x4x32xf32>
    %c0_310 = arith.constant 0 : index
    %c2_311 = arith.constant 2 : index
    %c0_312 = arith.constant 0 : index
    %528 = tpu.strided_load %arg27[%c0_310, %c2_311, %c0_312] {strides = array<i32: 2, 2, 1>} : memref<10x10x32xf32, #tpu.memory_space<vmem>>, vector<4x4x32xf32>
    %c2_313 = arith.constant 2 : index
    %c0_314 = arith.constant 0 : index
    %529 = vector.load %arg16[%c2_313, %c0_314] : memref<9x32xf32, #tpu.memory_space<vmem>>, vector<1x32xf32>
    %530 = vector.shape_cast %529 : vector<1x32xf32> to vector<1x1x32xf32>
    %531 = vector.broadcast %530 : vector<1x1x32xf32> to vector<4x4x32xf32>
    %532 = arith.mulf %528, %531 : vector<4x4x32xf32>
    %533 = arith.addf %527, %532 : vector<4x4x32xf32>
    %c1_315 = arith.constant 1 : index
    %c0_316 = arith.constant 0 : index
    %c0_317 = arith.constant 0 : index
    %534 = tpu.strided_load %arg27[%c1_315, %c0_316, %c0_317] {strides = array<i32: 2, 2, 1>} : memref<10x10x32xf32, #tpu.memory_space<vmem>>, vector<4x4x32xf32>
    %c3_318 = arith.constant 3 : index
    %c0_319 = arith.constant 0 : index
    %535 = vector.load %arg16[%c3_318, %c0_319] : memref<9x32xf32, #tpu.memory_space<vmem>>, vector<1x32xf32>
    %536 = vector.shape_cast %535 : vector<1x32xf32> to vector<1x1x32xf32>
    %537 = vector.broadcast %536 : vector<1x1x32xf32> to vector<4x4x32xf32>
    %538 = arith.mulf %534, %537 : vector<4x4x32xf32>
    %539 = arith.addf %533, %538 : vector<4x4x32xf32>
    %c1_320 = arith.constant 1 : index
    %c1_321 = arith.constant 1 : index
    %c0_322 = arith.constant 0 : index
    %540 = tpu.strided_load %arg27[%c1_320, %c1_321, %c0_322] {strides = array<i32: 2, 2, 1>} : memref<10x10x32xf32, #tpu.memory_space<vmem>>, vector<4x4x32xf32>
    %c4_323 = arith.constant 4 : index
    %c0_324 = arith.constant 0 : index
    %541 = vector.load %arg16[%c4_323, %c0_324] : memref<9x32xf32, #tpu.memory_space<vmem>>, vector<1x32xf32>
    %542 = vector.shape_cast %541 : vector<1x32xf32> to vector<1x1x32xf32>
    %543 = vector.broadcast %542 : vector<1x1x32xf32> to vector<4x4x32xf32>
    %544 = arith.mulf %540, %543 : vector<4x4x32xf32>
    %545 = arith.addf %539, %544 : vector<4x4x32xf32>
    %c1_325 = arith.constant 1 : index
    %c2_326 = arith.constant 2 : index
    %c0_327 = arith.constant 0 : index
    %546 = tpu.strided_load %arg27[%c1_325, %c2_326, %c0_327] {strides = array<i32: 2, 2, 1>} : memref<10x10x32xf32, #tpu.memory_space<vmem>>, vector<4x4x32xf32>
    %c5_328 = arith.constant 5 : index
    %c0_329 = arith.constant 0 : index
    %547 = vector.load %arg16[%c5_328, %c0_329] : memref<9x32xf32, #tpu.memory_space<vmem>>, vector<1x32xf32>
    %548 = vector.shape_cast %547 : vector<1x32xf32> to vector<1x1x32xf32>
    %549 = vector.broadcast %548 : vector<1x1x32xf32> to vector<4x4x32xf32>
    %550 = arith.mulf %546, %549 : vector<4x4x32xf32>
    %551 = arith.addf %545, %550 : vector<4x4x32xf32>
    %c2_330 = arith.constant 2 : index
    %c0_331 = arith.constant 0 : index
    %c0_332 = arith.constant 0 : index
    %552 = tpu.strided_load %arg27[%c2_330, %c0_331, %c0_332] {strides = array<i32: 2, 2, 1>} : memref<10x10x32xf32, #tpu.memory_space<vmem>>, vector<4x4x32xf32>
    %c6_333 = arith.constant 6 : index
    %c0_334 = arith.constant 0 : index
    %553 = vector.load %arg16[%c6_333, %c0_334] : memref<9x32xf32, #tpu.memory_space<vmem>>, vector<1x32xf32>
    %554 = vector.shape_cast %553 : vector<1x32xf32> to vector<1x1x32xf32>
    %555 = vector.broadcast %554 : vector<1x1x32xf32> to vector<4x4x32xf32>
    %556 = arith.mulf %552, %555 : vector<4x4x32xf32>
    %557 = arith.addf %551, %556 : vector<4x4x32xf32>
    %c2_335 = arith.constant 2 : index
    %c1_336 = arith.constant 1 : index
    %c0_337 = arith.constant 0 : index
    %558 = tpu.strided_load %arg27[%c2_335, %c1_336, %c0_337] {strides = array<i32: 2, 2, 1>} : memref<10x10x32xf32, #tpu.memory_space<vmem>>, vector<4x4x32xf32>
    %c7_338 = arith.constant 7 : index
    %c0_339 = arith.constant 0 : index
    %559 = vector.load %arg16[%c7_338, %c0_339] : memref<9x32xf32, #tpu.memory_space<vmem>>, vector<1x32xf32>
    %560 = vector.shape_cast %559 : vector<1x32xf32> to vector<1x1x32xf32>
    %561 = vector.broadcast %560 : vector<1x1x32xf32> to vector<4x4x32xf32>
    %562 = arith.mulf %558, %561 : vector<4x4x32xf32>
    %563 = arith.addf %557, %562 : vector<4x4x32xf32>
    %c2_340 = arith.constant 2 : index
    %c2_341 = arith.constant 2 : index
    %c0_342 = arith.constant 0 : index
    %564 = tpu.strided_load %arg27[%c2_340, %c2_341, %c0_342] {strides = array<i32: 2, 2, 1>} : memref<10x10x32xf32, #tpu.memory_space<vmem>>, vector<4x4x32xf32>
    %c8_343 = arith.constant 8 : index
    %c0_344 = arith.constant 0 : index
    %565 = vector.load %arg16[%c8_343, %c0_344] : memref<9x32xf32, #tpu.memory_space<vmem>>, vector<1x32xf32>
    %566 = vector.shape_cast %565 : vector<1x32xf32> to vector<1x1x32xf32>
    %567 = vector.broadcast %566 : vector<1x1x32xf32> to vector<4x4x32xf32>
    %568 = arith.mulf %564, %567 : vector<4x4x32xf32>
    %569 = arith.addf %563, %568 : vector<4x4x32xf32>
    %570 = vector.extract_strided_slice %569 {offsets = [0, 0, 0], sizes = [1, 4, 32], strides = [1, 1, 1]} : vector<4x4x32xf32> to vector<1x4x32xf32>
    %571 = vector.shape_cast %570 : vector<1x4x32xf32> to vector<4x32xf32>
    %c0_345 = arith.constant 0 : index
    %c0_346 = arith.constant 0 : index
    %572 = vector.load %arg28[%c0_345, %c0_346] : memref<16x32xf32, #tpu.memory_space<vmem>>, vector<4x32xf32>
    tpu.vector_store %arg28[%c0_345, %c0_346], %571 {strides = array<i32>} : memref<16x32xf32, #tpu.memory_space<vmem>>, vector<4x32xf32>,
    %573 = vector.extract_strided_slice %569 {offsets = [1, 0, 0], sizes = [1, 4, 32], strides = [1, 1, 1]} : vector<4x4x32xf32> to vector<1x4x32xf32>
    %574 = vector.shape_cast %573 : vector<1x4x32xf32> to vector<4x32xf32>
    %c4_347 = arith.constant 4 : index
    %c0_348 = arith.constant 0 : index
    %575 = vector.load %arg28[%c4_347, %c0_348] : memref<16x32xf32, #tpu.memory_space<vmem>>, vector<4x32xf32>
    tpu.vector_store %arg28[%c4_347, %c0_348], %574 {strides = array<i32>} : memref<16x32xf32, #tpu.memory_space<vmem>>, vector<4x32xf32>,
    %576 = vector.extract_strided_slice %569 {offsets = [2, 0, 0], sizes = [1, 4, 32], strides = [1, 1, 1]} : vector<4x4x32xf32> to vector<1x4x32xf32>
    %577 = vector.shape_cast %576 : vector<1x4x32xf32> to vector<4x32xf32>
    %c8_349 = arith.constant 8 : index
    %c0_350 = arith.constant 0 : index
    %578 = vector.load %arg28[%c8_349, %c0_350] : memref<16x32xf32, #tpu.memory_space<vmem>>, vector<4x32xf32>
    tpu.vector_store %arg28[%c8_349, %c0_350], %577 {strides = array<i32>} : memref<16x32xf32, #tpu.memory_space<vmem>>, vector<4x32xf32>,
    %579 = vector.extract_strided_slice %569 {offsets = [3, 0, 0], sizes = [1, 4, 32], strides = [1, 1, 1]} : vector<4x4x32xf32> to vector<1x4x32xf32>
    %580 = vector.shape_cast %579 : vector<1x4x32xf32> to vector<4x32xf32>
    %c12_351 = arith.constant 12 : index
    %c0_352 = arith.constant 0 : index
    %581 = vector.load %arg28[%c12_351, %c0_352] : memref<16x32xf32, #tpu.memory_space<vmem>>, vector<4x32xf32>
    tpu.vector_store %arg28[%c12_351, %c0_352], %580 {strides = array<i32>} : memref<16x32xf32, #tpu.memory_space<vmem>>, vector<4x32xf32>,
    %c0_353 = arith.constant 0 : index
    %c0_354 = arith.constant 0 : index
    %582 = vector.load %arg28[%c0_353, %c0_354] : memref<16x32xf32, #tpu.memory_space<vmem>>, vector<16x32xf32>
    %cst_355 = arith.constant dense<0.000000e+00> : vector<16xf32>
    %583 = vector.multi_reduction <add>, %582, %cst_355 [1] : vector<16x32xf32> to vector<16xf32>
    %584 = vector.shape_cast %583 : vector<16xf32> to vector<16x1xf32>
    %cst_356 = arith.constant 3.200000e+01 : f32
    %585 = vector.broadcast %cst_356 : f32 to vector<16x1xf32>
    %586 = arith.divf %584, %585 : vector<16x1xf32>
    %587 = vector.broadcast %586 : vector<16x1xf32> to vector<16x32xf32>
    %588 = arith.subf %582, %587 : vector<16x32xf32>
    %589 = arith.mulf %588, %588 : vector<16x32xf32>
    %cst_357 = arith.constant dense<0.000000e+00> : vector<16xf32>
    %590 = vector.multi_reduction <add>, %589, %cst_357 [1] : vector<16x32xf32> to vector<16xf32>
    %591 = vector.shape_cast %590 : vector<16xf32> to vector<16x1xf32>
    %cst_358 = arith.constant 3.200000e+01 : f32
    %592 = vector.broadcast %cst_358 : f32 to vector<16x1xf32>
    %593 = arith.divf %591, %592 : vector<16x1xf32>
    %594 = vector.broadcast %586 : vector<16x1xf32> to vector<16x32xf32>
    %595 = arith.subf %582, %594 : vector<16x32xf32>
    %cst_359 = arith.constant 9.99999974E-6 : f32
    %596 = vector.broadcast %cst_359 : f32 to vector<16x1xf32>
    %597 = arith.addf %593, %596 : vector<16x1xf32>
    %598 = math.rsqrt %597 : vector<16x1xf32>
    %599 = vector.broadcast %598 : vector<16x1xf32> to vector<16x32xf32>
    %600 = arith.mulf %595, %599 : vector<16x32xf32>
    %601 = vector.broadcast %70 : vector<1x32xf32> to vector<16x32xf32>
    %602 = arith.mulf %600, %601 : vector<16x32xf32>
    %603 = vector.broadcast %71 : vector<1x32xf32> to vector<16x32xf32>
    %604 = arith.addf %602, %603 : vector<16x32xf32>
    %cst_360 = arith.constant 3.000000e+00 : f32
    %605 = vector.broadcast %cst_360 : f32 to vector<16x32xf32>
    %606 = arith.addf %604, %605 : vector<16x32xf32>
    %cst_361 = arith.constant 0.000000e+00 : f32
    %cst_362 = arith.constant 6.000000e+00 : f32
    %607 = vector.broadcast %cst_361 : f32 to vector<16x32xf32>
    %608 = arith.maximumf %607, %606 : vector<16x32xf32>
    %609 = vector.broadcast %cst_362 : f32 to vector<16x32xf32>
    %610 = arith.minimumf %609, %608 : vector<16x32xf32>
    %cst_363 = arith.constant 0.166666672 : f32
    %611 = vector.broadcast %cst_363 : f32 to vector<16x32xf32>
    %612 = arith.mulf %610, %611 : vector<16x32xf32>
    %613 = arith.mulf %604, %612 : vector<16x32xf32>
    %cst_364 = arith.constant dense<0.000000e+00> : vector<32xf32>
    %614 = vector.multi_reduction <add>, %613, %cst_364 [0] : vector<16x32xf32> to vector<32xf32>
    %615 = vector.shape_cast %614 : vector<32xf32> to vector<1x32xf32>
    %cst_365 = arith.constant 1.600000e+01 : f32
    %616 = vector.broadcast %cst_365 : f32 to vector<1x32xf32>
    %617 = arith.divf %615, %616 : vector<1x32xf32>
    %618 = vector.broadcast %617 : vector<1x32xf32> to vector<8x32xf32>
    %619 = arith.mulf %72, %618 : vector<8x32xf32>
    %cst_366 = arith.constant dense<0.000000e+00> : vector<8xf32>
    %620 = vector.multi_reduction <add>, %619, %cst_366 [1] : vector<8x32xf32> to vector<8xf32>
    %621 = vector.shape_cast %620 : vector<8xf32> to vector<8x1xf32>
    %622 = arith.addf %621, %73 : vector<8x1xf32>
    %cst_367 = arith.constant 0.000000e+00 : f32
    %623 = vector.broadcast %cst_367 : f32 to vector<8x1xf32>
    %624 = arith.maximumf %622, %623 : vector<8x1xf32>
    %625 = vector.broadcast %624 : vector<8x1xf32> to vector<8x32xf32>
    %626 = arith.mulf %74, %625 : vector<8x32xf32>
    %cst_368 = arith.constant dense<0.000000e+00> : vector<32xf32>
    %627 = vector.multi_reduction <add>, %626, %cst_368 [0] : vector<8x32xf32> to vector<32xf32>
    %628 = vector.shape_cast %627 : vector<32xf32> to vector<1x32xf32>
    %629 = arith.addf %628, %75 : vector<1x32xf32>
    %cst_369 = arith.constant 3.000000e+00 : f32
    %630 = vector.broadcast %cst_369 : f32 to vector<1x32xf32>
    %631 = arith.addf %629, %630 : vector<1x32xf32>
    %cst_370 = arith.constant 0.000000e+00 : f32
    %cst_371 = arith.constant 6.000000e+00 : f32
    %632 = vector.broadcast %cst_370 : f32 to vector<1x32xf32>
    %633 = arith.maximumf %632, %631 : vector<1x32xf32>
    %634 = vector.broadcast %cst_371 : f32 to vector<1x32xf32>
    %635 = arith.minimumf %634, %633 : vector<1x32xf32>
    %cst_372 = arith.constant 0.166666672 : f32
    %636 = vector.broadcast %cst_372 : f32 to vector<1x32xf32>
    %637 = arith.mulf %635, %636 : vector<1x32xf32>
    %638 = vector.broadcast %637 : vector<1x32xf32> to vector<16x32xf32>
    %639 = arith.mulf %613, %638 : vector<16x32xf32>
    %640 = arith.truncf %639 : vector<16x32xf32> to vector<16x32xbf16>
    %cst_373 = arith.constant dense<0.000000e+00> : vector<16x32xf32>
    %641 = tpu.matmul %640, %76, %cst_373 {dimension_numbers = #tpu.dot_dimension_numbers<[1], [0], [0], [1], [0, 0, 1, 1], [], []>} : vector<16x32xbf16>, vector<32x32xbf16>, vector<16x32xf32> -> vector<16x32xf32>
    %cst_374 = arith.constant dense<0.000000e+00> : vector<16xf32>
    %642 = vector.multi_reduction <add>, %641, %cst_374 [1] : vector<16x32xf32> to vector<16xf32>
    %643 = vector.shape_cast %642 : vector<16xf32> to vector<16x1xf32>
    %cst_375 = arith.constant 3.200000e+01 : f32
    %644 = vector.broadcast %cst_375 : f32 to vector<16x1xf32>
    %645 = arith.divf %643, %644 : vector<16x1xf32>
    %646 = vector.broadcast %645 : vector<16x1xf32> to vector<16x32xf32>
    %647 = arith.subf %641, %646 : vector<16x32xf32>
    %648 = arith.mulf %647, %647 : vector<16x32xf32>
    %cst_376 = arith.constant dense<0.000000e+00> : vector<16xf32>
    %649 = vector.multi_reduction <add>, %648, %cst_376 [1] : vector<16x32xf32> to vector<16xf32>
    %650 = vector.shape_cast %649 : vector<16xf32> to vector<16x1xf32>
    %cst_377 = arith.constant 3.200000e+01 : f32
    %651 = vector.broadcast %cst_377 : f32 to vector<16x1xf32>
    %652 = arith.divf %650, %651 : vector<16x1xf32>
    %653 = vector.broadcast %645 : vector<16x1xf32> to vector<16x32xf32>
    %654 = arith.subf %641, %653 : vector<16x32xf32>
    %cst_378 = arith.constant 9.99999974E-6 : f32
    %655 = vector.broadcast %cst_378 : f32 to vector<16x1xf32>
    %656 = arith.addf %652, %655 : vector<16x1xf32>
    %657 = math.rsqrt %656 : vector<16x1xf32>
    %658 = vector.broadcast %657 : vector<16x1xf32> to vector<16x32xf32>
    %659 = arith.mulf %654, %658 : vector<16x32xf32>
    %660 = vector.broadcast %77 : vector<1x32xf32> to vector<16x32xf32>
    %661 = arith.mulf %659, %660 : vector<16x32xf32>
    %662 = vector.broadcast %78 : vector<1x32xf32> to vector<16x32xf32>
    %663 = arith.addf %661, %662 : vector<16x32xf32>
    %664 = vector.shape_cast %663 : vector<16x32xf32> to vector<1x16x32xf32>
    %665 = tpu.concatenate %371, %664 in 0 : vector<1x16x32xf32>, vector<1x16x32xf32> -> vector<2x16x32xf32>
    %c0_379 = arith.constant 0 : index
    %c0_380 = arith.constant 0 : index
    %c0_381 = arith.constant 0 : index
    %666 = vector.load %arg26[%c0_379, %c0_380, %c0_381] : memref<2x16x32xf32, #tpu.memory_space<vmem>>, vector<2x16x32xf32>
    tpu.vector_store %arg26[%c0_379, %c0_380, %c0_381], %665 {strides = array<i32>} : memref<2x16x32xf32, #tpu.memory_space<vmem>>, vector<2x16x32xf32>,
    return
  }
  func.func @transform_0(%arg0: i32) -> (i32, i32, i32) {
    %c0_i32 = arith.constant 0 : i32
    %c0_i32_0 = arith.constant 0 : i32
    %c0_i32_1 = arith.constant 0 : i32
    return %arg0, %c0_i32, %c0_i32_0 : i32, i32, i32
  }
  func.func @transform_1(%arg0: i32) -> (i32, i32) {
    %c0_i32 = arith.constant 0 : i32
    %c0_i32_0 = arith.constant 0 : i32
    %c0_i32_1 = arith.constant 0 : i32
    return %c0_i32, %c0_i32_0 : i32, i32
  }
  func.func @transform_2(%arg0: i32) -> (i32, i32) {
    %c0_i32 = arith.constant 0 : i32
    %c0_i32_0 = arith.constant 0 : i32
    %c0_i32_1 = arith.constant 0 : i32
    return %c0_i32, %c0_i32_0 : i32, i32
  }
  func.func @transform_3(%arg0: i32) -> (i32, i32) {
    %c0_i32 = arith.constant 0 : i32
    %c0_i32_0 = arith.constant 0 : i32
    %c0_i32_1 = arith.constant 0 : i32
    return %c0_i32, %c0_i32_0 : i32, i32
  }
  func.func @transform_4(%arg0: i32) -> (i32, i32) {
    %c0_i32 = arith.constant 0 : i32
    %c0_i32_0 = arith.constant 0 : i32
    %c0_i32_1 = arith.constant 0 : i32
    return %c0_i32, %c0_i32_0 : i32, i32
  }
  func.func @transform_5(%arg0: i32) -> (i32, i32) {
    %c0_i32 = arith.constant 0 : i32
    %c0_i32_0 = arith.constant 0 : i32
    %c0_i32_1 = arith.constant 0 : i32
    return %c0_i32, %c0_i32_0 : i32, i32
  }
  func.func @transform_6(%arg0: i32) -> (i32, i32) {
    %c0_i32 = arith.constant 0 : i32
    %c0_i32_0 = arith.constant 0 : i32
    %c0_i32_1 = arith.constant 0 : i32
    return %c0_i32, %c0_i32_0 : i32, i32
  }
  func.func @transform_7(%arg0: i32) -> (i32, i32) {
    %c0_i32 = arith.constant 0 : i32
    %c0_i32_0 = arith.constant 0 : i32
    %c0_i32_1 = arith.constant 0 : i32
    return %c0_i32, %c0_i32_0 : i32, i32
  }
  func.func @transform_8(%arg0: i32) -> (i32, i32) {
    %c0_i32 = arith.constant 0 : i32
    %c0_i32_0 = arith.constant 0 : i32
    %c0_i32_1 = arith.constant 0 : i32
    return %c0_i32, %c0_i32_0 : i32, i32
  }
  func.func @transform_9(%arg0: i32) -> (i32, i32) {
    %c0_i32 = arith.constant 0 : i32
    %c0_i32_0 = arith.constant 0 : i32
    %c0_i32_1 = arith.constant 0 : i32
    return %c0_i32, %c0_i32_0 : i32, i32
  }
  func.func @transform_10(%arg0: i32) -> (i32, i32) {
    %c0_i32 = arith.constant 0 : i32
    %c0_i32_0 = arith.constant 0 : i32
    %c0_i32_1 = arith.constant 0 : i32
    return %c0_i32, %c0_i32_0 : i32, i32
  }
  func.func @transform_11(%arg0: i32) -> (i32, i32) {
    %c0_i32 = arith.constant 0 : i32
    %c0_i32_0 = arith.constant 0 : i32
    %c0_i32_1 = arith.constant 0 : i32
    return %c0_i32, %c0_i32_0 : i32, i32
  }
  func.func @transform_12(%arg0: i32) -> (i32, i32) {
    %c0_i32 = arith.constant 0 : i32
    %c0_i32_0 = arith.constant 0 : i32
    %c0_i32_1 = arith.constant 0 : i32
    return %c0_i32, %c0_i32_0 : i32, i32
  }
  func.func @transform_13(%arg0: i32) -> (i32, i32) {
    %c0_i32 = arith.constant 0 : i32
    %c0_i32_0 = arith.constant 0 : i32
    %c0_i32_1 = arith.constant 0 : i32
    return %c0_i32, %c0_i32_0 : i32, i32
  }
  func.func @transform_14(%arg0: i32) -> (i32, i32) {
    %c0_i32 = arith.constant 0 : i32
    %c0_i32_0 = arith.constant 0 : i32
    %c0_i32_1 = arith.constant 0 : i32
    return %c0_i32, %c0_i32_0 : i32, i32
  }
  func.func @transform_15(%arg0: i32) -> (i32, i32) {
    %c0_i32 = arith.constant 0 : i32
    %c0_i32_0 = arith.constant 0 : i32
    %c0_i32_1 = arith.constant 0 : i32
    return %c0_i32, %c0_i32_0 : i32, i32
  }
  func.func @transform_16(%arg0: i32) -> (i32, i32) {
    %c0_i32 = arith.constant 0 : i32
    %c0_i32_0 = arith.constant 0 : i32
    %c0_i32_1 = arith.constant 0 : i32
    return %c0_i32, %c0_i32_0 : i32, i32
  }
  func.func @transform_17(%arg0: i32) -> (i32, i32) {
    %c0_i32 = arith.constant 0 : i32
    %c0_i32_0 = arith.constant 0 : i32
    %c0_i32_1 = arith.constant 0 : i32
    return %c0_i32, %c0_i32_0 : i32, i32
  }
  func.func @transform_18(%arg0: i32) -> (i32, i32) {
    %c0_i32 = arith.constant 0 : i32
    %c0_i32_0 = arith.constant 0 : i32
    %c0_i32_1 = arith.constant 0 : i32
    return %c0_i32, %c0_i32_0 : i32, i32
  }
  func.func @transform_19(%arg0: i32) -> (i32, i32) {
    %c0_i32 = arith.constant 0 : i32
    %c0_i32_0 = arith.constant 0 : i32
    %c0_i32_1 = arith.constant 0 : i32
    return %c0_i32, %c0_i32_0 : i32, i32
  }
  func.func @transform_20(%arg0: i32) -> (i32, i32) {
    %c0_i32 = arith.constant 0 : i32
    %c0_i32_0 = arith.constant 0 : i32
    %c0_i32_1 = arith.constant 0 : i32
    return %c0_i32, %c0_i32_0 : i32, i32
  }
  func.func @transform_21(%arg0: i32) -> (i32, i32) {
    %c0_i32 = arith.constant 0 : i32
    %c0_i32_0 = arith.constant 0 : i32
    %c0_i32_1 = arith.constant 0 : i32
    return %c0_i32, %c0_i32_0 : i32, i32
  }
  func.func @transform_22(%arg0: i32) -> (i32, i32) {
    %c0_i32 = arith.constant 0 : i32
    %c0_i32_0 = arith.constant 0 : i32
    %c0_i32_1 = arith.constant 0 : i32
    return %c0_i32, %c0_i32_0 : i32, i32
  }
  func.func @transform_23(%arg0: i32) -> (i32, i32) {
    %c0_i32 = arith.constant 0 : i32
    %c0_i32_0 = arith.constant 0 : i32
    %c0_i32_1 = arith.constant 0 : i32
    return %c0_i32, %c0_i32_0 : i32, i32
  }
  func.func @transform_24(%arg0: i32) -> (i32, i32) {
    %c0_i32 = arith.constant 0 : i32
    %c0_i32_0 = arith.constant 0 : i32
    %c0_i32_1 = arith.constant 0 : i32
    return %c0_i32, %c0_i32_0 : i32, i32
  }
  func.func @transform_25(%arg0: i32) -> (i32, i32, i32) {
    %c0_i32 = arith.constant 0 : i32
    %c0_i32_0 = arith.constant 0 : i32
    %c0_i32_1 = arith.constant 0 : i32
    return %arg0, %c0_i32, %c0_i32_0 : i32, i32, i32
  }
}

</mosaic_0001>

<llo_original>
// kernel: ldp_block_forward.1
$region0: #{ldp_block_forward.1}
  #allocation0 [shape = 'u32[]', space=smem, size = 0x4, offset = 0x4, fixed_abs, tag = 'smem constant byte address 0x4 - core index']
  #allocation1 [shape = 'u32[144,128]{1,0:T(1,128)}', space=vmem, size = 0x12000, scoped, tag = 'internal scratch']
  #allocation2 [shape = 'f32[10,10,32]{2,1,0:T(8,128)}', space=vmem, size = 0x14000, scoped, tag = 'scratch operand']
  #allocation3 [shape = 'f32[16,32]{1,0:T(8,128)}', space=vmem, size = 0x2000, scoped, tag = 'scratch operand']
  %s0 = inlined_call_operand.hbm [shape: f32[4,64,64], index: 0, kind: input, shape index: {}]
  %s1 = inlined_call_operand.vmem [shape: bf16[64,32], index: 1, kind: input, shape index: {}]
  %s2 = inlined_call_operand.hbm [shape: f32[1,32], index: 2, kind: input, shape index: {}]
  %s3 = inlined_call_operand.vmem [shape: bf16[32,32], index: 3, kind: input, shape index: {}]
  %s4 = inlined_call_operand.hbm [shape: f32[1,32], index: 4, kind: input, shape index: {}]
  %s5 = inlined_call_operand.vmem [shape: f32[9,32], index: 5, kind: input, shape index: {}]
  %s6 = inlined_call_operand.hbm [shape: f32[1,32], index: 6, kind: input, shape index: {}]
  %s7 = inlined_call_operand.hbm [shape: f32[1,32], index: 7, kind: input, shape index: {}]
  %s8 = inlined_call_operand.vmem [shape: f32[8,32], index: 8, kind: input, shape index: {}]
  %s9 = inlined_call_operand.vmem [shape: f32[8,1], index: 9, kind: input, shape index: {}]
  %s10 = inlined_call_operand.hbm [shape: f32[8,32], index: 10, kind: input, shape index: {}]
  %s11 = inlined_call_operand.vmem [shape: f32[1,32], index: 11, kind: input, shape index: {}]
  %s12 = inlined_call_operand.vmem [shape: bf16[32,32], index: 12, kind: input, shape index: {}]
  %s13 = inlined_call_operand.hbm [shape: f32[1,32], index: 13, kind: input, shape index: {}]
  %s14 = inlined_call_operand.hbm [shape: f32[1,32], index: 14, kind: input, shape index: {}]
  %s15 = inlined_call_operand.vmem [shape: f32[9,32], index: 15, kind: input, shape index: {}]
  %s16 = inlined_call_operand.vmem [shape: f32[1,32], index: 16, kind: input, shape index: {}]
  %s17 = inlined_call_operand.hbm [shape: f32[1,32], index: 17, kind: input, shape index: {}]
  %s18 = inlined_call_operand.vmem [shape: f32[8,32], index: 18, kind: input, shape index: {}]
  %s19 = inlined_call_operand.vmem [shape: f32[8,1], index: 19, kind: input, shape index: {}]
  %s20 = inlined_call_operand.vmem [shape: f32[8,32], index: 20, kind: input, shape index: {}]
  %s21 = inlined_call_operand.vmem [shape: f32[1,32], index: 21, kind: input, shape index: {}]
  %s22 = inlined_call_operand.vmem [shape: bf16[32,32], index: 22, kind: input, shape index: {}]
  %s23 = inlined_call_operand.vmem [shape: f32[1,32], index: 23, kind: input, shape index: {}]
  %s24 = inlined_call_operand.hbm [shape: f32[1,32], index: 24, kind: input, shape index: {}]
  %s25 = inlined_call_operand.hbm [shape: f32[4,16,32], index: 25, kind: output, shape index: {}]
  %s26 = sld [smem:[#allocation0]]
  $region173: #{ldp_block_forward.1} parent=0
    _
  %s28 = ssub.s32 1, %s26
  %s29 = scalar_select 0, %s28, %s26
  $region1: #{ldp_block_forward.1} parent=0
    #allocation4 [shape = 'u8[131072]{0}', space=vmem, size = 0x20000, scoped, tag = 'input window, operand 0']
    #allocation5 [shape = 's32[2]{0}', space=sflag, size = 0x8, scoped, tag = 'scoped memory for ldp_block_forward.1']
    #allocation6 [shape = 's32[2]{0}', space=sflag, size = 0x8, scoped, tag = 'scoped memory for ldp_block_forward.1']
    #allocation7 [shape = 'u8[512]{0}', space=vmem, size = 0x400, scoped, tag = 'input window, operand 2, single buffered']
    #allocation8 [shape = 's32[1]{0}', space=sflag, size = 0x4, scoped, tag = 'scoped memory for ldp_block_forward.1']
    #allocation9 [shape = 'u8[512]{0}', space=vmem, size = 0x400, scoped, tag = 'input window, operand 4, single buffered']
    #allocation10 [shape = 'u8[512]{0}', space=vmem, size = 0x400, scoped, tag = 'input window, operand 6, single buffered']
    #allocation11 [shape = 's32[1]{0}', space=sflag, size = 0x4, scoped, tag = 'scoped memory for ldp_block_forward.1']
    #allocation12 [shape = 'u8[512]{0}', space=vmem, size = 0x400, scoped, tag = 'input window, operand 7, single buffered']
    #allocation13 [shape = 'u8[4096]{0}', space=vmem, size = 0x1000, scoped, tag = 'input window, operand 10, single buffered']
    #allocation14 [shape = 's32[1]{0}', space=sflag, size = 0x4, scoped, tag = 'scoped memory for ldp_block_forward.1']
    #allocation15 [shape = 'u8[512]{0}', space=vmem, size = 0x400, scoped, tag = 'input window, operand 13, single buffered']
    #allocation16 [shape = 'u8[512]{0}', space=vmem, size = 0x400, scoped, tag = 'input window, operand 14, single buffered']
    #allocation17 [shape = 's32[1]{0}', space=sflag, size = 0x4, scoped, tag = 'scoped memory for ldp_block_forward.1']
    #allocation18 [shape = 'u8[512]{0}', space=vmem, size = 0x400, scoped, tag = 'input window, operand 17, single buffered']
    #allocation19 [shape = 'u8[512]{0}', space=vmem, size = 0x400, scoped, tag = 'input window, operand 24, single buffered']
    #allocation20 [shape = 's32[1]{0}', space=sflag, size = 0x4, scoped, tag = 'scoped memory for ldp_block_forward.1']
    #allocation21 [shape = 'u8[32768]{0}', space=vmem, size = 0x8000, scoped, tag = 'output window, operand 0']
    %30 = vsyncpa [#allocation5], 0
    %s31 = scalar_lea.sflag [#allocation5], 1
    %32 = vsyncpa %s31, 0
    %33 = vsyncpa [#allocation8], 0
    %34 = vsyncpa [#allocation11], 0
    %35 = vsyncpa [#allocation14], 0
    %36 = vsyncpa [#allocation17], 0
    %37 = vsyncpa [#allocation20], 0
    %38 = vsyncpa [#allocation6], 0
    %s39 = scalar_lea.sflag [#allocation6], 1
    %40 = vsyncpa %s39, 0
    loop: start=0, step=1, limit=4
    $region2: #{ldp_block_forward.1} parent=1 // loop_pre_header
      _
    $region3: #{ldp_block_forward.1} parent=1 // loop_header
      %s42 = sphi 0, %s46
      %p43 = scmp.ge.s32.totalorder %s42, 4
      %s52 = sphi 0, %s54
      %s55 = sphi 0, %s52
      %s56 = sphi 0, %s55
      %s72 = sphi 0, %s56
      %s76 = sphi 0, %s76
      %s78 = sphi 0, %s76
      %s79 = sphi 0, %s78
      %s93 = sphi 0, %s79
      %s97 = sphi 0, %s97
      %s99 = sphi 0, %s97
      %s100 = sphi 0, %s99
      %s114 = sphi 0, %s100
      %s118 = sphi 0, %s118
      %s120 = sphi 0, %s118
      %s121 = sphi 0, %s120
      %s135 = sphi 0, %s121
      %s139 = sphi 0, %s139
      %s141 = sphi 0, %s139
      %s142 = sphi 0, %s141
      %s156 = sphi 0, %s142
      %s160 = sphi 0, %s160
      %s162 = sphi 0, %s160
      %s163 = sphi 0, %s162
      %s177 = sphi 0, %s163
      %s181 = sphi 0, %s181
      %s183 = sphi 0, %s181
      %s184 = sphi 0, %s183
      %s198 = sphi 0, %s184
      %s202 = sphi 0, %s202
      %s204 = sphi 0, %s202
      %s205 = sphi 0, %s204
      %s219 = sphi 0, %s205
      %s223 = sphi 0, %s223
      %s225 = sphi 0, %s223
      %s226 = sphi 0, %s225
      %s240 = sphi 0, %s226
      %s244 = sphi 0, %s244
      %s246 = sphi 0, %s244
      %s247 = sphi 0, %s246
      %s261 = sphi 0, %s247
      %s265 = sphi 0, %s265
      %s267 = sphi 0, %s265
      %s268 = sphi 0, %s267
      %s282 = sphi 0, %s268
      %s286 = sphi 0, %s286
      %s288 = sphi 0, %s286
      %s289 = sphi 0, %s288
      %s303 = sphi 0, %s289
      %s307 = sphi 0, %s307
      %s309 = sphi 0, %s307
      %s310 = sphi 0, %s309
      %s324 = sphi 0, %s310
      %s328 = sphi 0, %s328
      %s330 = sphi 0, %s328
      %s331 = sphi 0, %s330
      %s345 = sphi 0, %s331
      %s349 = sphi 0, %s349
      %s351 = sphi 0, %s349
      %s352 = sphi 0, %s351
      %s366 = sphi 0, %s352
      %s370 = sphi 0, %s370
      %s372 = sphi 0, %s370
      %s373 = sphi 0, %s372
      %s387 = sphi 0, %s373
      %s391 = sphi 0, %s391
      %s393 = sphi 0, %s391
      %s394 = sphi 0, %s393
      %s408 = sphi 0, %s394
      %s412 = sphi 0, %s412
      %s414 = sphi 0, %s412
      %s415 = sphi 0, %s414
      %s429 = sphi 0, %s415
      %s433 = sphi 0, %s433
      %s435 = sphi 0, %s433
      %s436 = sphi 0, %s435
      %s450 = sphi 0, %s436
      %s454 = sphi 0, %s454
      %s456 = sphi 0, %s454
      %s457 = sphi 0, %s456
      %s471 = sphi 0, %s457
      %s475 = sphi 0, %s475
      %s477 = sphi 0, %s475
      %s478 = sphi 0, %s477
      %s492 = sphi 0, %s478
      %s496 = sphi 0, %s496
      %s498 = sphi 0, %s496
      %s499 = sphi 0, %s498
      %s513 = sphi 0, %s499
      %s517 = sphi 0, %s517
      %s519 = sphi 0, %s517
      %s520 = sphi 0, %s519
      %s534 = sphi 0, %s520
      %s538 = sphi 0, %s538
      %s540 = sphi 0, %s538
      %s541 = sphi 0, %s540
      %s555 = sphi 0, %s541
      %s559 = sphi 0, %s559
      %s561 = sphi 0, %s559
      %s562 = sphi 0, %s561
      %s576 = sphi 0, %s562
      %s582 = sphi 0, %s584
      %s585 = sphi 0, %s582
      %s586 = sphi 0, %s585
      %s602 = sphi 0, %s586
    $region4: #{ldp_block_forward.1} parent=1 // loop_header_branch
      %45 = sbr.rel (%p43) target = $region8
    $region5: #{ldp_block_forward.1} parent=1 // loop_body
      %s47 = ssub.s32 %s42, 1
      %s48 = ssub.s32 %s42, 2
      %s49 = sadd.s32 %s42, 1
      %s50 = ssub.s32 %s42, %s49
      %p51 = scmp.eq.s32.totalorder %s50, 0
      %s53 = sadd.s32 %s52, 1
      %s54 = scalar_select %p51, %s52, %s53
      %p57 = pneg %p51
      %p58 = scmp.eq.s32.totalorder %s42, 1
      %p59 = por %p57, %p58
      %p60 = scmp.ne.s32.totalorder %s52, %s55
      %p61 = scmp.eq.s32.totalorder %s42, 0
      %p62 = por %p60, %p61
      %p63 = scmp.ne.s32.totalorder %s52, %s55
      %p64 = scmp.eq.s32.totalorder %s47, 1
      %p65 = por %p63, %p64
      %p66 = scmp.ne.s32.totalorder %s55, %s56
      %p67 = scmp.eq.s32.totalorder %s47, 0
      %p68 = por %p66, %p67
      %p69 = scmp.ne.s32.totalorder %s55, %s56
      %p70 = scmp.eq.s32.totalorder %s48, 1
      %p71 = por %p69, %p70
      %p73 = scmp.ne.s32.totalorder %s56, %s72
      %p74 = scmp.eq.s32.totalorder %s48, 0
      %p75 = por %p73, %p74
      %s77 = sadd.s32 %s76, 1
      %p80 = scmp.eq.s32.totalorder %s42, 1
      %p81 = scmp.ne.s32.totalorder %s76, %s78
      %p82 = scmp.eq.s32.totalorder %s42, 0
      %p83 = por %p81, %p82
      %p84 = scmp.ne.s32.totalorder %s76, %s78
      %p85 = scmp.eq.s32.totalorder %s47, 1
      %p86 = por %p84, %p85
      %p87 = scmp.ne.s32.totalorder %s78, %s79
      %p88 = scmp.eq.s32.totalorder %s47, 0
      %p89 = por %p87, %p88
      %p90 = scmp.ne.s32.totalorder %s78, %s79
      %p91 = scmp.eq.s32.totalorder %s48, 1
      %p92 = por %p90, %p91
      %p94 = scmp.ne.s32.totalorder %s79, %s93
      %p95 = scmp.eq.s32.totalorder %s48, 0
      %p96 = por %p94, %p95
      %s98 = sadd.s32 %s97, 1
      %p101 = scmp.eq.s32.totalorder %s42, 1
      %p102 = scmp.ne.s32.totalorder %s97, %s99
      %p103 = scmp.eq.s32.totalorder %s42, 0
      %p104 = por %p102, %p103
      %p105 = scmp.ne.s32.totalorder %s97, %s99
      %p106 = scmp.eq.s32.totalorder %s47, 1
      %p107 = por %p105, %p106
      %p108 = scmp.ne.s32.totalorder %s99, %s100
      %p109 = scmp.eq.s32.totalorder %s47, 0
      %p110 = por %p108, %p109
      %p111 = scmp.ne.s32.totalorder %s99, %s100
      %p112 = scmp.eq.s32.totalorder %s48, 1
      %p113 = por %p111, %p112
      %p115 = scmp.ne.s32.totalorder %s100, %s114
      %p116 = scmp.eq.s32.totalorder %s48, 0
      %p117 = por %p115, %p116
      %s119 = sadd.s32 %s118, 1
      %p122 = scmp.eq.s32.totalorder %s42, 1
      %p123 = scmp.ne.s32.totalorder %s118, %s120
      %p124 = scmp.eq.s32.totalorder %s42, 0
      %p125 = por %p123, %p124
      %p126 = scmp.ne.s32.totalorder %s118, %s120
      %p127 = scmp.eq.s32.totalorder %s47, 1
      %p128 = por %p126, %p127
      %p129 = scmp.ne.s32.totalorder %s120, %s121
      %p130 = scmp.eq.s32.totalorder %s47, 0
      %p131 = por %p129, %p130
      %p132 = scmp.ne.s32.totalorder %s120, %s121
      %p133 = scmp.eq.s32.totalorder %s48, 1
      %p134 = por %p132, %p133
      %p136 = scmp.ne.s32.totalorder %s121, %s135
      %p137 = scmp.eq.s32.totalorder %s48, 0
      %p138 = por %p136, %p137
      %s140 = sadd.s32 %s139, 1
      %p143 = scmp.eq.s32.totalorder %s42, 1
      %p144 = scmp.ne.s32.totalorder %s139, %s141
      %p145 = scmp.eq.s32.totalorder %s42, 0
      %p146 = por %p144, %p145
      %p147 = scmp.ne.s32.totalorder %s139, %s141
      %p148 = scmp.eq.s32.totalorder %s47, 1
      %p149 = por %p147, %p148
      %p150 = scmp.ne.s32.totalorder %s141, %s142
      %p151 = scmp.eq.s32.totalorder %s47, 0
      %p152 = por %p150, %p151
      %p153 = scmp.ne.s32.totalorder %s141, %s142
      %p154 = scmp.eq.s32.totalorder %s48, 1
      %p155 = por %p153, %p154
      %p157 = scmp.ne.s32.totalorder %s142, %s156
      %p158 = scmp.eq.s32.totalorder %s48, 0
      %p159 = por %p157, %p158
      %s161 = sadd.s32 %s160, 1
      %p164 = scmp.eq.s32.totalorder %s42, 1
      %p165 = scmp.ne.s32.totalorder %s160, %s162
      %p166 = scmp.eq.s32.totalorder %s42, 0
      %p167 = por %p165, %p166
      %p168 = scmp.ne.s32.totalorder %s160, %s162
      %p169 = scmp.eq.s32.totalorder %s47, 1
      %p170 = por %p168, %p169
      %p171 = scmp.ne.s32.totalorder %s162, %s163
      %p172 = scmp.eq.s32.totalorder %s47, 0
      %p173 = por %p171, %p172
      %p174 = scmp.ne.s32.totalorder %s162, %s163
      %p175 = scmp.eq.s32.totalorder %s48, 1
      %p176 = por %p174, %p175
      %p178 = scmp.ne.s32.totalorder %s163, %s177
      %p179 = scmp.eq.s32.totalorder %s48, 0
      %p180 = por %p178, %p179
      %s182 = sadd.s32 %s181, 1
      %p185 = scmp.eq.s32.totalorder %s42, 1
      %p186 = scmp.ne.s32.totalorder %s181, %s183
      %p187 = scmp.eq.s32.totalorder %s42, 0
      %p188 = por %p186, %p187
      %p189 = scmp.ne.s32.totalorder %s181, %s183
      %p190 = scmp.eq.s32.totalorder %s47, 1
      %p191 = por %p189, %p190
      %p192 = scmp.ne.s32.totalorder %s183, %s184
      %p193 = scmp.eq.s32.totalorder %s47, 0
      %p194 = por %p192, %p193
      %p195 = scmp.ne.s32.totalorder %s183, %s184
      %p196 = scmp.eq.s32.totalorder %s48, 1
      %p197 = por %p195, %p196
      %p199 = scmp.ne.s32.totalorder %s184, %s198
      %p200 = scmp.eq.s32.totalorder %s48, 0
      %p201 = por %p199, %p200
      %s203 = sadd.s32 %s202, 1
      %p206 = scmp.eq.s32.totalorder %s42, 1
      %p207 = scmp.ne.s32.totalorder %s202, %s204
      %p208 = scmp.eq.s32.totalorder %s42, 0
      %p209 = por %p207, %p208
      %p210 = scmp.ne.s32.totalorder %s202, %s204
      %p211 = scmp.eq.s32.totalorder %s47, 1
      %p212 = por %p210, %p211
      %p213 = scmp.ne.s32.totalorder %s204, %s205
      %p214 = scmp.eq.s32.totalorder %s47, 0
      %p215 = por %p213, %p214
      %p216 = scmp.ne.s32.totalorder %s204, %s205
      %p217 = scmp.eq.s32.totalorder %s48, 1
      %p218 = por %p216, %p217
      %p220 = scmp.ne.s32.totalorder %s205, %s219
      %p221 = scmp.eq.s32.totalorder %s48, 0
      %p222 = por %p220, %p221
      %s224 = sadd.s32 %s223, 1
      %p227 = scmp.eq.s32.totalorder %s42, 1
      %p228 = scmp.ne.s32.totalorder %s223, %s225
      %p229 = scmp.eq.s32.totalorder %s42, 0
      %p230 = por %p228, %p229
      %p231 = scmp.ne.s32.totalorder %s223, %s225
      %p232 = scmp.eq.s32.totalorder %s47, 1
      %p233 = por %p231, %p232
      %p234 = scmp.ne.s32.totalorder %s225, %s226
      %p235 = scmp.eq.s32.totalorder %s47, 0
      %p236 = por %p234, %p235
      %p237 = scmp.ne.s32.totalorder %s225, %s226
      %p238 = scmp.eq.s32.totalorder %s48, 1
      %p239 = por %p237, %p238
      %p241 = scmp.ne.s32.totalorder %s226, %s240
      %p242 = scmp.eq.s32.totalorder %s48, 0
      %p243 = por %p241, %p242
      %s245 = sadd.s32 %s244, 1
      %p248 = scmp.eq.s32.totalorder %s42, 1
      %p249 = scmp.ne.s32.totalorder %s244, %s246
      %p250 = scmp.eq.s32.totalorder %s42, 0
      %p251 = por %p249, %p250
      %p252 = scmp.ne.s32.totalorder %s244, %s246
      %p253 = scmp.eq.s32.totalorder %s47, 1
      %p254 = por %p252, %p253
      %p255 = scmp.ne.s32.totalorder %s246, %s247
      %p256 = scmp.eq.s32.totalorder %s47, 0
      %p257 = por %p255, %p256
      %p258 = scmp.ne.s32.totalorder %s246, %s247
      %p259 = scmp.eq.s32.totalorder %s48, 1
      %p260 = por %p258, %p259
      %p262 = scmp.ne.s32.totalorder %s247, %s261
      %p263 = scmp.eq.s32.totalorder %s48, 0
      %p264 = por %p262, %p263
      %s266 = sadd.s32 %s265, 1
      %p269 = scmp.eq.s32.totalorder %s42, 1
      %p270 = scmp.ne.s32.totalorder %s265, %s267
      %p271 = scmp.eq.s32.totalorder %s42, 0
      %p272 = por %p270, %p271
      %p273 = scmp.ne.s32.totalorder %s265, %s267
      %p274 = scmp.eq.s32.totalorder %s47, 1
      %p275 = por %p273, %p274
      %p276 = scmp.ne.s32.totalorder %s267, %s268
      %p277 = scmp.eq.s32.totalorder %s47, 0
      %p278 = por %p276, %p277
      %p279 = scmp.ne.s32.totalorder %s267, %s268
      %p280 = scmp.eq.s32.totalorder %s48, 1
      %p281 = por %p279, %p280
      %p283 = scmp.ne.s32.totalorder %s268, %s282
      %p284 = scmp.eq.s32.totalorder %s48, 0
      %p285 = por %p283, %p284
      %s287 = sadd.s32 %s286, 1
      %p290 = scmp.eq.s32.totalorder %s42, 1
      %p291 = scmp.ne.s32.totalorder %s286, %s288
      %p292 = scmp.eq.s32.totalorder %s42, 0
      %p293 = por %p291, %p292
      %p294 = scmp.ne.s32.totalorder %s286, %s288
      %p295 = scmp.eq.s32.totalorder %s47, 1
      %p296 = por %p294, %p295
      %p297 = scmp.ne.s32.totalorder %s288, %s289
      %p298 = scmp.eq.s32.totalorder %s47, 0
      %p299 = por %p297, %p298
      %p300 = scmp.ne.s32.totalorder %s288, %s289
      %p301 = scmp.eq.s32.totalorder %s48, 1
      %p302 = por %p300, %p301
      %p304 = scmp.ne.s32.totalorder %s289, %s303
      %p305 = scmp.eq.s32.totalorder %s48, 0
      %p306 = por %p304, %p305
      %s308 = sadd.s32 %s307, 1
      %p311 = scmp.eq.s32.totalorder %s42, 1
      %p312 = scmp.ne.s32.totalorder %s307, %s309
      %p313 = scmp.eq.s32.totalorder %s42, 0
      %p314 = por %p312, %p313
      %p315 = scmp.ne.s32.totalorder %s307, %s309
      %p316 = scmp.eq.s32.totalorder %s47, 1
      %p317 = por %p315, %p316
      %p318 = scmp.ne.s32.totalorder %s309, %s310
      %p319 = scmp.eq.s32.totalorder %s47, 0
      %p320 = por %p318, %p319
      %p321 = scmp.ne.s32.totalorder %s309, %s310
      %p322 = scmp.eq.s32.totalorder %s48, 1
      %p323 = por %p321, %p322
      %p325 = scmp.ne.s32.totalorder %s310, %s324
      %p326 = scmp.eq.s32.totalorder %s48, 0
      %p327 = por %p325, %p326
      %s329 = sadd.s32 %s328, 1
      %p332 = scmp.eq.s32.totalorder %s42, 1
      %p333 = scmp.ne.s32.totalorder %s328, %s330
      %p334 = scmp.eq.s32.totalorder %s42, 0
      %p335 = por %p333, %p334
      %p336 = scmp.ne.s32.totalorder %s328, %s330
      %p337 = scmp.eq.s32.totalorder %s47, 1
      %p338 = por %p336, %p337
      %p339 = scmp.ne.s32.totalorder %s330, %s331
      %p340 = scmp.eq.s32.totalorder %s47, 0
      %p341 = por %p339, %p340
      %p342 = scmp.ne.s32.totalorder %s330, %s331
      %p343 = scmp.eq.s32.totalorder %s48, 1
      %p344 = por %p342, %p343
      %p346 = scmp.ne.s32.totalorder %s331, %s345
      %p347 = scmp.eq.s32.totalorder %s48, 0
      %p348 = por %p346, %p347
      %s350 = sadd.s32 %s349, 1
      %p353 = scmp.eq.s32.totalorder %s42, 1
      %p354 = scmp.ne.s32.totalorder %s349, %s351
      %p355 = scmp.eq.s32.totalorder %s42, 0
      %p356 = por %p354, %p355
      %p357 = scmp.ne.s32.totalorder %s349, %s351
      %p358 = scmp.eq.s32.totalorder %s47, 1
      %p359 = por %p357, %p358
      %p360 = scmp.ne.s32.totalorder %s351, %s352
      %p361 = scmp.eq.s32.totalorder %s47, 0
      %p362 = por %p360, %p361
      %p363 = scmp.ne.s32.totalorder %s351, %s352
      %p364 = scmp.eq.s32.totalorder %s48, 1
      %p365 = por %p363, %p364
      %p367 = scmp.ne.s32.totalorder %s352, %s366
      %p368 = scmp.eq.s32.totalorder %s48, 0
      %p369 = por %p367, %p368
      %s371 = sadd.s32 %s370, 1
      %p374 = scmp.eq.s32.totalorder %s42, 1
      %p375 = scmp.ne.s32.totalorder %s370, %s372
      %p376 = scmp.eq.s32.totalorder %s42, 0
      %p377 = por %p375, %p376
      %p378 = scmp.ne.s32.totalorder %s370, %s372
      %p379 = scmp.eq.s32.totalorder %s47, 1
      %p380 = por %p378, %p379
      %p381 = scmp.ne.s32.totalorder %s372, %s373
      %p382 = scmp.eq.s32.totalorder %s47, 0
      %p383 = por %p381, %p382
      %p384 = scmp.ne.s32.totalorder %s372, %s373
      %p385 = scmp.eq.s32.totalorder %s48, 1
      %p386 = por %p384, %p385
      %p388 = scmp.ne.s32.totalorder %s373, %s387
      %p389 = scmp.eq.s32.totalorder %s48, 0
      %p390 = por %p388, %p389
      %s392 = sadd.s32 %s391, 1
      %p395 = scmp.eq.s32.totalorder %s42, 1
      %p396 = scmp.ne.s32.totalorder %s391, %s393
      %p397 = scmp.eq.s32.totalorder %s42, 0
      %p398 = por %p396, %p397
      %p399 = scmp.ne.s32.totalorder %s391, %s393
      %p400 = scmp.eq.s32.totalorder %s47, 1
      %p401 = por %p399, %p400
      %p402 = scmp.ne.s32.totalorder %s393, %s394
      %p403 = scmp.eq.s32.totalorder %s47, 0
      %p404 = por %p402, %p403
      %p405 = scmp.ne.s32.totalorder %s393, %s394
      %p406 = scmp.eq.s32.totalorder %s48, 1
      %p407 = por %p405, %p406
      %p409 = scmp.ne.s32.totalorder %s394, %s408
      %p410 = scmp.eq.s32.totalorder %s48, 0
      %p411 = por %p409, %p410
      %s413 = sadd.s32 %s412, 1
      %p416 = scmp.eq.s32.totalorder %s42, 1
      %p417 = scmp.ne.s32.totalorder %s412, %s414
      %p418 = scmp.eq.s32.totalorder %s42, 0
      %p419 = por %p417, %p418
      %p420 = scmp.ne.s32.totalorder %s412, %s414
      %p421 = scmp.eq.s32.totalorder %s47, 1
      %p422 = por %p420, %p421
      %p423 = scmp.ne.s32.totalorder %s414, %s415
      %p424 = scmp.eq.s32.totalorder %s47, 0
      %p425 = por %p423, %p424
      %p426 = scmp.ne.s32.totalorder %s414, %s415
      %p427 = scmp.eq.s32.totalorder %s48, 1
      %p428 = por %p426, %p427
      %p430 = scmp.ne.s32.totalorder %s415, %s429
      %p431 = scmp.eq.s32.totalorder %s48, 0
      %p432 = por %p430, %p431
      %s434 = sadd.s32 %s433, 1
      %p437 = scmp.eq.s32.totalorder %s42, 1
      %p438 = scmp.ne.s32.totalorder %s433, %s435
      %p439 = scmp.eq.s32.totalorder %s42, 0
      %p440 = por %p438, %p439
      %p441 = scmp.ne.s32.totalorder %s433, %s435
      %p442 = scmp.eq.s32.totalorder %s47, 1
      %p443 = por %p441, %p442
      %p444 = scmp.ne.s32.totalorder %s435, %s436
      %p445 = scmp.eq.s32.totalorder %s47, 0
      %p446 = por %p444, %p445
      %p447 = scmp.ne.s32.totalorder %s435, %s436
      %p448 = scmp.eq.s32.totalorder %s48, 1
      %p449 = por %p447, %p448
      %p451 = scmp.ne.s32.totalorder %s436, %s450
      %p452 = scmp.eq.s32.totalorder %s48, 0
      %p453 = por %p451, %p452
      %s455 = sadd.s32 %s454, 1
      %p458 = scmp.eq.s32.totalorder %s42, 1
      %p459 = scmp.ne.s32.totalorder %s454, %s456
      %p460 = scmp.eq.s32.totalorder %s42, 0
      %p461 = por %p459, %p460
      %p462 = scmp.ne.s32.totalorder %s454, %s456
      %p463 = scmp.eq.s32.totalorder %s47, 1
      %p464 = por %p462, %p463
      %p465 = scmp.ne.s32.totalorder %s456, %s457
      %p466 = scmp.eq.s32.totalorder %s47, 0
      %p467 = por %p465, %p466
      %p468 = scmp.ne.s32.totalorder %s456, %s457
      %p469 = scmp.eq.s32.totalorder %s48, 1
      %p470 = por %p468, %p469
      %p472 = scmp.ne.s32.totalorder %s457, %s471
      %p473 = scmp.eq.s32.totalorder %s48, 0
      %p474 = por %p472, %p473
      %s476 = sadd.s32 %s475, 1
      %p479 = scmp.eq.s32.totalorder %s42, 1
      %p480 = scmp.ne.s32.totalorder %s475, %s477
      %p481 = scmp.eq.s32.totalorder %s42, 0
      %p482 = por %p480, %p481
      %p483 = scmp.ne.s32.totalorder %s475, %s477
      %p484 = scmp.eq.s32.totalorder %s47, 1
      %p485 = por %p483, %p484
      %p486 = scmp.ne.s32.totalorder %s477, %s478
      %p487 = scmp.eq.s32.totalorder %s47, 0
      %p488 = por %p486, %p487
      %p489 = scmp.ne.s32.totalorder %s477, %s478
      %p490 = scmp.eq.s32.totalorder %s48, 1
      %p491 = por %p489, %p490
      %p493 = scmp.ne.s32.totalorder %s478, %s492
      %p494 = scmp.eq.s32.totalorder %s48, 0
      %p495 = por %p493, %p494
      %s497 = sadd.s32 %s496, 1
      %p500 = scmp.eq.s32.totalorder %s42, 1
      %p501 = scmp.ne.s32.totalorder %s496, %s498
      %p502 = scmp.eq.s32.totalorder %s42, 0
      %p503 = por %p501, %p502
      %p504 = scmp.ne.s32.totalorder %s496, %s498
      %p505 = scmp.eq.s32.totalorder %s47, 1
      %p506 = por %p504, %p505
      %p507 = scmp.ne.s32.totalorder %s498, %s499
      %p508 = scmp.eq.s32.totalorder %s47, 0
      %p509 = por %p507, %p508
      %p510 = scmp.ne.s32.totalorder %s498, %s499
      %p511 = scmp.eq.s32.totalorder %s48, 1
      %p512 = por %p510, %p511
      %p514 = scmp.ne.s32.totalorder %s499, %s513
      %p515 = scmp.eq.s32.totalorder %s48, 0
      %p516 = por %p514, %p515
      %s518 = sadd.s32 %s517, 1
      %p521 = scmp.eq.s32.totalorder %s42, 1
      %p522 = scmp.ne.s32.totalorder %s517, %s519
      %p523 = scmp.eq.s32.totalorder %s42, 0
      %p524 = por %p522, %p523
      %p525 = scmp.ne.s32.totalorder %s517, %s519
      %p526 = scmp.eq.s32.totalorder %s47, 1
      %p527 = por %p525, %p526
      %p528 = scmp.ne.s32.totalorder %s519, %s520
      %p529 = scmp.eq.s32.totalorder %s47, 0
      %p530 = por %p528, %p529
      %p531 = scmp.ne.s32.totalorder %s519, %s520
      %p532 = scmp.eq.s32.totalorder %s48, 1
      %p533 = por %p531, %p532
      %p535 = scmp.ne.s32.totalorder %s520, %s534
      %p536 = scmp.eq.s32.totalorder %s48, 0
      %p537 = por %p535, %p536
      %s539 = sadd.s32 %s538, 1
      %p542 = scmp.eq.s32.totalorder %s42, 1
      %p543 = scmp.ne.s32.totalorder %s538, %s540
      %p544 = scmp.eq.s32.totalorder %s42, 0
      %p545 = por %p543, %p544
      %p546 = scmp.ne.s32.totalorder %s538, %s540
      %p547 = scmp.eq.s32.totalorder %s47, 1
      %p548 = por %p546, %p547
      %p549 = scmp.ne.s32.totalorder %s540, %s541
      %p550 = scmp.eq.s32.totalorder %s47, 0
      %p551 = por %p549, %p550
      %p552 = scmp.ne.s32.totalorder %s540, %s541
      %p553 = scmp.eq.s32.totalorder %s48, 1
      %p554 = por %p552, %p553
      %p556 = scmp.ne.s32.totalorder %s541, %s555
      %p557 = scmp.eq.s32.totalorder %s48, 0
      %p558 = por %p556, %p557
      %s560 = sadd.s32 %s559, 1
      %p563 = scmp.eq.s32.totalorder %s42, 1
      %p564 = scmp.ne.s32.totalorder %s559, %s561
      %p565 = scmp.eq.s32.totalorder %s42, 0
      %p566 = por %p564, %p565
      %p567 = scmp.ne.s32.totalorder %s559, %s561
      %p568 = scmp.eq.s32.totalorder %s47, 1
      %p569 = por %p567, %p568
      %p570 = scmp.ne.s32.totalorder %s561, %s562
      %p571 = scmp.eq.s32.totalorder %s47, 0
      %p572 = por %p570, %p571
      %p573 = scmp.ne.s32.totalorder %s561, %s562
      %p574 = scmp.eq.s32.totalorder %s48, 1
      %p575 = por %p573, %p574
      %p577 = scmp.ne.s32.totalorder %s562, %s576
      %p578 = scmp.eq.s32.totalorder %s48, 0
      %p579 = por %p577, %p578
      %s580 = ssub.s32 %s42, %s49
      %p581 = scmp.eq.s32.totalorder %s580, 0
      %s583 = sadd.s32 %s582, 1
      %s584 = scalar_select %p581, %s582, %s583
      %p587 = pneg %p581
      %p588 = scmp.eq.s32.totalorder %s42, 1
      %p589 = por %p587, %p588
      %p590 = scmp.ne.s32.totalorder %s582, %s585
      %p591 = scmp.eq.s32.totalorder %s42, 0
      %p592 = por %p590, %p591
      %p593 = scmp.ne.s32.totalorder %s582, %s585
      %p594 = scmp.eq.s32.totalorder %s47, 1
      %p595 = por %p593, %p594
      %p596 = scmp.ne.s32.totalorder %s585, %s586
      %p597 = scmp.eq.s32.totalorder %s47, 0
      %p598 = por %p596, %p597
      %p599 = scmp.ne.s32.totalorder %s585, %s586
      %p600 = scmp.eq.s32.totalorder %s48, 1
      %p601 = por %p599, %p600
      %p603 = scmp.ne.s32.totalorder %s586, %s602
      %p604 = scmp.eq.s32.totalorder %s48, 0
      %p605 = por %p603, %p604
      %p606 = scmp.le.s32.totalorder 1, %s42
      %p607 = scmp.lt.s32.totalorder %s42, 3
      %p608 = pnand %p606, %p607
      %p609 = pneg %p608
      // Predicated region
      $region9: #{ldp_block_forward.1} parent=5 // pred_check
        _
      $region10: #{ldp_block_forward.1} parent=5 // pred_check_branch
        %611 = sbr.rel (%p608) target = $region12
      $region11: #{ldp_block_forward.1} parent=5 // pred_region
        %s612 = ssub.s32 %s42, 1
        // Predicated region
        $region13: #{ldp_block_forward.1} parent=11 // pred_check
          %p613 = pneg %p89
        $region14: #{ldp_block_forward.1} parent=11 // pred_check_branch
          %615 = sbr.rel (%p613) target = $region16
        $region15: #{ldp_block_forward.1} parent=11 // pred_region
          _
        $region16: #{ldp_block_forward.1} parent=11 // pred_fallthru
          _
        // Predicated region
        $region17: #{ldp_block_forward.1} parent=11 // pred_check
          %p616 = pneg %p110
        $region18: #{ldp_block_forward.1} parent=11 // pred_check_branch
          %618 = sbr.rel (%p616) target = $region20
        $region19: #{ldp_block_forward.1} parent=11 // pred_region
          %s620 = ssub.s32 16, 16
          %621 = vsyncadd [#allocation8], %s620
          %s623 = sshll.u32 [#allocation7], 4
          %s624 = int_to_ptr.vmem [resolvable:$true] %s623
          %626 = dma.hbm_to_vmem [thread:$0]  %s2, 16, %s624, [#allocation8]
        $region20: #{ldp_block_forward.1} parent=11 // pred_fallthru
          _
        // Predicated region
        $region21: #{ldp_block_forward.1} parent=11 // pred_check
          %p627 = pneg %p131
        $region22: #{ldp_block_forward.1} parent=11 // pred_check_branch
          %629 = sbr.rel (%p627) target = $region24
        $region23: #{ldp_block_forward.1} parent=11 // pred_region
          _
        $region24: #{ldp_block_forward.1} parent=11 // pred_fallthru
          _
        // Predicated region
        $region25: #{ldp_block_forward.1} parent=11 // pred_check
          %p630 = pneg %p152
        $region26: #{ldp_block_forward.1} parent=11 // pred_check_branch
          %632 = sbr.rel (%p630) target = $region28
        $region27: #{ldp_block_forward.1} parent=11 // pred_region
          %s634 = ssub.s32 16, 16
          %635 = vsyncadd [#allocation8], %s634
          %s637 = sshll.u32 [#allocation9], 4
          %s638 = int_to_ptr.vmem [resolvable:$true] %s637
          %640 = dma.hbm_to_vmem [thread:$0]  %s4, 16, %s638, [#allocation8]
        $region28: #{ldp_block_forward.1} parent=11 // pred_fallthru
          _
        // Predicated region
        $region29: #{ldp_block_forward.1} parent=11 // pred_check
          %p641 = pneg %p173
        $region30: #{ldp_block_forward.1} parent=11 // pred_check_branch
          %643 = sbr.rel (%p641) target = $region32
        $region31: #{ldp_block_forward.1} parent=11 // pred_region
          _
        $region32: #{ldp_block_forward.1} parent=11 // pred_fallthru
          _
        // Predicated region
        $region33: #{ldp_block_forward.1} parent=11 // pred_check
          %p644 = pneg %p194
        $region34: #{ldp_block_forward.1} parent=11 // pred_check_branch
          %646 = sbr.rel (%p644) target = $region36
        $region35: #{ldp_block_forward.1} parent=11 // pred_region
          %s648 = ssub.s32 16, 16
          %649 = vsyncadd [#allocation11], %s648
          %s651 = sshll.u32 [#allocation10], 4
          %s652 = int_to_ptr.vmem [resolvable:$true] %s651
          %654 = dma.hbm_to_vmem [thread:$0]  %s6, 16, %s652, [#allocation11]
        $region36: #{ldp_block_forward.1} parent=11 // pred_fallthru
          _
        // Predicated region
        $region37: #{ldp_block_forward.1} parent=11 // pred_check
          %p655 = pneg %p215
        $region38: #{ldp_block_forward.1} parent=11 // pred_check_branch
          %657 = sbr.rel (%p655) target = $region40
        $region39: #{ldp_block_forward.1} parent=11 // pred_region
          %s659 = ssub.s32 16, 16
          %660 = vsyncadd [#allocation11], %s659
          %s662 = sshll.u32 [#allocation12], 4
          %s663 = int_to_ptr.vmem [resolvable:$true] %s662
          %665 = dma.hbm_to_vmem [thread:$0]  %s7, 16, %s663, [#allocation11]
        $region40: #{ldp_block_forward.1} parent=11 // pred_fallthru
          _
        // Predicated region
        $region41: #{ldp_block_forward.1} parent=11 // pred_check
          %p666 = pneg %p236
        $region42: #{ldp_block_forward.1} parent=11 // pred_check_branch
          %668 = sbr.rel (%p666) target = $region44
        $region43: #{ldp_block_forward.1} parent=11 // pred_region
          _
        $region44: #{ldp_block_forward.1} parent=11 // pred_fallthru
          _
        // Predicated region
        $region45: #{ldp_block_forward.1} parent=11 // pred_check
          %p669 = pneg %p257
        $region46: #{ldp_block_forward.1} parent=11 // pred_check_branch
          %671 = sbr.rel (%p669) target = $region48
        $region47: #{ldp_block_forward.1} parent=11 // pred_region
          _
        $region48: #{ldp_block_forward.1} parent=11 // pred_fallthru
          _
        // Predicated region
        $region49: #{ldp_block_forward.1} parent=11 // pred_check
          %p672 = pneg %p278
        $region50: #{ldp_block_forward.1} parent=11 // pred_check_branch
          %674 = sbr.rel (%p672) target = $region52
        $region51: #{ldp_block_forward.1} parent=11 // pred_region
          %s676 = ssub.s32 128, 128
          %677 = vsyncadd [#allocation14], %s676
          %s679 = sshll.u32 [#allocation13], 4
          %s680 = int_to_ptr.vmem [resolvable:$true] %s679
          %682 = dma.hbm_to_vmem [thread:$0]  %s10, 128, %s680, [#allocation14]
        $region52: #{ldp_block_forward.1} parent=11 // pred_fallthru
          _
        // Predicated region
        $region53: #{ldp_block_forward.1} parent=11 // pred_check
          %p683 = pneg %p299
        $region54: #{ldp_block_forward.1} parent=11 // pred_check_branch
          %685 = sbr.rel (%p683) target = $region56
        $region55: #{ldp_block_forward.1} parent=11 // pred_region
          _
        $region56: #{ldp_block_forward.1} parent=11 // pred_fallthru
          _
        // Predicated region
        $region57: #{ldp_block_forward.1} parent=11 // pred_check
          %p686 = pneg %p320
        $region58: #{ldp_block_forward.1} parent=11 // pred_check_branch
          %688 = sbr.rel (%p686) target = $region60
        $region59: #{ldp_block_forward.1} parent=11 // pred_region
          _
        $region60: #{ldp_block_forward.1} parent=11 // pred_fallthru
          _
        // Predicated region
        $region61: #{ldp_block_forward.1} parent=11 // pred_check
          %p689 = pneg %p341
        $region62: #{ldp_block_forward.1} parent=11 // pred_check_branch
          %691 = sbr.rel (%p689) target = $region64
        $region63: #{ldp_block_forward.1} parent=11 // pred_region
          %s693 = ssub.s32 16, 16
          %694 = vsyncadd [#allocation14], %s693
          %s696 = sshll.u32 [#allocation15], 4
          %s697 = int_to_ptr.vmem [resolvable:$true] %s696
          %699 = dma.hbm_to_vmem [thread:$0]  %s13, 16, %s697, [#allocation14]
        $region64: #{ldp_block_forward.1} parent=11 // pred_fallthru
          _
        // Predicated region
        $region65: #{ldp_block_forward.1} parent=11 // pred_check
          %p700 = pneg %p362
        $region66: #{ldp_block_forward.1} parent=11 // pred_check_branch
          %702 = sbr.rel (%p700) target = $region68
        $region67: #{ldp_block_forward.1} parent=11 // pred_region
          %s704 = ssub.s32 16, 16
          %705 = vsyncadd [#allocation17], %s704
          %s707 = sshll.u32 [#allocation16], 4
          %s708 = int_to_ptr.vmem [resolvable:$true] %s707
          %710 = dma.hbm_to_vmem [thread:$0]  %s14, 16, %s708, [#allocation17]
        $region68: #{ldp_block_forward.1} parent=11 // pred_fallthru
          _
        // Predicated region
        $region69: #{ldp_block_forward.1} parent=11 // pred_check
          %p711 = pneg %p383
        $region70: #{ldp_block_forward.1} parent=11 // pred_check_branch
          %713 = sbr.rel (%p711) target = $region72
        $region71: #{ldp_block_forward.1} parent=11 // pred_region
          _
        $region72: #{ldp_block_forward.1} parent=11 // pred_fallthru
          _
        // Predicated region
        $region73: #{ldp_block_forward.1} parent=11 // pred_check
          %p714 = pneg %p404
        $region74: #{ldp_block_forward.1} parent=11 // pred_check_branch
          %716 = sbr.rel (%p714) target = $region76
        $region75: #{ldp_block_forward.1} parent=11 // pred_region
          _
        $region76: #{ldp_block_forward.1} parent=11 // pred_fallthru
          _
        // Predicated region
        $region77: #{ldp_block_forward.1} parent=11 // pred_check
          %p717 = pneg %p425
        $region78: #{ldp_block_forward.1} parent=11 // pred_check_branch
          %719 = sbr.rel (%p717) target = $region80
        $region79: #{ldp_block_forward.1} parent=11 // pred_region
          %s721 = ssub.s32 16, 16
          %722 = vsyncadd [#allocation17], %s721
          %s724 = sshll.u32 [#allocation18], 4
          %s725 = int_to_ptr.vmem [resolvable:$true] %s724
          %727 = dma.hbm_to_vmem [thread:$0]  %s17, 16, %s725, [#allocation17]
        $region80: #{ldp_block_forward.1} parent=11 // pred_fallthru
          _
        // Predicated region
        $region81: #{ldp_block_forward.1} parent=11 // pred_check
          %p728 = pneg %p446
        $region82: #{ldp_block_forward.1} parent=11 // pred_check_branch
          %730 = sbr.rel (%p728) target = $region84
        $region83: #{ldp_block_forward.1} parent=11 // pred_region
          _
        $region84: #{ldp_block_forward.1} parent=11 // pred_fallthru
          _
        // Predicated region
        $region85: #{ldp_block_forward.1} parent=11 // pred_check
          %p731 = pneg %p467
        $region86: #{ldp_block_forward.1} parent=11 // pred_check_branch
          %733 = sbr.rel (%p731) target = $region88
        $region87: #{ldp_block_forward.1} parent=11 // pred_region
          _
        $region88: #{ldp_block_forward.1} parent=11 // pred_fallthru
          _
        // Predicated region
        $region89: #{ldp_block_forward.1} parent=11 // pred_check
          %p734 = pneg %p488
        $region90: #{ldp_block_forward.1} parent=11 // pred_check_branch
          %736 = sbr.rel (%p734) target = $region92
        $region91: #{ldp_block_forward.1} parent=11 // pred_region
          _
        $region92: #{ldp_block_forward.1} parent=11 // pred_fallthru
          _
        // Predicated region
        $region93: #{ldp_block_forward.1} parent=11 // pred_check
          %p737 = pneg %p509
        $region94: #{ldp_block_forward.1} parent=11 // pred_check_branch
          %739 = sbr.rel (%p737) target = $region96
        $region95: #{ldp_block_forward.1} parent=11 // pred_region
          _
        $region96: #{ldp_block_forward.1} parent=11 // pred_fallthru
          _
        // Predicated region
        $region97: #{ldp_block_forward.1} parent=11 // pred_check
          %p740 = pneg %p530
        $region98: #{ldp_block_forward.1} parent=11 // pred_check_branch
          %742 = sbr.rel (%p740) target = $region100
        $region99: #{ldp_block_forward.1} parent=11 // pred_region
          _
        $region100: #{ldp_block_forward.1} parent=11 // pred_fallthru
          _
        // Predicated region
        $region101: #{ldp_block_forward.1} parent=11 // pred_check
          %p743 = pneg %p551
        $region102: #{ldp_block_forward.1} parent=11 // pred_check_branch
          %745 = sbr.rel (%p743) target = $region104
        $region103: #{ldp_block_forward.1} parent=11 // pred_region
          _
        $region104: #{ldp_block_forward.1} parent=11 // pred_fallthru
          _
        // Predicated region
        $region105: #{ldp_block_forward.1} parent=11 // pred_check
          %p746 = pneg %p572
        $region106: #{ldp_block_forward.1} parent=11 // pred_check_branch
          %748 = sbr.rel (%p746) target = $region108
        $region107: #{ldp_block_forward.1} parent=11 // pred_region
          %s750 = ssub.s32 16, 16
          %751 = vsyncadd [#allocation20], %s750
          %s753 = sshll.u32 [#allocation19], 4
          %s754 = int_to_ptr.vmem [resolvable:$true] %s753
          %756 = dma.hbm_to_vmem [thread:$0]  %s24, 16, %s754, [#allocation20]
        $region108: #{ldp_block_forward.1} parent=11 // pred_fallthru
          _
      $region12: #{ldp_block_forward.1} parent=5 // pred_fallthru
        _
      %p757 = scmp.lt.s32.totalorder %s42, 2
      // Predicated region
      $region109: #{ldp_block_forward.1} parent=5 // pred_check
        %p758 = pneg %p757
      $region110: #{ldp_block_forward.1} parent=5 // pred_check_branch
        %760 = sbr.rel (%p758) target = $region112
      $region111: #{ldp_block_forward.1} parent=5 // pred_region
        // Predicated region
        $region113: #{ldp_block_forward.1} parent=111 // pred_check
          %p761 = pneg %p62
        $region114: #{ldp_block_forward.1} parent=111 // pred_check_branch
          %763 = sbr.rel (%p761) target = $region116
        $region115: #{ldp_block_forward.1} parent=111 // pred_region
          %s764 = sand.u32 %s52, 1
          %s765 = scalar_lea.sflag [#allocation5], %s764
          %s766 = sand.u32 %s52, 1
          %s767 = smul.addr %s766, 128
          %s768 = scalar_lea.vmem [#allocation4], %s767
          %s769 = smul.u32 2, %s42
          %s771 = ssub.s32 2048, 2048
          %772 = vsyncadd %s765, %s771
          %s773 = smul.addr %s769, 8
          %s774 = smul.addr %s773, 128
          %s775 = scalar_lea.hbm %s0, %s774
          %s776 = sshll.u32 %s768, 4
          %s777 = int_to_ptr.vmem [resolvable:$true] %s776
          %782 = dma.hbm_to_vmem [thread:$0]  %s775, 2048, %s777, %s765, 128, 128, 8
        $region116: #{ldp_block_forward.1} parent=111 // pred_fallthru
          _
      $region112: #{ldp_block_forward.1} parent=5 // pred_fallthru
        _
      %p783 = scmp.le.s32.totalorder 1, %s42
      %p784 = scmp.lt.s32.totalorder %s42, 3
      %p785 = pnand %p783, %p784
      %p786 = pneg %p785
      // Predicated region
      $region117: #{ldp_block_forward.1} parent=5 // pred_check
        _
      $region118: #{ldp_block_forward.1} parent=5 // pred_check_branch
        %788 = sbr.rel (%p785) target = $region120
      $region119: #{ldp_block_forward.1} parent=5 // pred_region
        %s789 = ssub.s32 %s42, 1
        %s790 = sand.u32 %s55, 1
        %s791 = scalar_lea.sflag [#allocation5], %s790
        %s792 = sand.u32 %s55, 1
        %s793 = smul.addr %s792, 128
        %s794 = scalar_lea.vmem [#allocation4], %s793
        // Predicated region
        $region121: #{ldp_block_forward.1} parent=119 // pred_check
          %p795 = pneg %p68
        $region122: #{ldp_block_forward.1} parent=119 // pred_check_branch
          %797 = sbr.rel (%p795) target = $region124
        $region123: #{ldp_block_forward.1} parent=119 // pred_region
          %798 = dma.done %s791, 2048
        $region124: #{ldp_block_forward.1} parent=119 // pred_fallthru
          _
        // Predicated region
        $region125: #{ldp_block_forward.1} parent=119 // pred_check
          %p799 = pneg %p110
        $region126: #{ldp_block_forward.1} parent=119 // pred_check_branch
          %801 = sbr.rel (%p799) target = $region128
        $region127: #{ldp_block_forward.1} parent=119 // pred_region
          %802 = dma.done [#allocation8], 16
        $region128: #{ldp_block_forward.1} parent=119 // pred_fallthru
          _
        // Predicated region
        $region129: #{ldp_block_forward.1} parent=119 // pred_check
          %p803 = pneg %p152
        $region130: #{ldp_block_forward.1} parent=119 // pred_check_branch
          %805 = sbr.rel (%p803) target = $region132
        $region131: #{ldp_block_forward.1} parent=119 // pred_region
          %806 = dma.done [#allocation8], 16
        $region132: #{ldp_block_forward.1} parent=119 // pred_fallthru
          _
        // Predicated region
        $region133: #{ldp_block_forward.1} parent=119 // pred_check
          %p807 = pneg %p194
        $region134: #{ldp_block_forward.1} parent=119 // pred_check_branch
          %809 = sbr.rel (%p807) target = $region136
        $region135: #{ldp_block_forward.1} parent=119 // pred_region
          %810 = dma.done [#allocation11], 16
        $region136: #{ldp_block_forward.1} parent=119 // pred_fallthru
          _
        // Predicated region
        $region137: #{ldp_block_forward.1} parent=119 // pred_check
          %p811 = pneg %p215
        $region138: #{ldp_block_forward.1} parent=119 // pred_check_branch
          %813 = sbr.rel (%p811) target = $region140
        $region139: #{ldp_block_forward.1} parent=119 // pred_region
          %814 = dma.done [#allocation11], 16
        $region140: #{ldp_block_forward.1} parent=119 // pred_fallthru
          _
        // Predicated region
        $region141: #{ldp_block_forward.1} parent=119 // pred_check
          %p815 = pneg %p278
        $region142: #{ldp_block_forward.1} parent=119 // pred_check_branch
          %817 = sbr.rel (%p815) target = $region144
        $region143: #{ldp_block_forward.1} parent=119 // pred_region
          %818 = dma.done [#allocation14], 128
        $region144: #{ldp_block_forward.1} parent=119 // pred_fallthru
          _
        // Predicated region
        $region145: #{ldp_block_forward.1} parent=119 // pred_check
          %p819 = pneg %p341
        $region146: #{ldp_block_forward.1} parent=119 // pred_check_branch
          %821 = sbr.rel (%p819) target = $region148
        $region147: #{ldp_block_forward.1} parent=119 // pred_region
          %822 = dma.done [#allocation14], 16
        $region148: #{ldp_block_forward.1} parent=119 // pred_fallthru
          _
        // Predicated region
        $region149: #{ldp_block_forward.1} parent=119 // pred_check
          %p823 = pneg %p362
        $region150: #{ldp_block_forward.1} parent=119 // pred_check_branch
          %825 = sbr.rel (%p823) target = $region152
        $region151: #{ldp_block_forward.1} parent=119 // pred_region
          %826 = dma.done [#allocation17], 16
        $region152: #{ldp_block_forward.1} parent=119 // pred_fallthru
          _
        // Predicated region
        $region153: #{ldp_block_forward.1} parent=119 // pred_check
          %p827 = pneg %p425
        $region154: #{ldp_block_forward.1} parent=119 // pred_check_branch
          %829 = sbr.rel (%p827) target = $region156
        $region155: #{ldp_block_forward.1} parent=119 // pred_region
          %830 = dma.done [#allocation17], 16
        $region156: #{ldp_block_forward.1} parent=119 // pred_fallthru
          _
        // Predicated region
        $region157: #{ldp_block_forward.1} parent=119 // pred_check
          %p831 = pneg %p572
        $region158: #{ldp_block_forward.1} parent=119 // pred_check_branch
          %833 = sbr.rel (%p831) target = $region160
        $region159: #{ldp_block_forward.1} parent=119 // pred_region
          %834 = dma.done [#allocation20], 16
        $region160: #{ldp_block_forward.1} parent=119 // pred_fallthru
          _
        %s835 = sand.u32 %s55, 1
        %s836 = scalar_lea.sflag [#allocation5], %s835
        %s837 = sand.u32 %s55, 1
        %s838 = smul.addr %s837, 128
        %s839 = scalar_lea.vmem [#allocation4], %s838
        %p840 = pneg %p68
        %p841 = pneg %p65
        %p842 = pneg %p89
        %p843 = pneg %p86
        %p844 = pneg %p110
        %p845 = pneg %p107
        %p846 = pneg %p131
        %p847 = pneg %p128
        %p848 = pneg %p152
        %p849 = pneg %p149
        %p850 = pneg %p173
        %p851 = pneg %p170
        %p852 = pneg %p194
        %p853 = pneg %p191
        %p854 = pneg %p215
        %p855 = pneg %p212
        %p856 = pneg %p236
        %p857 = pneg %p233
        %p858 = pneg %p257
        %p859 = pneg %p254
        %p860 = pneg %p278
        %p861 = pneg %p275
        %p862 = pneg %p299
        %p863 = pneg %p296
        %p864 = pneg %p320
        %p865 = pneg %p317
        %p866 = pneg %p341
        %p867 = pneg %p338
        %p868 = pneg %p362
        %p869 = pneg %p359
        %p870 = pneg %p383
        %p871 = pneg %p380
        %p872 = pneg %p404
        %p873 = pneg %p401
        %p874 = pneg %p425
        %p875 = pneg %p422
        %p876 = pneg %p446
        %p877 = pneg %p443
        %p878 = pneg %p467
        %p879 = pneg %p464
        %p880 = pneg %p488
        %p881 = pneg %p485
        %p882 = pneg %p509
        %p883 = pneg %p506
        %p884 = pneg %p530
        %p885 = pneg %p527
        %p886 = pneg %p551
        %p887 = pneg %p548
        %p888 = pneg %p572
        %p889 = pneg %p569
        %p890 = pneg %p598
        %p891 = pneg %p595
        %s892 = sand.u32 %s585, 1
        %s893 = scalar_lea.sflag [#allocation6], %s892
        %s894 = sand.u32 %s585, 1
        %s895 = smul.addr %s894, 32
        %s896 = scalar_lea.vmem [#allocation21], %s895
        %s897 = smul.u32 2, %s47
        %s898 = smul.u32 2, %s47
        %vm900 = vcmask 261120
        %901 = vst.msk [vmem:[#allocation2] sm:$0xff] %vm900, 0.0
        %vm902 = vcmask 254976
        %903 = vst.msk [vmem:[#allocation2 + $0x8] sm:$0x3] %vm902, 0.0
        %s904 = scalar_lea.vmem [#allocation2], 144
        %905 = vst.msk [vmem:[%s904] sm:$0xff] %vm900, 0.0
        %906 = vst.msk [vmem:[%s904 + $0x8] sm:$0x3] %vm902, 0.0
        %vm907 = vcmask 253952
        %908 = vst.msk [vmem:[#allocation2] sm:$0x1] %vm907, 0.0
        %909 = vst.msk [vmem:[#allocation2 + $0x10] sm:$0x1] %vm907, 0.0
        %910 = vst.msk [vmem:[#allocation2 + $0x20] sm:$0x1] %vm907, 0.0
        %911 = vst.msk [vmem:[#allocation2 + $0x30] sm:$0x1] %vm907, 0.0
        %912 = vst.msk [vmem:[#allocation2 + $0x40] sm:$0x1] %vm907, 0.0
        %913 = vst.msk [vmem:[#allocation2 + $0x50] sm:$0x1] %vm907, 0.0
        %914 = vst.msk [vmem:[#allocation2 + $0x60] sm:$0x1] %vm907, 0.0
        %915 = vst.msk [vmem:[#allocation2 + $0x70] sm:$0x1] %vm907, 0.0
        %916 = vst.msk [vmem:[#allocation2 + $0x80] sm:$0x1] %vm907, 0.0
        %917 = vst.msk [vmem:[#allocation2 + $0x90] sm:$0x1] %vm907, 0.0
        %918 = vst.msk [vmem:[#allocation2 + $0x9] sm:$0x1] %vm907, 0.0
        %919 = vst.msk [vmem:[#allocation2 + $0x19] sm:$0x1] %vm907, 0.0
        %920 = vst.msk [vmem:[#allocation2 + $0x29] sm:$0x1] %vm907, 0.0
        %921 = vst.msk [vmem:[#allocation2 + $0x39] sm:$0x1] %vm907, 0.0
        %922 = vst.msk [vmem:[#allocation2 + $0x49] sm:$0x1] %vm907, 0.0
        %923 = vst.msk [vmem:[#allocation2 + $0x59] sm:$0x1] %vm907, 0.0
        %924 = vst.msk [vmem:[#allocation2 + $0x69] sm:$0x1] %vm907, 0.0
        %925 = vst.msk [vmem:[#allocation2 + $0x79] sm:$0x1] %vm907, 0.0
        %926 = vst.msk [vmem:[#allocation2 + $0x89] sm:$0x1] %vm907, 0.0
        %927 = vst.msk [vmem:[#allocation2 + $0x99] sm:$0x1] %vm907, 0.0
        %v928 = vld [vmem:[%s794] sm:$0xff]
        %v929 = vld [vmem:[%s794 + $0x8] sm:$0xff]
        %v930 = vld [vmem:[%s794 + $0x10] sm:$0xff]
        %v931 = vld [vmem:[%s794 + $0x18] sm:$0xff]
        %v932 = vld [vmem:[%s794 + $0x20] sm:$0xff]
        %v933 = vld [vmem:[%s794 + $0x28] sm:$0xff]
        %v934 = vld [vmem:[%s794 + $0x30] sm:$0xff]
        %v935 = vld [vmem:[%s794 + $0x38] sm:$0xff]
        %v936 = vld [vmem:[%s794 + $0x40] sm:$0xff]
        %v937 = vld [vmem:[%s794 + $0x48] sm:$0xff]
        %v938 = vld [vmem:[%s794 + $0x50] sm:$0xff]
        %v939 = vld [vmem:[%s794 + $0x58] sm:$0xff]
        %v940 = vld [vmem:[%s794 + $0x60] sm:$0xff]
        %v941 = vld [vmem:[%s794 + $0x68] sm:$0xff]
        %v942 = vld [vmem:[%s794 + $0x70] sm:$0xff]
        %v943 = vld [vmem:[%s794 + $0x78] sm:$0xff]
        %v944 = vld [vmem:[%s1] sm:$0xf]
        %v945 = vld [vmem:[%s1 + $0x4] sm:$0xf]
        %v946 = vld [vmem:[%s1 + $0x8] sm:$0xf]
        %v947 = vld [vmem:[%s1 + $0xc] sm:$0xf]
        %v948 = vld [vmem:[%s1 + $0x10] sm:$0xf]
        %v949 = vld [vmem:[%s1 + $0x14] sm:$0xf]
        %v950 = vld [vmem:[%s1 + $0x18] sm:$0xf]
        %v951 = vld [vmem:[%s1 + $0x1c] sm:$0xf]
        %v952 = vpack.c.bf16 %v929, %v928
        %v953 = vpack.c.bf16 %v931, %v930
        %v954 = vpack.c.bf16 %v933, %v932
        %v955 = vpack.c.bf16 %v935, %v934
        %v956 = vpack.c.bf16 %v937, %v936
        %v957 = vpack.c.bf16 %v939, %v938
        %v958 = vpack.c.bf16 %v941, %v940
        %v959 = vpack.c.bf16 %v943, %v942
        %v960 = vld [vmem:[#allocation7] sm:$0x1]
        %v962 = vlaneseq
        %v963 = vshrl.u32 %v962, 7
        %v964 = vsub.s32 0, %v963
        %v965 = vrot.slane %v960, %v964
        %v975 = vunpack.c.l.b16 %v944
        %v976 = vunpack.c.l.b16 %v945
        %v977 = vunpack.c.l.b16 %v946
        %v978 = vunpack.c.l.b16 %v947
        %v979 = vunpack.c.l.b16 %v948
        %v980 = vunpack.c.l.b16 %v949
        %v981 = vunpack.c.l.b16 %v950
        %v982 = vunpack.c.l.b16 %v951
        %v983 = vpack.c.b16 %v976, %v975
        %v984 = vpack.c.b16 %v978, %v977
        %v985 = vpack.c.b16 %v980, %v979
        %v986 = vpack.c.b16 %v982, %v981
        %vm991 = vcmask 523264
        %v993 = vsel %vm991, %v952, 0
        %v996 = vsel %vm991, %v953, 0
        %v999 = vsel %vm991, %v954, 0
        %v1002 = vsel %vm991, %v955, 0
        %v1005 = vsel %vm991, %v956, 0
        %v1008 = vsel %vm991, %v957, 0
        %v1011 = vsel %vm991, %v958, 0
        %v1014 = vsel %vm991, %v959, 0
        %1016 = vmatprep.subr.bf16.mxu0 0
        %1017 = vmatpush1.bf16.msra.mxu0 %v983
        %1018 = vmatprep.subr.bf16.mxu0 0
        %1019 = vmatpush1.bf16.msra.mxu0 %v984
        %1020 = vmatprep.subr.bf16.mxu0 0
        %1021 = vmatpush1.bf16.msra.mxu0 %v985
        %1022 = vmatprep.subr.bf16.mxu0 0
        %1023 = vmatpush1.bf16.msra.mxu0 %v986
        %1024 = vmatprep.subr.bf16.mxu0 0
        %1025 = vmatpush1.bf16.msra.mxu0 0
        %1026 = vmatprep.subr.bf16.mxu0 0
        %1027 = vmatpush1.bf16.msra.mxu0 0
        %1028 = vmatprep.subr.bf16.mxu0 0
        %1029 = vmatpush1.bf16.msra.mxu0 0
        %1030 = vmatprep.subr.bf16.mxu0 0
        %1031 = vmatpush1.bf16.msra.mxu0 0
        %1032 = vmatprep.subr.bf16.mxu0 0
        %1033 = vmatpush1.bf16.msra.mxu0 0
        %1034 = vmatprep.subr.bf16.mxu0 0
        %1035 = vmatpush1.bf16.msra.mxu0 0
        %1036 = vmatprep.subr.bf16.mxu0 0
        %1037 = vmatpush1.bf16.msra.mxu0 0
        %1038 = vmatprep.subr.bf16.mxu0 0
        %1039 = vmatpush1.bf16.msra.mxu0 0
        %1040 = vmatprep.subr.bf16.mxu0 0
        %1041 = vmatpush1.bf16.msra.mxu0 0
        %1042 = vmatprep.subr.bf16.mxu0 0
        %1043 = vmatpush1.bf16.msra.mxu0 0
        %1044 = vmatprep.subr.bf16.mxu0 0
        %1045 = vmatpush1.bf16.msra.mxu0 0
        %1046 = vmatprep.subr.bf16.mxu0 0
        %1047 = vmatpush1.bf16.msra.mxu0 0
        %1048 = vmatprep.mubr.bf16.mxu0 0
        %1049 = vmatmul.mubr.bf16.gmra.mrb[0].mxu0 %v993
        %v1050 = vpop.f32.mrb[0].mxu0
        %v1051 = vadd.f32 %v965, %v1050
        %v1052 = vpop.f32.mrb[0].mxu0
        %v1053 = vpop.f32.mrb[0].mxu0
        %v1054 = vadd.f32 %v965, %v1053
        %v1055 = vpop.f32.mrb[0].mxu0
        %1056 = vmatprep.mubr.bf16.mxu0 0
        %1057 = vmatmul.mubr.bf16.gmra.mrb[0].mxu0 %v996
        %v1058 = vpop.f32.mrb[0].mxu0
        %v1059 = vadd.f32 %v965, %v1058
        %v1060 = vpop.f32.mrb[0].mxu0
        %v1061 = vpop.f32.mrb[0].mxu0
        %v1062 = vadd.f32 %v965, %v1061
        %v1063 = vpop.f32.mrb[0].mxu0
        %1064 = vmatprep.mubr.bf16.mxu0 0
        %1065 = vmatmul.mubr.bf16.gmra.mrb[0].mxu0 %v999
        %v1066 = vpop.f32.mrb[0].mxu0
        %v1067 = vadd.f32 %v965, %v1066
        %v1068 = vpop.f32.mrb[0].mxu0
        %v1069 = vpop.f32.mrb[0].mxu0
        %v1070 = vadd.f32 %v965, %v1069
        %v1071 = vpop.f32.mrb[0].mxu0
        %1072 = vmatprep.mubr.bf16.mxu0 0
        %1073 = vmatmul.mubr.bf16.gmra.mrb[0].mxu0 %v1002
        %v1074 = vpop.f32.mrb[0].mxu0
        %v1075 = vadd.f32 %v965, %v1074
        %v1076 = vpop.f32.mrb[0].mxu0
        %v1077 = vpop.f32.mrb[0].mxu0
        %v1078 = vadd.f32 %v965, %v1077
        %v1079 = vpop.f32.mrb[0].mxu0
        %1080 = vmatprep.mubr.bf16.mxu0 0
        %1081 = vmatmul.mubr.bf16.gmra.mrb[0].mxu0 %v1005
        %v1082 = vpop.f32.mrb[0].mxu0
        %v1083 = vadd.f32 %v965, %v1082
        %v1084 = vpop.f32.mrb[0].mxu0
        %v1085 = vpop.f32.mrb[0].mxu0
        %v1086 = vadd.f32 %v965, %v1085
        %v1087 = vpop.f32.mrb[0].mxu0
        %1088 = vmatprep.mubr.bf16.mxu0 0
        %1089 = vmatmul.mubr.bf16.gmra.mrb[0].mxu0 %v1008
        %v1090 = vpop.f32.mrb[0].mxu0
        %v1091 = vadd.f32 %v965, %v1090
        %v1092 = vpop.f32.mrb[0].mxu0
        %v1093 = vpop.f32.mrb[0].mxu0
        %v1094 = vadd.f32 %v965, %v1093
        %v1095 = vpop.f32.mrb[0].mxu0
        %1096 = vmatprep.mubr.bf16.mxu0 0
        %1097 = vmatmul.mubr.bf16.gmra.mrb[0].mxu0 %v1011
        %v1098 = vpop.f32.mrb[0].mxu0
        %v1099 = vadd.f32 %v965, %v1098
        %v1100 = vpop.f32.mrb[0].mxu0
        %v1101 = vpop.f32.mrb[0].mxu0
        %v1102 = vadd.f32 %v965, %v1101
        %v1103 = vpop.f32.mrb[0].mxu0
        %1104 = vmatprep.mubr.bf16.mxu0 0
        %1105 = vmatmul.mubr.bf16.gmra.mrb[0].mxu0 %v1014
        %v1106 = vpop.f32.mrb[0].mxu0
        %v1107 = vadd.f32 %v965, %v1106
        %v1108 = vpop.f32.mrb[0].mxu0
        %v1109 = vpop.f32.mrb[0].mxu0
        %v1110 = vadd.f32 %v965, %v1109
        %v1111 = vpop.f32.mrb[0].mxu0
        %1112 = vdwg.mxu0
        %v1113 = vmul.f32 %v1051, 0.5
        %v1114 = vmul.f32 %v1054, 0.5
        %v1115 = vmul.f32 %v1059, 0.5
        %v1116 = vmul.f32 %v1062, 0.5
        %v1117 = vmul.f32 %v1067, 0.5
        %v1118 = vmul.f32 %v1070, 0.5
        %v1119 = vmul.f32 %v1075, 0.5
        %v1120 = vmul.f32 %v1078, 0.5
        %v1121 = vmul.f32 %v1083, 0.5
        %v1122 = vmul.f32 %v1086, 0.5
        %v1123 = vmul.f32 %v1091, 0.5
        %v1124 = vmul.f32 %v1094, 0.5
        %v1125 = vmul.f32 %v1099, 0.5
        %v1126 = vmul.f32 %v1102, 0.5
        %v1127 = vmul.f32 %v1107, 0.5
        %v1128 = vmul.f32 %v1110, 0.5
        %v1129 = vmul.f32 %v1051, 0.70710677
        %v1130 = vmul.f32 %v1054, 0.70710677
        %v1131 = vmul.f32 %v1059, 0.70710677
        %v1132 = vmul.f32 %v1062, 0.70710677
        %v1133 = vmul.f32 %v1067, 0.70710677
        %v1134 = vmul.f32 %v1070, 0.70710677
        %v1135 = vmul.f32 %v1075, 0.70710677
        %v1136 = vmul.f32 %v1078, 0.70710677
        %v1137 = vmul.f32 %v1083, 0.70710677
        %v1138 = vmul.f32 %v1086, 0.70710677
        %v1139 = vmul.f32 %v1091, 0.70710677
        %v1140 = vmul.f32 %v1094, 0.70710677
        %v1141 = vmul.f32 %v1099, 0.70710677
        %v1142 = vmul.f32 %v1102, 0.70710677
        %v1143 = vmul.f32 %v1107, 0.70710677
        %v1144 = vmul.f32 %v1110, 0.70710677
        %vm1145 = vcmp.ge.f32.partialorder %v1129, 0.0
        %vm1146 = vcmp.ge.f32.partialorder %v1130, 0.0
        %vm1147 = vcmp.ge.f32.partialorder %v1131, 0.0
        %vm1148 = vcmp.ge.f32.partialorder %v1132, 0.0
        %vm1149 = vcmp.ge.f32.partialorder %v1133, 0.0
        %vm1150 = vcmp.ge.f32.partialorder %v1134, 0.0
        %vm1151 = vcmp.ge.f32.partialorder %v1135, 0.0
        %vm1152 = vcmp.ge.f32.partialorder %v1136, 0.0
        %vm1153 = vcmp.ge.f32.partialorder %v1137, 0.0
        %vm1154 = vcmp.ge.f32.partialorder %v1138, 0.0
        %vm1155 = vcmp.ge.f32.partialorder %v1139, 0.0
        %vm1156 = vcmp.ge.f32.partialorder %v1140, 0.0
        %vm1157 = vcmp.ge.f32.partialorder %v1141, 0.0
        %vm1158 = vcmp.ge.f32.partialorder %v1142, 0.0
        %vm1159 = vcmp.ge.f32.partialorder %v1143, 0.0
        %vm1160 = vcmp.ge.f32.partialorder %v1144, 0.0
        %v1161 = vsel %vm1145, 1.0, -1.0
        %v1162 = vsel %vm1146, 1.0, -1.0
        %v1163 = vsel %vm1147, 1.0, -1.0
        %v1164 = vsel %vm1148, 1.0, -1.0
        %v1165 = vsel %vm1149, 1.0, -1.0
        %v1166 = vsel %vm1150, 1.0, -1.0
        %v1167 = vsel %vm1151, 1.0, -1.0
        %v1168 = vsel %vm1152, 1.0, -1.0
        %v1169 = vsel %vm1153, 1.0, -1.0
        %v1170 = vsel %vm1154, 1.0, -1.0
        %v1171 = vsel %vm1155, 1.0, -1.0
        %v1172 = vsel %vm1156, 1.0, -1.0
        %v1173 = vsel %vm1157, 1.0, -1.0
        %v1174 = vsel %vm1158, 1.0, -1.0
        %v1175 = vsel %vm1159, 1.0, -1.0
        %v1176 = vsel %vm1160, 1.0, -1.0
        %v1177 = vand.u32 2147483647, %v1129
        %v1178 = vand.u32 2147483647, %v1130
        %v1179 = vand.u32 2147483647, %v1131
        %v1180 = vand.u32 2147483647, %v1132
        %v1181 = vand.u32 2147483647, %v1133
        %v1182 = vand.u32 2147483647, %v1134
        %v1183 = vand.u32 2147483647, %v1135
        %v1184 = vand.u32 2147483647, %v1136
        %v1185 = vand.u32 2147483647, %v1137
        %v1186 = vand.u32 2147483647, %v1138
        %v1187 = vand.u32 2147483647, %v1139
        %v1188 = vand.u32 2147483647, %v1140
        %v1189 = vand.u32 2147483647, %v1141
        %v1190 = vand.u32 2147483647, %v1142
        %v1191 = vand.u32 2147483647, %v1143
        %v1192 = vand.u32 2147483647, %v1144
        %v1193 = vmul.f32 %v1177, 0.3275911
        %v1194 = vmul.f32 %v1178, 0.3275911
        %v1195 = vmul.f32 %v1179, 0.3275911
        %v1196 = vmul.f32 %v1180, 0.3275911
        %v1197 = vmul.f32 %v1181, 0.3275911
        %v1198 = vmul.f32 %v1182, 0.3275911
        %v1199 = vmul.f32 %v1183, 0.3275911
        %v1200 = vmul.f32 %v1184, 0.3275911
        %v1201 = vmul.f32 %v1185, 0.3275911
        %v1202 = vmul.f32 %v1186, 0.3275911
        %v1203 = vmul.f32 %v1187, 0.3275911
        %v1204 = vmul.f32 %v1188, 0.3275911
        %v1205 = vmul.f32 %v1189, 0.3275911
        %v1206 = vmul.f32 %v1190, 0.3275911
        %v1207 = vmul.f32 %v1191, 0.3275911
        %v1208 = vmul.f32 %v1192, 0.3275911
        %v1209 = vadd.f32 %v1193, 1.0
        %v1210 = vadd.f32 %v1194, 1.0
        %v1211 = vadd.f32 %v1195, 1.0
        %v1212 = vadd.f32 %v1196, 1.0
        %v1213 = vadd.f32 %v1197, 1.0
        %v1214 = vadd.f32 %v1198, 1.0
        %v1215 = vadd.f32 %v1199, 1.0
        %v1216 = vadd.f32 %v1200, 1.0
        %v1217 = vadd.f32 %v1201, 1.0
        %v1218 = vadd.f32 %v1202, 1.0
        %v1219 = vadd.f32 %v1203, 1.0
        %v1220 = vadd.f32 %v1204, 1.0
        %v1221 = vadd.f32 %v1205, 1.0
        %v1222 = vadd.f32 %v1206, 1.0
        %v1223 = vadd.f32 %v1207, 1.0
        %v1224 = vadd.f32 %v1208, 1.0
        %v1225 = vrcp.pop %v1209
        %v1226 = vmul.f32 1.0, %v1225
        %v1227 = vrcp.pop %v1210
        %v1228 = vmul.f32 1.0, %v1227
        %v1229 = vrcp.pop %v1211
        %v1230 = vmul.f32 1.0, %v1229
        %v1231 = vrcp.pop %v1212
        %v1232 = vmul.f32 1.0, %v1231
        %v1233 = vrcp.pop %v1213
        %v1234 = vmul.f32 1.0, %v1233
        %v1235 = vrcp.pop %v1214
        %v1236 = vmul.f32 1.0, %v1235
        %v1237 = vrcp.pop %v1215
        %v1238 = vmul.f32 1.0, %v1237
        %v1239 = vrcp.pop %v1216
        %v1240 = vmul.f32 1.0, %v1239
        %v1241 = vrcp.pop %v1217
        %v1242 = vmul.f32 1.0, %v1241
        %v1243 = vrcp.pop %v1218
        %v1244 = vmul.f32 1.0, %v1243
        %v1245 = vrcp.pop %v1219
        %v1246 = vmul.f32 1.0, %v1245
        %v1247 = vrcp.pop %v1220
        %v1248 = vmul.f32 1.0, %v1247
        %v1249 = vrcp.pop %v1221
        %v1250 = vmul.f32 1.0, %v1249
        %v1251 = vrcp.pop %v1222
        %v1252 = vmul.f32 1.0, %v1251
        %v1253 = vrcp.pop %v1223
        %v1254 = vmul.f32 1.0, %v1253
        %v1255 = vrcp.pop %v1224
        %v1256 = vmul.f32 1.0, %v1255
        %v1257 = vmul.f32 %v1226, 1.0614054
        %v1258 = vmul.f32 %v1228, 1.0614054
        %v1259 = vmul.f32 %v1230, 1.0614054
        %v1260 = vmul.f32 %v1232, 1.0614054
        %v1261 = vmul.f32 %v1234, 1.0614054
        %v1262 = vmul.f32 %v1236, 1.0614054
        %v1263 = vmul.f32 %v1238, 1.0614054
        %v1264 = vmul.f32 %v1240, 1.0614054
        %v1265 = vmul.f32 %v1242, 1.0614054
        %v1266 = vmul.f32 %v1244, 1.0614054
        %v1267 = vmul.f32 %v1246, 1.0614054
        %v1268 = vmul.f32 %v1248, 1.0614054
        %v1269 = vmul.f32 %v1250, 1.0614054
        %v1270 = vmul.f32 %v1252, 1.0614054
        %v1271 = vmul.f32 %v1254, 1.0614054
        %v1272 = vmul.f32 %v1256, 1.0614054
        %v1273 = vadd.f32 %v1257, -1.4531521
        %v1274 = vadd.f32 %v1258, -1.4531521
        %v1275 = vadd.f32 %v1259, -1.4531521
        %v1276 = vadd.f32 %v1260, -1.4531521
        %v1277 = vadd.f32 %v1261, -1.4531521
        %v1278 = vadd.f32 %v1262, -1.4531521
        %v1279 = vadd.f32 %v1263, -1.4531521
        %v1280 = vadd.f32 %v1264, -1.4531521
        %v1281 = vadd.f32 %v1265, -1.4531521
        %v1282 = vadd.f32 %v1266, -1.4531521
        %v1283 = vadd.f32 %v1267, -1.4531521
        %v1284 = vadd.f32 %v1268, -1.4531521
        %v1285 = vadd.f32 %v1269, -1.4531521
        %v1286 = vadd.f32 %v1270, -1.4531521
        %v1287 = vadd.f32 %v1271, -1.4531521
        %v1288 = vadd.f32 %v1272, -1.4531521
        %v1289 = vmul.f32 %v1273, %v1226
        %v1290 = vmul.f32 %v1274, %v1228
        %v1291 = vmul.f32 %v1275, %v1230
        %v1292 = vmul.f32 %v1276, %v1232
        %v1293 = vmul.f32 %v1277, %v1234
        %v1294 = vmul.f32 %v1278, %v1236
        %v1295 = vmul.f32 %v1279, %v1238
        %v1296 = vmul.f32 %v1280, %v1240
        %v1297 = vmul.f32 %v1281, %v1242
        %v1298 = vmul.f32 %v1282, %v1244
        %v1299 = vmul.f32 %v1283, %v1246
        %v1300 = vmul.f32 %v1284, %v1248
        %v1301 = vmul.f32 %v1285, %v1250
        %v1302 = vmul.f32 %v1286, %v1252
        %v1303 = vmul.f32 %v1287, %v1254
        %v1304 = vmul.f32 %v1288, %v1256
        %v1305 = vadd.f32 %v1289, 1.4214138
        %v1306 = vadd.f32 %v1290, 1.4214138
        %v1307 = vadd.f32 %v1291, 1.4214138
        %v1308 = vadd.f32 %v1292, 1.4214138
        %v1309 = vadd.f32 %v1293, 1.4214138
        %v1310 = vadd.f32 %v1294, 1.4214138
        %v1311 = vadd.f32 %v1295, 1.4214138
        %v1312 = vadd.f32 %v1296, 1.4214138
        %v1313 = vadd.f32 %v1297, 1.4214138
        %v1314 = vadd.f32 %v1298, 1.4214138
        %v1315 = vadd.f32 %v1299, 1.4214138
        %v1316 = vadd.f32 %v1300, 1.4214138
        %v1317 = vadd.f32 %v1301, 1.4214138
        %v1318 = vadd.f32 %v1302, 1.4214138
        %v1319 = vadd.f32 %v1303, 1.4214138
        %v1320 = vadd.f32 %v1304, 1.4214138
        %v1321 = vmul.f32 %v1305, %v1226
        %v1322 = vmul.f32 %v1306, %v1228
        %v1323 = vmul.f32 %v1307, %v1230
        %v1324 = vmul.f32 %v1308, %v1232
        %v1325 = vmul.f32 %v1309, %v1234
        %v1326 = vmul.f32 %v1310, %v1236
        %v1327 = vmul.f32 %v1311, %v1238
        %v1328 = vmul.f32 %v1312, %v1240
        %v1329 = vmul.f32 %v1313, %v1242
        %v1330 = vmul.f32 %v1314, %v1244
        %v1331 = vmul.f32 %v1315, %v1246
        %v1332 = vmul.f32 %v1316, %v1248
        %v1333 = vmul.f32 %v1317, %v1250
        %v1334 = vmul.f32 %v1318, %v1252
        %v1335 = vmul.f32 %v1319, %v1254
        %v1336 = vmul.f32 %v1320, %v1256
        %v1337 = vadd.f32 %v1321, -0.28449672
        %v1338 = vadd.f32 %v1322, -0.28449672
        %v1339 = vadd.f32 %v1323, -0.28449672
        %v1340 = vadd.f32 %v1324, -0.28449672
        %v1341 = vadd.f32 %v1325, -0.28449672
        %v1342 = vadd.f32 %v1326, -0.28449672
        %v1343 = vadd.f32 %v1327, -0.28449672
        %v1344 = vadd.f32 %v1328, -0.28449672
        %v1345 = vadd.f32 %v1329, -0.28449672
        %v1346 = vadd.f32 %v1330, -0.28449672
        %v1347 = vadd.f32 %v1331, -0.28449672
        %v1348 = vadd.f32 %v1332, -0.28449672
        %v1349 = vadd.f32 %v1333, -0.28449672
        %v1350 = vadd.f32 %v1334, -0.28449672
        %v1351 = vadd.f32 %v1335, -0.28449672
        %v1352 = vadd.f32 %v1336, -0.28449672
        %v1353 = vmul.f32 %v1337, %v1226
        %v1354 = vmul.f32 %v1338, %v1228
        %v1355 = vmul.f32 %v1339, %v1230
        %v1356 = vmul.f32 %v1340, %v1232
        %v1357 = vmul.f32 %v1341, %v1234
        %v1358 = vmul.f32 %v1342, %v1236
        %v1359 = vmul.f32 %v1343, %v1238
        %v1360 = vmul.f32 %v1344, %v1240
        %v1361 = vmul.f32 %v1345, %v1242
        %v1362 = vmul.f32 %v1346, %v1244
        %v1363 = vmul.f32 %v1347, %v1246
        %v1364 = vmul.f32 %v1348, %v1248
        %v1365 = vmul.f32 %v1349, %v1250
        %v1366 = vmul.f32 %v1350, %v1252
        %v1367 = vmul.f32 %v1351, %v1254
        %v1368 = vmul.f32 %v1352, %v1256
        %v1369 = vadd.f32 %v1353, 0.2548296
        %v1370 = vadd.f32 %v1354, 0.2548296
        %v1371 = vadd.f32 %v1355, 0.2548296
        %v1372 = vadd.f32 %v1356, 0.2548296
        %v1373 = vadd.f32 %v1357, 0.2548296
        %v1374 = vadd.f32 %v1358, 0.2548296
        %v1375 = vadd.f32 %v1359, 0.2548296
        %v1376 = vadd.f32 %v1360, 0.2548296
        %v1377 = vadd.f32 %v1361, 0.2548296
        %v1378 = vadd.f32 %v1362, 0.2548296
        %v1379 = vadd.f32 %v1363, 0.2548296
        %v1380 = vadd.f32 %v1364, 0.2548296
        %v1381 = vadd.f32 %v1365, 0.2548296
        %v1382 = vadd.f32 %v1366, 0.2548296
        %v1383 = vadd.f32 %v1367, 0.2548296
        %v1384 = vadd.f32 %v1368, 0.2548296
        %v1385 = vmul.f32 %v1369, %v1226
        %v1386 = vmul.f32 %v1370, %v1228
        %v1387 = vmul.f32 %v1371, %v1230
        %v1388 = vmul.f32 %v1372, %v1232
        %v1389 = vmul.f32 %v1373, %v1234
        %v1390 = vmul.f32 %v1374, %v1236
        %v1391 = vmul.f32 %v1375, %v1238
        %v1392 = vmul.f32 %v1376, %v1240
        %v1393 = vmul.f32 %v1377, %v1242
        %v1394 = vmul.f32 %v1378, %v1244
        %v1395 = vmul.f32 %v1379, %v1246
        %v1396 = vmul.f32 %v1380, %v1248
        %v1397 = vmul.f32 %v1381, %v1250
        %v1398 = vmul.f32 %v1382, %v1252
        %v1399 = vmul.f32 %v1383, %v1254
        %v1400 = vmul.f32 %v1384, %v1256
        %v1401 = vsub.f32 0.0, %v1177
        %v1402 = vsub.f32 0.0, %v1178
        %v1403 = vsub.f32 0.0, %v1179
        %v1404 = vsub.f32 0.0, %v1180
        %v1405 = vsub.f32 0.0, %v1181
        %v1406 = vsub.f32 0.0, %v1182
        %v1407 = vsub.f32 0.0, %v1183
        %v1408 = vsub.f32 0.0, %v1184
        %v1409 = vsub.f32 0.0, %v1185
        %v1410 = vsub.f32 0.0, %v1186
        %v1411 = vsub.f32 0.0, %v1187
        %v1412 = vsub.f32 0.0, %v1188
        %v1413 = vsub.f32 0.0, %v1189
        %v1414 = vsub.f32 0.0, %v1190
        %v1415 = vsub.f32 0.0, %v1191
        %v1416 = vsub.f32 0.0, %v1192
        %v1417 = vmul.f32 %v1401, %v1177
        %v1418 = vmul.f32 %v1402, %v1178
        %v1419 = vmul.f32 %v1403, %v1179
        %v1420 = vmul.f32 %v1404, %v1180
        %v1421 = vmul.f32 %v1405, %v1181
        %v1422 = vmul.f32 %v1406, %v1182
        %v1423 = vmul.f32 %v1407, %v1183
        %v1424 = vmul.f32 %v1408, %v1184
        %v1425 = vmul.f32 %v1409, %v1185
        %v1426 = vmul.f32 %v1410, %v1186
        %v1427 = vmul.f32 %v1411, %v1187
        %v1428 = vmul.f32 %v1412, %v1188
        %v1429 = vmul.f32 %v1413, %v1189
        %v1430 = vmul.f32 %v1414, %v1190
        %v1431 = vmul.f32 %v1415, %v1191
        %v1432 = vmul.f32 %v1416, %v1192
        %v1433 = vmul.f32 %v1417, 1.442695
        %v1434 = vpow.pop %v1433
        %v1435 = vmul.f32 %v1418, 1.442695
        %v1436 = vpow.pop %v1435
        %v1437 = vmul.f32 %v1419, 1.442695
        %v1438 = vpow.pop %v1437
        %v1439 = vmul.f32 %v1420, 1.442695
        %v1440 = vpow.pop %v1439
        %v1441 = vmul.f32 %v1421, 1.442695
        %v1442 = vpow.pop %v1441
        %v1443 = vmul.f32 %v1422, 1.442695
        %v1444 = vpow.pop %v1443
        %v1445 = vmul.f32 %v1423, 1.442695
        %v1446 = vpow.pop %v1445
        %v1447 = vmul.f32 %v1424, 1.442695
        %v1448 = vpow.pop %v1447
        %v1449 = vmul.f32 %v1425, 1.442695
        %v1450 = vpow.pop %v1449
        %v1451 = vmul.f32 %v1426, 1.442695
        %v1452 = vpow.pop %v1451
        %v1453 = vmul.f32 %v1427, 1.442695
        %v1454 = vpow.pop %v1453
        %v1455 = vmul.f32 %v1428, 1.442695
        %v1456 = vpow.pop %v1455
        %v1457 = vmul.f32 %v1429, 1.442695
        %v1458 = vpow.pop %v1457
        %v1459 = vmul.f32 %v1430, 1.442695
        %v1460 = vpow.pop %v1459
        %v1461 = vmul.f32 %v1431, 1.442695
        %v1462 = vpow.pop %v1461
        %v1463 = vmul.f32 %v1432, 1.442695
        %v1464 = vpow.pop %v1463
        %v1465 = vmul.f32 %v1385, %v1434
        %v1466 = vmul.f32 %v1386, %v1436
        %v1467 = vmul.f32 %v1387, %v1438
        %v1468 = vmul.f32 %v1388, %v1440
        %v1469 = vmul.f32 %v1389, %v1442
        %v1470 = vmul.f32 %v1390, %v1444
        %v1471 = vmul.f32 %v1391, %v1446
        %v1472 = vmul.f32 %v1392, %v1448
        %v1473 = vmul.f32 %v1393, %v1450
        %v1474 = vmul.f32 %v1394, %v1452
        %v1475 = vmul.f32 %v1395, %v1454
        %v1476 = vmul.f32 %v1396, %v1456
        %v1477 = vmul.f32 %v1397, %v1458
        %v1478 = vmul.f32 %v1398, %v1460
        %v1479 = vmul.f32 %v1399, %v1462
        %v1480 = vmul.f32 %v1400, %v1464
        %v1481 = vsub.f32 1.0, %v1465
        %v1482 = vsub.f32 1.0, %v1466
        %v1483 = vsub.f32 1.0, %v1467
        %v1484 = vsub.f32 1.0, %v1468
        %v1485 = vsub.f32 1.0, %v1469
        %v1486 = vsub.f32 1.0, %v1470
        %v1487 = vsub.f32 1.0, %v1471
        %v1488 = vsub.f32 1.0, %v1472
        %v1489 = vsub.f32 1.0, %v1473
        %v1490 = vsub.f32 1.0, %v1474
        %v1491 = vsub.f32 1.0, %v1475
        %v1492 = vsub.f32 1.0, %v1476
        %v1493 = vsub.f32 1.0, %v1477
        %v1494 = vsub.f32 1.0, %v1478
        %v1495 = vsub.f32 1.0, %v1479
        %v1496 = vsub.f32 1.0, %v1480
        %v1497 = vmul.f32 %v1161, %v1481
        %v1498 = vmul.f32 %v1162, %v1482
        %v1499 = vmul.f32 %v1163, %v1483
        %v1500 = vmul.f32 %v1164, %v1484
        %v1501 = vmul.f32 %v1165, %v1485
        %v1502 = vmul.f32 %v1166, %v1486
        %v1503 = vmul.f32 %v1167, %v1487
        %v1504 = vmul.f32 %v1168, %v1488
        %v1505 = vmul.f32 %v1169, %v1489
        %v1506 = vmul.f32 %v1170, %v1490
        %v1507 = vmul.f32 %v1171, %v1491
        %v1508 = vmul.f32 %v1172, %v1492
        %v1509 = vmul.f32 %v1173, %v1493
        %v1510 = vmul.f32 %v1174, %v1494
        %v1511 = vmul.f32 %v1175, %v1495
        %v1512 = vmul.f32 %v1176, %v1496
        %v1513 = vadd.f32 %v1497, 1.0
        %v1514 = vadd.f32 %v1498, 1.0
        %v1515 = vadd.f32 %v1499, 1.0
        %v1516 = vadd.f32 %v1500, 1.0
        %v1517 = vadd.f32 %v1501, 1.0
        %v1518 = vadd.f32 %v1502, 1.0
        %v1519 = vadd.f32 %v1503, 1.0
        %v1520 = vadd.f32 %v1504, 1.0
        %v1521 = vadd.f32 %v1505, 1.0
        %v1522 = vadd.f32 %v1506, 1.0
        %v1523 = vadd.f32 %v1507, 1.0
        %v1524 = vadd.f32 %v1508, 1.0
        %v1525 = vadd.f32 %v1509, 1.0
        %v1526 = vadd.f32 %v1510, 1.0
        %v1527 = vadd.f32 %v1511, 1.0
        %v1528 = vadd.f32 %v1512, 1.0
        %v1529 = vmul.f32 %v1113, %v1513
        %v1530 = vmul.f32 %v1114, %v1514
        %v1531 = vmul.f32 %v1115, %v1515
        %v1532 = vmul.f32 %v1116, %v1516
        %v1533 = vmul.f32 %v1117, %v1517
        %v1534 = vmul.f32 %v1118, %v1518
        %v1535 = vmul.f32 %v1119, %v1519
        %v1536 = vmul.f32 %v1120, %v1520
        %v1537 = vmul.f32 %v1121, %v1521
        %v1538 = vmul.f32 %v1122, %v1522
        %v1539 = vmul.f32 %v1123, %v1523
        %v1540 = vmul.f32 %v1124, %v1524
        %v1541 = vmul.f32 %v1125, %v1525
        %v1542 = vmul.f32 %v1126, %v1526
        %v1543 = vmul.f32 %v1127, %v1527
        %v1544 = vmul.f32 %v1128, %v1528
        %v1545 = vld [vmem:[%s3] sm:$0xf]
        %v1546 = vld [vmem:[%s3 + $0x4] sm:$0xf]
        %v1547 = vld [vmem:[%s3 + $0x8] sm:$0xf]
        %v1548 = vld [vmem:[%s3 + $0xc] sm:$0xf]
        %v1549 = vpack.c.bf16 %v1530, %v1529
        %v1550 = vpack.c.bf16 %v1532, %v1531
        %v1551 = vpack.c.bf16 %v1534, %v1533
        %v1552 = vpack.c.bf16 %v1536, %v1535
        %v1553 = vpack.c.bf16 %v1538, %v1537
        %v1554 = vpack.c.bf16 %v1540, %v1539
        %v1555 = vpack.c.bf16 %v1542, %v1541
        %v1556 = vpack.c.bf16 %v1544, %v1543
        %v1557 = vld [vmem:[#allocation9] sm:$0x1]
        %v1559 = vlaneseq
        %v1560 = vshrl.u32 %v1559, 7
        %v1561 = vsub.s32 0, %v1560
        %v1562 = vrot.slane %v1557, %v1561
        %v1568 = vunpack.c.l.b16 %v1545
        %v1569 = vunpack.c.l.b16 %v1546
        %v1570 = vunpack.c.l.b16 %v1547
        %v1571 = vunpack.c.l.b16 %v1548
        %v1572 = vpack.c.b16 %v1569, %v1568
        %v1573 = vpack.c.b16 %v1571, %v1570
        %v1577 = vsel %vm900, %v1549, 0
        %v1580 = vsel %vm900, %v1550, 0
        %v1583 = vsel %vm900, %v1551, 0
        %v1586 = vsel %vm900, %v1552, 0
        %v1589 = vsel %vm900, %v1553, 0
        %v1592 = vsel %vm900, %v1554, 0
        %v1595 = vsel %vm900, %v1555, 0
        %v1598 = vsel %vm900, %v1556, 0
        %1600 = vmatprep.subr.bf16.mxu0 0
        %1601 = vmatpush1.bf16.msra.mxu0 %v1572
        %1602 = vmatprep.subr.bf16.mxu0 0
        %1603 = vmatpush1.bf16.msra.mxu0 %v1573
        %1604 = vmatprep.subr.bf16.mxu0 0
        %1605 = vmatpush1.bf16.msra.mxu0 0
        %1606 = vmatprep.subr.bf16.mxu0 0
        %1607 = vmatpush1.bf16.msra.mxu0 0
        %1608 = vmatprep.subr.bf16.mxu0 0
        %1609 = vmatpush1.bf16.msra.mxu0 0
        %1610 = vmatprep.subr.bf16.mxu0 0
        %1611 = vmatpush1.bf16.msra.mxu0 0
        %1612 = vmatprep.subr.bf16.mxu0 0
        %1613 = vmatpush1.bf16.msra.mxu0 0
        %1614 = vmatprep.subr.bf16.mxu0 0
        %1615 = vmatpush1.bf16.msra.mxu0 0
        %1616 = vmatprep.subr.bf16.mxu0 0
        %1617 = vmatpush1.bf16.msra.mxu0 0
        %1618 = vmatprep.subr.bf16.mxu0 0
        %1619 = vmatpush1.bf16.msra.mxu0 0
        %1620 = vmatprep.subr.bf16.mxu0 0
        %1621 = vmatpush1.bf16.msra.mxu0 0
        %1622 = vmatprep.subr.bf16.mxu0 0
        %1623 = vmatpush1.bf16.msra.mxu0 0
        %1624 = vmatprep.subr.bf16.mxu0 0
        %1625 = vmatpush1.bf16.msra.mxu0 0
        %1626 = vmatprep.subr.bf16.mxu0 0
        %1627 = vmatpush1.bf16.msra.mxu0 0
        %1628 = vmatprep.subr.bf16.mxu0 0
        %1629 = vmatpush1.bf16.msra.mxu0 0
        %1630 = vmatprep.subr.bf16.mxu0 0
        %1631 = vmatpush1.bf16.msra.mxu0 0
        %1632 = vmatprep.mubr.bf16.mxu0 0
        %1633 = vmatmul.mubr.bf16.gmra.mrb[0].mxu0 %v1577
        %v1634 = vpop.f32.mrb[0].mxu0
        %v1635 = vadd.f32 %v1562, %v1634
        %v1636 = vpop.f32.mrb[0].mxu0
        %v1637 = vpop.f32.mrb[0].mxu0
        %v1638 = vadd.f32 %v1562, %v1637
        %v1639 = vpop.f32.mrb[0].mxu0
        %1640 = vmatprep.mubr.bf16.mxu0 0
        %1641 = vmatmul.mubr.bf16.gmra.mrb[0].mxu0 %v1580
        %v1642 = vpop.f32.mrb[0].mxu0
        %v1643 = vadd.f32 %v1562, %v1642
        %v1644 = vpop.f32.mrb[0].mxu0
        %v1645 = vpop.f32.mrb[0].mxu0
        %v1646 = vadd.f32 %v1562, %v1645
        %v1647 = vpop.f32.mrb[0].mxu0
        %1648 = vmatprep.mubr.bf16.mxu0 0
        %1649 = vmatmul.mubr.bf16.gmra.mrb[0].mxu0 %v1583
        %v1650 = vpop.f32.mrb[0].mxu0
        %v1651 = vadd.f32 %v1562, %v1650
        %v1652 = vpop.f32.mrb[0].mxu0
        %v1653 = vpop.f32.mrb[0].mxu0
        %v1654 = vadd.f32 %v1562, %v1653
        %v1655 = vpop.f32.mrb[0].mxu0
        %1656 = vmatprep.mubr.bf16.mxu0 0
        %1657 = vmatmul.mubr.bf16.gmra.mrb[0].mxu0 %v1586
        %v1658 = vpop.f32.mrb[0].mxu0
        %v1659 = vadd.f32 %v1562, %v1658
        %v1660 = vpop.f32.mrb[0].mxu0
        %v1661 = vpop.f32.mrb[0].mxu0
        %v1662 = vadd.f32 %v1562, %v1661
        %v1663 = vpop.f32.mrb[0].mxu0
        %1664 = vmatprep.mubr.bf16.mxu0 0
        %1665 = vmatmul.mubr.bf16.gmra.mrb[0].mxu0 %v1589
        %v1666 = vpop.f32.mrb[0].mxu0
        %v1667 = vadd.f32 %v1562, %v1666
        %v1668 = vpop.f32.mrb[0].mxu0
        %v1669 = vpop.f32.mrb[0].mxu0
        %v1670 = vadd.f32 %v1562, %v1669
        %v1671 = vpop.f32.mrb[0].mxu0
        %1672 = vmatprep.mubr.bf16.mxu0 0
        %1673 = vmatmul.mubr.bf16.gmra.mrb[0].mxu0 %v1592
        %v1674 = vpop.f32.mrb[0].mxu0
        %v1675 = vadd.f32 %v1562, %v1674
        %v1676 = vpop.f32.mrb[0].mxu0
        %v1677 = vpop.f32.mrb[0].mxu0
        %v1678 = vadd.f32 %v1562, %v1677
        %v1679 = vpop.f32.mrb[0].mxu0
        %1680 = vmatprep.mubr.bf16.mxu0 0
        %1681 = vmatmul.mubr.bf16.gmra.mrb[0].mxu0 %v1595
        %v1682 = vpop.f32.mrb[0].mxu0
        %v1683 = vadd.f32 %v1562, %v1682
        %v1684 = vpop.f32.mrb[0].mxu0
        %v1685 = vpop.f32.mrb[0].mxu0
        %v1686 = vadd.f32 %v1562, %v1685
        %v1687 = vpop.f32.mrb[0].mxu0
        %1688 = vmatprep.mubr.bf16.mxu0 0
        %1689 = vmatmul.mubr.bf16.gmra.mrb[0].mxu0 %v1598
        %v1690 = vpop.f32.mrb[0].mxu0
        %v1691 = vadd.f32 %v1562, %v1690
        %v1692 = vpop.f32.mrb[0].mxu0
        %v1693 = vpop.f32.mrb[0].mxu0
        %v1694 = vadd.f32 %v1562, %v1693
        %v1695 = vpop.f32.mrb[0].mxu0
        %1696 = vdwg.mxu0
        %v1697 = vld [vmem:[#allocation10] sm:$0x1]
        %v1698 = vld [vmem:[#allocation12] sm:$0x1]
        %v1699 = vld [vmem:[%s8] sm:$0xff]
        %v1700 = vld [vmem:[%s9] sm:$0xff]
        %v1701 = vld [vmem:[#allocation13] sm:$0xff]
        %v1702 = vld [vmem:[%s11] sm:$0x1]
        %v1703 = vld [vmem:[%s12] sm:$0xf]
        %v1704 = vld [vmem:[%s12 + $0x4] sm:$0xf]
        %v1705 = vld [vmem:[%s12 + $0x8] sm:$0xf]
        %v1706 = vld [vmem:[%s12 + $0xc] sm:$0xf]
        %v1707 = vld [vmem:[#allocation15] sm:$0x1]
        %v1708 = vld [vmem:[#allocation16] sm:$0x1]
        %v1709 = vld [vmem:[%s16] sm:$0x1]
        %v1710 = vld [vmem:[#allocation18] sm:$0x1]
        %v1711 = vld [vmem:[%s18] sm:$0xff]
        %v1712 = vld [vmem:[%s19] sm:$0xff]
        %v1713 = vld [vmem:[%s20] sm:$0xff]
        %v1714 = vld [vmem:[%s21] sm:$0x1]
        %v1715 = vld [vmem:[%s22] sm:$0xf]
        %v1716 = vld [vmem:[%s22 + $0x4] sm:$0xf]
        %v1717 = vld [vmem:[%s22 + $0x8] sm:$0xf]
        %v1718 = vld [vmem:[%s22 + $0xc] sm:$0xf]
        %v1719 = vld [vmem:[%s23] sm:$0x1]
        %v1720 = vld [vmem:[#allocation19] sm:$0x1]
        %s1721 = scalar_lea.vmem [#allocation2], 16
        %1722 = vst.msk [vmem:[%s1721 + $0x1] sm:$0xff] %vm900, %v1635
        %1723 = vst.msk [vmem:[%s1721 + $0x11] sm:$0xff] %vm900, %v1638
        %1724 = vst.msk [vmem:[%s1721 + $0x21] sm:$0xff] %vm900, %v1643
        %1725 = vst.msk [vmem:[%s1721 + $0x31] sm:$0xff] %vm900, %v1646
        %1726 = vst.msk [vmem:[%s1721 + $0x41] sm:$0xff] %vm900, %v1651
        %1727 = vst.msk [vmem:[%s1721 + $0x51] sm:$0xff] %vm900, %v1654
        %1728 = vst.msk [vmem:[%s1721 + $0x61] sm:$0xff] %vm900, %v1659
        %1729 = vst.msk [vmem:[%s1721 + $0x71] sm:$0xff] %vm900, %v1662
        %v1730 = vld [vmem:[#allocation2] sm:$0xff]
        %v1731 = vld [vmem:[#allocation2 + $0x10] sm:$0xff]
        %v1732 = vld [vmem:[#allocation2 + $0x20] sm:$0xff]
        %v1733 = vld [vmem:[#allocation2 + $0x30] sm:$0xff]
        %v1734 = vld [vmem:[#allocation2 + $0x40] sm:$0xff]
        %v1735 = vld [vmem:[#allocation2 + $0x50] sm:$0xff]
        %v1736 = vld [vmem:[#allocation2 + $0x60] sm:$0xff]
        %v1737 = vld [vmem:[#allocation2 + $0x70] sm:$0xff]
        %v1738 = vld [vmem:[%s5] sm:$0x1]
        %v1739 = vlaneseq
        %v1740 = vshrl.u32 %v1739, 7
        %v1741 = vsub.s32 0, %v1740
        %v1742 = vrot.slane %v1738, %v1741
        %v1743 = vmul.f32 %v1730, %v1742
        %v1744 = vmul.f32 %v1731, %v1742
        %v1745 = vmul.f32 %v1732, %v1742
        %v1746 = vmul.f32 %v1733, %v1742
        %v1747 = vmul.f32 %v1734, %v1742
        %v1748 = vmul.f32 %v1735, %v1742
        %v1749 = vmul.f32 %v1736, %v1742
        %v1750 = vmul.f32 %v1737, %v1742
        %v1751 = vadd.f32 %v1743, 0.0
        %v1752 = vadd.f32 %v1744, 0.0
        %v1753 = vadd.f32 %v1745, 0.0
        %v1754 = vadd.f32 %v1746, 0.0
        %v1755 = vadd.f32 %v1747, 0.0
        %v1756 = vadd.f32 %v1748, 0.0
        %v1757 = vadd.f32 %v1749, 0.0
        %v1758 = vadd.f32 %v1750, 0.0
        %v1759 = vld [vmem:[#allocation2 + $0x1] sm:$0xff]
        %v1760 = vld [vmem:[#allocation2 + $0x11] sm:$0xff]
        %v1761 = vld [vmem:[#allocation2 + $0x21] sm:$0xff]
        %v1762 = vld [vmem:[#allocation2 + $0x31] sm:$0xff]
        %v1763 = vld [vmem:[#allocation2 + $0x41] sm:$0xff]
        %v1764 = vld [vmem:[#allocation2 + $0x51] sm:$0xff]
        %v1765 = vld [vmem:[#allocation2 + $0x61] sm:$0xff]
        %v1766 = vld [vmem:[#allocation2 + $0x71] sm:$0xff]
        %v1767 = vld [vmem:[%s5 + $0x1] sm:$0x1]
        %v1768 = vlaneseq
        %v1769 = vshrl.u32 %v1768, 7
        %v1770 = vsub.s32 0, %v1769
        %v1771 = vrot.slane %v1767, %v1770
        %v1772 = vmul.f32 %v1759, %v1771
        %v1773 = vmul.f32 %v1760, %v1771
        %v1774 = vmul.f32 %v1761, %v1771
        %v1775 = vmul.f32 %v1762, %v1771
        %v1776 = vmul.f32 %v1763, %v1771
        %v1777 = vmul.f32 %v1764, %v1771
        %v1778 = vmul.f32 %v1765, %v1771
        %v1779 = vmul.f32 %v1766, %v1771
        %v1780 = vadd.f32 %v1751, %v1772
        %v1781 = vadd.f32 %v1752, %v1773
        %v1782 = vadd.f32 %v1753, %v1774
        %v1783 = vadd.f32 %v1754, %v1775
        %v1784 = vadd.f32 %v1755, %v1776
        %v1785 = vadd.f32 %v1756, %v1777
        %v1786 = vadd.f32 %v1757, %v1778
        %v1787 = vadd.f32 %v1758, %v1779
        %v1788 = vld [vmem:[#allocation2 + $0x2] sm:$0xff]
        %v1789 = vld [vmem:[#allocation2 + $0x12] sm:$0xff]
        %v1790 = vld [vmem:[#allocation2 + $0x22] sm:$0xff]
        %v1791 = vld [vmem:[#allocation2 + $0x32] sm:$0xff]
        %v1792 = vld [vmem:[#allocation2 + $0x42] sm:$0xff]
        %v1793 = vld [vmem:[#allocation2 + $0x52] sm:$0xff]
        %v1794 = vld [vmem:[#allocation2 + $0x62] sm:$0xff]
        %v1795 = vld [vmem:[#allocation2 + $0x72] sm:$0xff]
        %v1796 = vld [vmem:[%s5 + $0x2] sm:$0x1]
        %v1797 = vlaneseq
        %v1798 = vshrl.u32 %v1797, 7
        %v1799 = vsub.s32 0, %v1798
        %v1800 = vrot.slane %v1796, %v1799
        %v1801 = vmul.f32 %v1788, %v1800
        %v1802 = vmul.f32 %v1789, %v1800
        %v1803 = vmul.f32 %v1790, %v1800
        %v1804 = vmul.f32 %v1791, %v1800
        %v1805 = vmul.f32 %v1792, %v1800
        %v1806 = vmul.f32 %v1793, %v1800
        %v1807 = vmul.f32 %v1794, %v1800
        %v1808 = vmul.f32 %v1795, %v1800
        %v1809 = vadd.f32 %v1780, %v1801
        %v1810 = vadd.f32 %v1781, %v1802
        %v1811 = vadd.f32 %v1782, %v1803
        %v1812 = vadd.f32 %v1783, %v1804
        %v1813 = vadd.f32 %v1784, %v1805
        %v1814 = vadd.f32 %v1785, %v1806
        %v1815 = vadd.f32 %v1786, %v1807
        %v1816 = vadd.f32 %v1787, %v1808
        %v1817 = vld [vmem:[%s1721] sm:$0xff]
        %v1818 = vld [vmem:[%s1721 + $0x10] sm:$0xff]
        %v1819 = vld [vmem:[%s1721 + $0x20] sm:$0xff]
        %v1820 = vld [vmem:[%s1721 + $0x30] sm:$0xff]
        %v1821 = vld [vmem:[%s1721 + $0x40] sm:$0xff]
        %v1822 = vld [vmem:[%s1721 + $0x50] sm:$0xff]
        %v1823 = vld [vmem:[%s1721 + $0x60] sm:$0xff]
        %v1824 = vld [vmem:[%s1721 + $0x70] sm:$0xff]
        %v1825 = vld [vmem:[%s5 + $0x3] sm:$0x1]
        %v1826 = vlaneseq
        %v1827 = vshrl.u32 %v1826, 7
        %v1828 = vsub.s32 0, %v1827
        %v1829 = vrot.slane %v1825, %v1828
        %v1830 = vmul.f32 %v1817, %v1829
        %v1831 = vmul.f32 %v1818, %v1829
        %v1832 = vmul.f32 %v1819, %v1829
        %v1833 = vmul.f32 %v1820, %v1829
        %v1834 = vmul.f32 %v1821, %v1829
        %v1835 = vmul.f32 %v1822, %v1829
        %v1836 = vmul.f32 %v1823, %v1829
        %v1837 = vmul.f32 %v1824, %v1829
        %v1838 = vadd.f32 %v1809, %v1830
        %v1839 = vadd.f32 %v1810, %v1831
        %v1840 = vadd.f32 %v1811, %v1832
        %v1841 = vadd.f32 %v1812, %v1833
        %v1842 = vadd.f32 %v1813, %v1834
        %v1843 = vadd.f32 %v1814, %v1835
        %v1844 = vadd.f32 %v1815, %v1836
        %v1845 = vadd.f32 %v1816, %v1837
        %v1846 = vld [vmem:[%s1721 + $0x1] sm:$0xff]
        %v1847 = vld [vmem:[%s1721 + $0x11] sm:$0xff]
        %v1848 = vld [vmem:[%s1721 + $0x21] sm:$0xff]
        %v1849 = vld [vmem:[%s1721 + $0x31] sm:$0xff]
        %v1850 = vld [vmem:[%s1721 + $0x41] sm:$0xff]
        %v1851 = vld [vmem:[%s1721 + $0x51] sm:$0xff]
        %v1852 = vld [vmem:[%s1721 + $0x61] sm:$0xff]
        %v1853 = vld [vmem:[%s1721 + $0x71] sm:$0xff]
        %v1854 = vld [vmem:[%s5 + $0x4] sm:$0x1]
        %v1855 = vlaneseq
        %v1856 = vshrl.u32 %v1855, 7
        %v1857 = vsub.s32 0, %v1856
        %v1858 = vrot.slane %v1854, %v1857
        %v1859 = vmul.f32 %v1846, %v1858
        %v1860 = vmul.f32 %v1847, %v1858
        %v1861 = vmul.f32 %v1848, %v1858
        %v1862 = vmul.f32 %v1849, %v1858
        %v1863 = vmul.f32 %v1850, %v1858
        %v1864 = vmul.f32 %v1851, %v1858
        %v1865 = vmul.f32 %v1852, %v1858
        %v1866 = vmul.f32 %v1853, %v1858
        %v1867 = vadd.f32 %v1838, %v1859
        %v1868 = vadd.f32 %v1839, %v1860
        %v1869 = vadd.f32 %v1840, %v1861
        %v1870 = vadd.f32 %v1841, %v1862
        %v1871 = vadd.f32 %v1842, %v1863
        %v1872 = vadd.f32 %v1843, %v1864
        %v1873 = vadd.f32 %v1844, %v1865
        %v1874 = vadd.f32 %v1845, %v1866
        %v1875 = vld [vmem:[%s1721 + $0x2] sm:$0xff]
        %v1876 = vld [vmem:[%s1721 + $0x12] sm:$0xff]
        %v1877 = vld [vmem:[%s1721 + $0x22] sm:$0xff]
        %v1878 = vld [vmem:[%s1721 + $0x32] sm:$0xff]
        %v1879 = vld [vmem:[%s1721 + $0x42] sm:$0xff]
        %v1880 = vld [vmem:[%s1721 + $0x52] sm:$0xff]
        %v1881 = vld [vmem:[%s1721 + $0x62] sm:$0xff]
        %v1882 = vld [vmem:[%s1721 + $0x72] sm:$0xff]
        %v1883 = vld [vmem:[%s5 + $0x5] sm:$0x1]
        %v1884 = vlaneseq
        %v1885 = vshrl.u32 %v1884, 7
        %v1886 = vsub.s32 0, %v1885
        %v1887 = vrot.slane %v1883, %v1886
        %v1888 = vmul.f32 %v1875, %v1887
        %v1889 = vmul.f32 %v1876, %v1887
        %v1890 = vmul.f32 %v1877, %v1887
        %v1891 = vmul.f32 %v1878, %v1887
        %v1892 = vmul.f32 %v1879, %v1887
        %v1893 = vmul.f32 %v1880, %v1887
        %v1894 = vmul.f32 %v1881, %v1887
        %v1895 = vmul.f32 %v1882, %v1887
        %v1896 = vadd.f32 %v1867, %v1888
        %v1897 = vadd.f32 %v1868, %v1889
        %v1898 = vadd.f32 %v1869, %v1890
        %v1899 = vadd.f32 %v1870, %v1891
        %v1900 = vadd.f32 %v1871, %v1892
        %v1901 = vadd.f32 %v1872, %v1893
        %v1902 = vadd.f32 %v1873, %v1894
        %v1903 = vadd.f32 %v1874, %v1895
        %s1904 = scalar_lea.vmem [#allocation2], 32
        %v1905 = vld [vmem:[%s1904] sm:$0xff]
        %v1906 = vld [vmem:[%s1904 + $0x10] sm:$0xff]
        %v1907 = vld [vmem:[%s1904 + $0x20] sm:$0xff]
        %v1908 = vld [vmem:[%s1904 + $0x30] sm:$0xff]
        %v1909 = vld [vmem:[%s1904 + $0x40] sm:$0xff]
        %v1910 = vld [vmem:[%s1904 + $0x50] sm:$0xff]
        %v1911 = vld [vmem:[%s1904 + $0x60] sm:$0xff]
        %v1912 = vld [vmem:[%s1904 + $0x70] sm:$0xff]
        %v1913 = vld [vmem:[%s5 + $0x6] sm:$0x1]
        %v1914 = vlaneseq
        %v1915 = vshrl.u32 %v1914, 7
        %v1916 = vsub.s32 0, %v1915
        %v1917 = vrot.slane %v1913, %v1916
        %v1918 = vmul.f32 %v1905, %v1917
        %v1919 = vmul.f32 %v1906, %v1917
        %v1920 = vmul.f32 %v1907, %v1917
        %v1921 = vmul.f32 %v1908, %v1917
        %v1922 = vmul.f32 %v1909, %v1917
        %v1923 = vmul.f32 %v1910, %v1917
        %v1924 = vmul.f32 %v1911, %v1917
        %v1925 = vmul.f32 %v1912, %v1917
        %v1926 = vadd.f32 %v1896, %v1918
        %v1927 = vadd.f32 %v1897, %v1919
        %v1928 = vadd.f32 %v1898, %v1920
        %v1929 = vadd.f32 %v1899, %v1921
        %v1930 = vadd.f32 %v1900, %v1922
        %v1931 = vadd.f32 %v1901, %v1923
        %v1932 = vadd.f32 %v1902, %v1924
        %v1933 = vadd.f32 %v1903, %v1925
        %v1934 = vld [vmem:[%s1904 + $0x1] sm:$0xff]
        %v1935 = vld [vmem:[%s1904 + $0x11] sm:$0xff]
        %v1936 = vld [vmem:[%s1904 + $0x21] sm:$0xff]
        %v1937 = vld [vmem:[%s1904 + $0x31] sm:$0xff]
        %v1938 = vld [vmem:[%s1904 + $0x41] sm:$0xff]
        %v1939 = vld [vmem:[%s1904 + $0x51] sm:$0xff]
        %v1940 = vld [vmem:[%s1904 + $0x61] sm:$0xff]
        %v1941 = vld [vmem:[%s1904 + $0x71] sm:$0xff]
        %v1942 = vld [vmem:[%s5 + $0x7] sm:$0x1]
        %v1943 = vlaneseq
        %v1944 = vshrl.u32 %v1943, 7
        %v1945 = vsub.s32 0, %v1944
        %v1946 = vrot.slane %v1942, %v1945
        %v1947 = vmul.f32 %v1934, %v1946
        %v1948 = vmul.f32 %v1935, %v1946
        %v1949 = vmul.f32 %v1936, %v1946
        %v1950 = vmul.f32 %v1937, %v1946
        %v1951 = vmul.f32 %v1938, %v1946
        %v1952 = vmul.f32 %v1939, %v1946
        %v1953 = vmul.f32 %v1940, %v1946
        %v1954 = vmul.f32 %v1941, %v1946
        %v1955 = vadd.f32 %v1926, %v1947
        %v1956 = vadd.f32 %v1927, %v1948
        %v1957 = vadd.f32 %v1928, %v1949
        %v1958 = vadd.f32 %v1929, %v1950
        %v1959 = vadd.f32 %v1930, %v1951
        %v1960 = vadd.f32 %v1931, %v1952
        %v1961 = vadd.f32 %v1932, %v1953
        %v1962 = vadd.f32 %v1933, %v1954
        %v1963 = vld [vmem:[%s1904 + $0x2] sm:$0xff]
        %v1964 = vld [vmem:[%s1904 + $0x12] sm:$0xff]
        %v1965 = vld [vmem:[%s1904 + $0x22] sm:$0xff]
        %v1966 = vld [vmem:[%s1904 + $0x32] sm:$0xff]
        %v1967 = vld [vmem:[%s1904 + $0x42] sm:$0xff]
        %v1968 = vld [vmem:[%s1904 + $0x52] sm:$0xff]
        %v1969 = vld [vmem:[%s1904 + $0x62] sm:$0xff]
        %v1970 = vld [vmem:[%s1904 + $0x72] sm:$0xff]
        %v1971 = vld [vmem:[%s5 + $0x8] sm:$0x1]
        %v1972 = vlaneseq
        %v1973 = vshrl.u32 %v1972, 7
        %v1974 = vsub.s32 0, %v1973
        %v1975 = vrot.slane %v1971, %v1974
        %v1976 = vmul.f32 %v1963, %v1975
        %v1977 = vmul.f32 %v1964, %v1975
        %v1978 = vmul.f32 %v1965, %v1975
        %v1979 = vmul.f32 %v1966, %v1975
        %v1980 = vmul.f32 %v1967, %v1975
        %v1981 = vmul.f32 %v1968, %v1975
        %v1982 = vmul.f32 %v1969, %v1975
        %v1983 = vmul.f32 %v1970, %v1975
        %v1984 = vadd.f32 %v1955, %v1976
        %v1985 = vadd.f32 %v1956, %v1977
        %v1986 = vadd.f32 %v1957, %v1978
        %v1987 = vadd.f32 %v1958, %v1979
        %v1988 = vadd.f32 %v1959, %v1980
        %v1989 = vadd.f32 %v1960, %v1981
        %v1990 = vadd.f32 %v1961, %v1982
        %v1991 = vadd.f32 %v1962, %v1983
        %v1992 = vsel %vm900, %v1984, 0.0
        %1993 = vadd.xlane.f32.xlu0 %v1992
        %v1994 = vpop.xlane.xlu0 %1993
        %v1995 = vsel %vm900, %v1985, 0.0
        %1996 = vadd.xlane.f32.xlu0 %v1995
        %v1997 = vpop.xlane.xlu0 %1996
        %v1998 = vsel %vm900, %v1986, 0.0
        %1999 = vadd.xlane.f32.xlu0 %v1998
        %v2000 = vpop.xlane.xlu0 %1999
        %v2001 = vsel %vm900, %v1987, 0.0
        %2002 = vadd.xlane.f32.xlu0 %v2001
        %v2003 = vpop.xlane.xlu0 %2002
        %v2004 = vsel %vm900, %v1988, 0.0
        %2005 = vadd.xlane.f32.xlu0 %v2004
        %v2006 = vpop.xlane.xlu0 %2005
        %v2007 = vsel %vm900, %v1989, 0.0
        %2008 = vadd.xlane.f32.xlu0 %v2007
        %v2009 = vpop.xlane.xlu0 %2008
        %v2010 = vsel %vm900, %v1990, 0.0
        %2011 = vadd.xlane.f32.xlu0 %v2010
        %v2012 = vpop.xlane.xlu0 %2011
        %v2013 = vsel %vm900, %v1991, 0.0
        %2014 = vadd.xlane.f32.xlu0 %v2013
        %v2015 = vpop.xlane.xlu0 %2014
        %v2016 = vrcp.pop 32.0
        %v2017 = vmul.f32 %v1994, %v2016
        %v2018 = vmul.f32 %v1997, %v2016
        %v2019 = vmul.f32 %v2000, %v2016
        %v2020 = vmul.f32 %v2003, %v2016
        %v2021 = vmul.f32 %v2006, %v2016
        %v2022 = vmul.f32 %v2009, %v2016
        %v2023 = vmul.f32 %v2012, %v2016
        %v2024 = vmul.f32 %v2015, %v2016
        %v2025 = vsub.f32 %v1984, %v2017
        %v2026 = vsub.f32 %v1985, %v2018
        %v2027 = vsub.f32 %v1986, %v2019
        %v2028 = vsub.f32 %v1987, %v2020
        %v2029 = vsub.f32 %v1988, %v2021
        %v2030 = vsub.f32 %v1989, %v2022
        %v2031 = vsub.f32 %v1990, %v2023
        %v2032 = vsub.f32 %v1991, %v2024
        %v2033 = vmul.f32 %v2025, %v2025
        %v2034 = vmul.f32 %v2026, %v2026
        %v2035 = vmul.f32 %v2027, %v2027
        %v2036 = vmul.f32 %v2028, %v2028
        %v2037 = vmul.f32 %v2029, %v2029
        %v2038 = vmul.f32 %v2030, %v2030
        %v2039 = vmul.f32 %v2031, %v2031
        %v2040 = vmul.f32 %v2032, %v2032
        %v2041 = vsel %vm900, %v2033, 0.0
        %2042 = vadd.xlane.f32.xlu0 %v2041
        %v2043 = vpop.xlane.xlu0 %2042
        %v2044 = vsel %vm900, %v2034, 0.0
        %2045 = vadd.xlane.f32.xlu0 %v2044
        %v2046 = vpop.xlane.xlu0 %2045
        %v2047 = vsel %vm900, %v2035, 0.0
        %2048 = vadd.xlane.f32.xlu0 %v2047
        %v2049 = vpop.xlane.xlu0 %2048
        %v2050 = vsel %vm900, %v2036, 0.0
        %2051 = vadd.xlane.f32.xlu0 %v2050
        %v2052 = vpop.xlane.xlu0 %2051
        %v2053 = vsel %vm900, %v2037, 0.0
        %2054 = vadd.xlane.f32.xlu0 %v2053
        %v2055 = vpop.xlane.xlu0 %2054
        %v2056 = vsel %vm900, %v2038, 0.0
        %2057 = vadd.xlane.f32.xlu0 %v2056
        %v2058 = vpop.xlane.xlu0 %2057
        %v2059 = vsel %vm900, %v2039, 0.0
        %2060 = vadd.xlane.f32.xlu0 %v2059
        %v2061 = vpop.xlane.xlu0 %2060
        %v2062 = vsel %vm900, %v2040, 0.0
        %2063 = vadd.xlane.f32.xlu0 %v2062
        %v2064 = vpop.xlane.xlu0 %2063
        %v2065 = vmul.f32 %v2043, %v2016
        %v2066 = vmul.f32 %v2046, %v2016
        %v2067 = vmul.f32 %v2049, %v2016
        %v2068 = vmul.f32 %v2052, %v2016
        %v2069 = vmul.f32 %v2055, %v2016
        %v2070 = vmul.f32 %v2058, %v2016
        %v2071 = vmul.f32 %v2061, %v2016
        %v2072 = vmul.f32 %v2064, %v2016
        %v2073 = vadd.f32 %v2065, 1e-05
        %v2074 = vadd.f32 %v2066, 1e-05
        %v2075 = vadd.f32 %v2067, 1e-05
        %v2076 = vadd.f32 %v2068, 1e-05
        %v2077 = vadd.f32 %v2069, 1e-05
        %v2078 = vadd.f32 %v2070, 1e-05
        %v2079 = vadd.f32 %v2071, 1e-05
        %v2080 = vadd.f32 %v2072, 1e-05
        %v2081 = vrsqrt.pop %v2073
        %v2082 = vrsqrt.pop %v2074
        %v2083 = vrsqrt.pop %v2075
        %v2084 = vrsqrt.pop %v2076
        %v2085 = vrsqrt.pop %v2077
        %v2086 = vrsqrt.pop %v2078
        %v2087 = vrsqrt.pop %v2079
        %v2088 = vrsqrt.pop %v2080
        %v2089 = vmul.f32 %v2025, %v2081
        %v2090 = vmul.f32 %v2026, %v2082
        %v2091 = vmul.f32 %v2027, %v2083
        %v2092 = vmul.f32 %v2028, %v2084
        %v2093 = vmul.f32 %v2029, %v2085
        %v2094 = vmul.f32 %v2030, %v2086
        %v2095 = vmul.f32 %v2031, %v2087
        %v2096 = vmul.f32 %v2032, %v2088
        %v2098 = vlaneseq
        %v2099 = vshrl.u32 %v2098, 7
        %v2100 = vsub.s32 0, %v2099
        %v2101 = vrot.slane %v1697, %v2100
        %v2103 = vmul.f32 %v2089, %v2101
        %v2104 = vmul.f32 %v2090, %v2101
        %v2105 = vmul.f32 %v2091, %v2101
        %v2106 = vmul.f32 %v2092, %v2101
        %v2107 = vmul.f32 %v2093, %v2101
        %v2108 = vmul.f32 %v2094, %v2101
        %v2109 = vmul.f32 %v2095, %v2101
        %v2110 = vmul.f32 %v2096, %v2101
        %v2112 = vlaneseq
        %v2113 = vshrl.u32 %v2112, 7
        %v2114 = vsub.s32 0, %v2113
        %v2115 = vrot.slane %v1698, %v2114
        %v2117 = vadd.f32 %v2103, %v2115
        %v2118 = vadd.f32 %v2104, %v2115
        %v2119 = vadd.f32 %v2105, %v2115
        %v2120 = vadd.f32 %v2106, %v2115
        %v2121 = vadd.f32 %v2107, %v2115
        %v2122 = vadd.f32 %v2108, %v2115
        %v2123 = vadd.f32 %v2109, %v2115
        %v2124 = vadd.f32 %v2110, %v2115
        %v2125 = vadd.f32 %v2117, 3.0
        %v2126 = vadd.f32 %v2118, 3.0
        %v2127 = vadd.f32 %v2119, 3.0
        %v2128 = vadd.f32 %v2120, 3.0
        %v2129 = vadd.f32 %v2121, 3.0
        %v2130 = vadd.f32 %v2122, 3.0
        %v2131 = vadd.f32 %v2123, 3.0
        %v2132 = vadd.f32 %v2124, 3.0
        %v2133 = vmax.f32 %v2125, 0.0
        %v2134 = vmax.f32 %v2126, 0.0
        %v2135 = vmax.f32 %v2127, 0.0
        %v2136 = vmax.f32 %v2128, 0.0
        %v2137 = vmax.f32 %v2129, 0.0
        %v2138 = vmax.f32 %v2130, 0.0
        %v2139 = vmax.f32 %v2131, 0.0
        %v2140 = vmax.f32 %v2132, 0.0
        %v2141 = vmin.f32 %v2133, 6.0
        %v2142 = vmin.f32 %v2134, 6.0
        %v2143 = vmin.f32 %v2135, 6.0
        %v2144 = vmin.f32 %v2136, 6.0
        %v2145 = vmin.f32 %v2137, 6.0
        %v2146 = vmin.f32 %v2138, 6.0
        %v2147 = vmin.f32 %v2139, 6.0
        %v2148 = vmin.f32 %v2140, 6.0
        %v2149 = vmul.f32 %v2141, 0.16666667
        %v2150 = vmul.f32 %v2142, 0.16666667
        %v2151 = vmul.f32 %v2143, 0.16666667
        %v2152 = vmul.f32 %v2144, 0.16666667
        %v2153 = vmul.f32 %v2145, 0.16666667
        %v2154 = vmul.f32 %v2146, 0.16666667
        %v2155 = vmul.f32 %v2147, 0.16666667
        %v2156 = vmul.f32 %v2148, 0.16666667
        %v2157 = vmul.f32 %v2117, %v2149
        %v2158 = vmul.f32 %v2118, %v2150
        %v2159 = vmul.f32 %v2119, %v2151
        %v2160 = vmul.f32 %v2120, %v2152
        %v2161 = vmul.f32 %v2121, %v2153
        %v2162 = vmul.f32 %v2122, %v2154
        %v2163 = vmul.f32 %v2123, %v2155
        %v2164 = vmul.f32 %v2124, %v2156
        %v2165 = vsel %vm900, %v2157, 0.0
        %v2166 = vsel %vm900, %v2158, 0.0
        %v2167 = vadd.f32 %v2165, %v2166
        %v2168 = vsel %vm900, %v2159, 0.0
        %v2169 = vadd.f32 %v2167, %v2168
        %v2170 = vsel %vm900, %v2160, 0.0
        %v2171 = vadd.f32 %v2169, %v2170
        %v2172 = vsel %vm900, %v2161, 0.0
        %v2173 = vadd.f32 %v2171, %v2172
        %v2174 = vsel %vm900, %v2162, 0.0
        %v2175 = vadd.f32 %v2173, %v2174
        %v2176 = vsel %vm900, %v2163, 0.0
        %v2177 = vadd.f32 %v2175, %v2176
        %v2178 = vsel %vm900, %v2164, 0.0
        %v2179 = vadd.f32 %v2177, %v2178
        %v2180 = vrot.slane %v2179, 4
        %v2181 = vadd.f32 %v2179, %v2180
        %v2182 = vrot.slane %v2181, 2
        %v2183 = vadd.f32 %v2181, %v2182
        %v2184 = vrot.slane %v2183, 1
        %v2185 = vadd.f32 %v2183, %v2184
        %v2186 = vrcp.pop 64.0
        %v2187 = vmul.f32 %v2185, %v2186
        %v2188 = vmul.f32 %v1699, %v2187
        %v2189 = vsel %vm900, %v2188, 0.0
        %2190 = vadd.xlane.f32.xlu0 %v2189
        %v2191 = vpop.xlane.xlu0 %2190
        %v2192 = vadd.f32 %v2191, %v1700
        %v2193 = vmax.f32 %v2192, 0.0
        %2195 = vset.pattern.permute.xlu0 0
        %2196 = vperm.xlu0 %2195, %v2193
        %v2197 = vpop.permute.xlu0 %2196
        %v2199 = vmul.f32 %v1701, %v2197
        %v2200 = vsel %vm900, %v2199, 0.0
        %v2201 = vrot.slane %v2200, 4
        %v2202 = vadd.f32 %v2200, %v2201
        %v2203 = vrot.slane %v2202, 2
        %v2204 = vadd.f32 %v2202, %v2203
        %v2205 = vrot.slane %v2204, 1
        %v2206 = vadd.f32 %v2204, %v2205
        %v2207 = vadd.f32 %v2206, %v1702
        %v2208 = vadd.f32 %v2207, 3.0
        %v2209 = vmax.f32 %v2208, 0.0
        %v2210 = vmin.f32 %v2209, 6.0
        %v2211 = vmul.f32 %v2210, 0.16666667
        %v2212 = vlaneseq
        %v2213 = vshrl.u32 %v2212, 7
        %v2214 = vsub.s32 0, %v2213
        %v2215 = vrot.slane %v2211, %v2214
        %v2216 = vmul.f32 %v2157, %v2215
        %v2217 = vmul.f32 %v2158, %v2215
        %v2218 = vmul.f32 %v2159, %v2215
        %v2219 = vmul.f32 %v2160, %v2215
        %v2220 = vmul.f32 %v2161, %v2215
        %v2221 = vmul.f32 %v2162, %v2215
        %v2222 = vmul.f32 %v2163, %v2215
        %v2223 = vmul.f32 %v2164, %v2215
        %v2224 = vpack.c.bf16 %v2217, %v2216
        %v2225 = vpack.c.bf16 %v2219, %v2218
        %v2226 = vpack.c.bf16 %v2221, %v2220
        %v2227 = vpack.c.bf16 %v2223, %v2222
        %v2232 = vunpack.c.l.b16 %v1703
        %v2233 = vunpack.c.l.b16 %v1704
        %v2234 = vunpack.c.l.b16 %v1705
        %v2235 = vunpack.c.l.b16 %v1706
        %v2236 = vpack.c.b16 %v2233, %v2232
        %v2237 = vpack.c.b16 %v2235, %v2234
        %v2241 = vsel %vm900, %v2224, 0
        %v2244 = vsel %vm900, %v2225, 0
        %v2247 = vsel %vm900, %v2226, 0
        %v2250 = vsel %vm900, %v2227, 0
        %2252 = vmatprep.subr.bf16.mxu0 0
        %2253 = vmatpush1.bf16.msra.mxu0 %v2236
        %2254 = vmatprep.subr.bf16.mxu0 0
        %2255 = vmatpush1.bf16.msra.mxu0 %v2237
        %2256 = vmatprep.subr.bf16.mxu0 0
        %2257 = vmatpush1.bf16.msra.mxu0 0
        %2258 = vmatprep.subr.bf16.mxu0 0
        %2259 = vmatpush1.bf16.msra.mxu0 0
        %2260 = vmatprep.subr.bf16.mxu0 0
        %2261 = vmatpush1.bf16.msra.mxu0 0
        %2262 = vmatprep.subr.bf16.mxu0 0
        %2263 = vmatpush1.bf16.msra.mxu0 0
        %2264 = vmatprep.subr.bf16.mxu0 0
        %2265 = vmatpush1.bf16.msra.mxu0 0
        %2266 = vmatprep.subr.bf16.mxu0 0
        %2267 = vmatpush1.bf16.msra.mxu0 0
        %2268 = vmatprep.subr.bf16.mxu0 0
        %2269 = vmatpush1.bf16.msra.mxu0 0
        %2270 = vmatprep.subr.bf16.mxu0 0
        %2271 = vmatpush1.bf16.msra.mxu0 0
        %2272 = vmatprep.subr.bf16.mxu0 0
        %2273 = vmatpush1.bf16.msra.mxu0 0
        %2274 = vmatprep.subr.bf16.mxu0 0
        %2275 = vmatpush1.bf16.msra.mxu0 0
        %2276 = vmatprep.subr.bf16.mxu0 0
        %2277 = vmatpush1.bf16.msra.mxu0 0
        %2278 = vmatprep.subr.bf16.mxu0 0
        %2279 = vmatpush1.bf16.msra.mxu0 0
        %2280 = vmatprep.subr.bf16.mxu0 0
        %2281 = vmatpush1.bf16.msra.mxu0 0
        %2282 = vmatprep.subr.bf16.mxu0 0
        %2283 = vmatpush1.bf16.msra.mxu0 0
        %2284 = vmatprep.mubr.bf16.mxu0 0
        %2285 = vmatmul.mubr.bf16.gmra.mrb[0].mxu0 %v2241
        %v2286 = vpop.f32.mrb[0].mxu0
        %v2287 = vadd.f32 0.0, %v2286
        %v2288 = vpop.f32.mrb[0].mxu0
        %v2289 = vpop.f32.mrb[0].mxu0
        %v2290 = vadd.f32 0.0, %v2289
        %v2291 = vpop.f32.mrb[0].mxu0
        %2292 = vmatprep.mubr.bf16.mxu0 0
        %2293 = vmatmul.mubr.bf16.gmra.mrb[0].mxu0 %v2244
        %v2294 = vpop.f32.mrb[0].mxu0
        %v2295 = vadd.f32 0.0, %v2294
        %v2296 = vpop.f32.mrb[0].mxu0
        %v2297 = vpop.f32.mrb[0].mxu0
        %v2298 = vadd.f32 0.0, %v2297
        %v2299 = vpop.f32.mrb[0].mxu0
        %2300 = vmatprep.mubr.bf16.mxu0 0
        %2301 = vmatmul.mubr.bf16.gmra.mrb[0].mxu0 %v2247
        %v2302 = vpop.f32.mrb[0].mxu0
        %v2303 = vadd.f32 0.0, %v2302
        %v2304 = vpop.f32.mrb[0].mxu0
        %v2305 = vpop.f32.mrb[0].mxu0
        %v2306 = vadd.f32 0.0, %v2305
        %v2307 = vpop.f32.mrb[0].mxu0
        %2308 = vmatprep.mubr.bf16.mxu0 0
        %2309 = vmatmul.mubr.bf16.gmra.mrb[0].mxu0 %v2250
        %v2310 = vpop.f32.mrb[0].mxu0
        %v2311 = vadd.f32 0.0, %v2310
        %v2312 = vpop.f32.mrb[0].mxu0
        %v2313 = vpop.f32.mrb[0].mxu0
        %v2314 = vadd.f32 0.0, %v2313
        %v2315 = vpop.f32.mrb[0].mxu0
        %2316 = vdwg.mxu0
        %v2317 = vsel %vm900, %v2287, 0.0
        %2318 = vadd.xlane.f32.xlu0 %v2317
        %v2319 = vpop.xlane.xlu0 %2318
        %v2320 = vsel %vm900, %v2290, 0.0
        %2321 = vadd.xlane.f32.xlu0 %v2320
        %v2322 = vpop.xlane.xlu0 %2321
        %v2323 = vsel %vm900, %v2295, 0.0
        %2324 = vadd.xlane.f32.xlu0 %v2323
        %v2325 = vpop.xlane.xlu0 %2324
        %v2326 = vsel %vm900, %v2298, 0.0
        %2327 = vadd.xlane.f32.xlu0 %v2326
        %v2328 = vpop.xlane.xlu0 %2327
        %v2329 = vsel %vm900, %v2303, 0.0
        %2330 = vadd.xlane.f32.xlu0 %v2329
        %v2331 = vpop.xlane.xlu0 %2330
        %v2332 = vsel %vm900, %v2306, 0.0
        %2333 = vadd.xlane.f32.xlu0 %v2332
        %v2334 = vpop.xlane.xlu0 %2333
        %v2335 = vsel %vm900, %v2311, 0.0
        %2336 = vadd.xlane.f32.xlu0 %v2335
        %v2337 = vpop.xlane.xlu0 %2336
        %v2338 = vsel %vm900, %v2314, 0.0
        %2339 = vadd.xlane.f32.xlu0 %v2338
        %v2340 = vpop.xlane.xlu0 %2339
        %v2341 = vmul.f32 %v2319, %v2016
        %v2342 = vmul.f32 %v2322, %v2016
        %v2343 = vmul.f32 %v2325, %v2016
        %v2344 = vmul.f32 %v2328, %v2016
        %v2345 = vmul.f32 %v2331, %v2016
        %v2346 = vmul.f32 %v2334, %v2016
        %v2347 = vmul.f32 %v2337, %v2016
        %v2348 = vmul.f32 %v2340, %v2016
        %v2349 = vsub.f32 %v2287, %v2341
        %v2350 = vsub.f32 %v2290, %v2342
        %v2351 = vsub.f32 %v2295, %v2343
        %v2352 = vsub.f32 %v2298, %v2344
        %v2353 = vsub.f32 %v2303, %v2345
        %v2354 = vsub.f32 %v2306, %v2346
        %v2355 = vsub.f32 %v2311, %v2347
        %v2356 = vsub.f32 %v2314, %v2348
        %v2357 = vmul.f32 %v2349, %v2349
        %v2358 = vmul.f32 %v2350, %v2350
        %v2359 = vmul.f32 %v2351, %v2351
        %v2360 = vmul.f32 %v2352, %v2352
        %v2361 = vmul.f32 %v2353, %v2353
        %v2362 = vmul.f32 %v2354, %v2354
        %v2363 = vmul.f32 %v2355, %v2355
        %v2364 = vmul.f32 %v2356, %v2356
        %v2365 = vsel %vm900, %v2357, 0.0
        %2366 = vadd.xlane.f32.xlu0 %v2365
        %v2367 = vpop.xlane.xlu0 %2366
        %v2368 = vsel %vm900, %v2358, 0.0
        %2369 = vadd.xlane.f32.xlu0 %v2368
        %v2370 = vpop.xlane.xlu0 %2369
        %v2371 = vsel %vm900, %v2359, 0.0
        %2372 = vadd.xlane.f32.xlu0 %v2371
        %v2373 = vpop.xlane.xlu0 %2372
        %v2374 = vsel %vm900, %v2360, 0.0
        %2375 = vadd.xlane.f32.xlu0 %v2374
        %v2376 = vpop.xlane.xlu0 %2375
        %v2377 = vsel %vm900, %v2361, 0.0
        %2378 = vadd.xlane.f32.xlu0 %v2377
        %v2379 = vpop.xlane.xlu0 %2378
        %v2380 = vsel %vm900, %v2362, 0.0
        %2381 = vadd.xlane.f32.xlu0 %v2380
        %v2382 = vpop.xlane.xlu0 %2381
        %v2383 = vsel %vm900, %v2363, 0.0
        %2384 = vadd.xlane.f32.xlu0 %v2383
        %v2385 = vpop.xlane.xlu0 %2384
        %v2386 = vsel %vm900, %v2364, 0.0
        %2387 = vadd.xlane.f32.xlu0 %v2386
        %v2388 = vpop.xlane.xlu0 %2387
        %v2389 = vmul.f32 %v2367, %v2016
        %v2390 = vmul.f32 %v2370, %v2016
        %v2391 = vmul.f32 %v2373, %v2016
        %v2392 = vmul.f32 %v2376, %v2016
        %v2393 = vmul.f32 %v2379, %v2016
        %v2394 = vmul.f32 %v2382, %v2016
        %v2395 = vmul.f32 %v2385, %v2016
        %v2396 = vmul.f32 %v2388, %v2016
        %v2397 = vadd.f32 %v2389, 1e-05
        %v2398 = vadd.f32 %v2390, 1e-05
        %v2399 = vadd.f32 %v2391, 1e-05
        %v2400 = vadd.f32 %v2392, 1e-05
        %v2401 = vadd.f32 %v2393, 1e-05
        %v2402 = vadd.f32 %v2394, 1e-05
        %v2403 = vadd.f32 %v2395, 1e-05
        %v2404 = vadd.f32 %v2396, 1e-05
        %v2405 = vrsqrt.pop %v2397
        %v2406 = vrsqrt.pop %v2398
        %v2407 = vrsqrt.pop %v2399
        %v2408 = vrsqrt.pop %v2400
        %v2409 = vrsqrt.pop %v2401
        %v2410 = vrsqrt.pop %v2402
        %v2411 = vrsqrt.pop %v2403
        %v2412 = vrsqrt.pop %v2404
        %v2413 = vmul.f32 %v2349, %v2405
        %v2414 = vmul.f32 %v2350, %v2406
        %v2415 = vmul.f32 %v2351, %v2407
        %v2416 = vmul.f32 %v2352, %v2408
        %v2417 = vmul.f32 %v2353, %v2409
        %v2418 = vmul.f32 %v2354, %v2410
        %v2419 = vmul.f32 %v2355, %v2411
        %v2420 = vmul.f32 %v2356, %v2412
        %v2422 = vlaneseq
        %v2423 = vshrl.u32 %v2422, 7
        %v2424 = vsub.s32 0, %v2423
        %v2425 = vrot.slane %v1707, %v2424
        %v2427 = vmul.f32 %v2413, %v2425
        %v2428 = vmul.f32 %v2414, %v2425
        %v2429 = vmul.f32 %v2415, %v2425
        %v2430 = vmul.f32 %v2416, %v2425
        %v2431 = vmul.f32 %v2417, %v2425
        %v2432 = vmul.f32 %v2418, %v2425
        %v2433 = vmul.f32 %v2419, %v2425
        %v2434 = vmul.f32 %v2420, %v2425
        %v2436 = vlaneseq
        %v2437 = vshrl.u32 %v2436, 7
        %v2438 = vsub.s32 0, %v2437
        %v2439 = vrot.slane %v1708, %v2438
        %v2441 = vadd.f32 %v2427, %v2439
        %v2442 = vadd.f32 %v2428, %v2439
        %v2443 = vadd.f32 %v2429, %v2439
        %v2444 = vadd.f32 %v2430, %v2439
        %v2445 = vadd.f32 %v2431, %v2439
        %v2446 = vadd.f32 %v2432, %v2439
        %v2447 = vadd.f32 %v2433, %v2439
        %v2448 = vadd.f32 %v2434, %v2439
        %v2449 = vadd.f32 %v2441, %v1635
        %v2450 = vadd.f32 %v2442, %v1638
        %v2451 = vadd.f32 %v2443, %v1643
        %v2452 = vadd.f32 %v2444, %v1646
        %v2453 = vadd.f32 %v2445, %v1651
        %v2454 = vadd.f32 %v2446, %v1654
        %v2455 = vadd.f32 %v2447, %v1659
        %v2456 = vadd.f32 %v2448, %v1662
        %2457 = vst.msk [vmem:[%s1721 + $0x1] sm:$0xff] %vm900, %v2449
        %2458 = vst.msk [vmem:[%s1721 + $0x11] sm:$0xff] %vm900, %v2450
        %2459 = vst.msk [vmem:[%s1721 + $0x21] sm:$0xff] %vm900, %v2451
        %2460 = vst.msk [vmem:[%s1721 + $0x31] sm:$0xff] %vm900, %v2452
        %2461 = vst.msk [vmem:[%s1721 + $0x41] sm:$0xff] %vm900, %v2453
        %2462 = vst.msk [vmem:[%s1721 + $0x51] sm:$0xff] %vm900, %v2454
        %2463 = vst.msk [vmem:[%s1721 + $0x61] sm:$0xff] %vm900, %v2455
        %2464 = vst.msk [vmem:[%s1721 + $0x71] sm:$0xff] %vm900, %v2456
        %v2465 = vld [vmem:[#allocation2] ss:$2 sm:$0xf]
        %s2466 = scalar_lea.vmem [#allocation2], 32
        %v2467 = vld [vmem:[%s2466] ss:$2 sm:$0xf]
        %s2468 = scalar_lea.vmem [#allocation2], 64
        %v2469 = vld [vmem:[%s2468] ss:$2 sm:$0xf]
        %s2470 = scalar_lea.vmem [#allocation2], 96
        %v2471 = vld [vmem:[%s2470] ss:$2 sm:$0xf]
        %v2472 = vld [vmem:[%s15] sm:$0x1]
        %v2473 = vlaneseq
        %v2474 = vshrl.u32 %v2473, 7
        %v2475 = vsub.s32 0, %v2474
        %v2476 = vrot.slane %v2472, %v2475
        %v2477 = vmul.f32 %v2465, %v2476
        %v2478 = vmul.f32 %v2467, %v2476
        %v2479 = vmul.f32 %v2469, %v2476
        %v2480 = vmul.f32 %v2471, %v2476
        %v2481 = vadd.f32 %v2477, 0.0
        %v2482 = vadd.f32 %v2478, 0.0
        %v2483 = vadd.f32 %v2479, 0.0
        %v2484 = vadd.f32 %v2480, 0.0
        %s2485 = scalar_lea.vmem [#allocation2], 1
        %v2486 = vld [vmem:[%s2485] ss:$2 sm:$0xf]
        %s2487 = scalar_lea.vmem [#allocation2], 33
        %v2488 = vld [vmem:[%s2487] ss:$2 sm:$0xf]
        %s2489 = scalar_lea.vmem [#allocation2], 65
        %v2490 = vld [vmem:[%s2489] ss:$2 sm:$0xf]
        %s2491 = scalar_lea.vmem [#allocation2], 97
        %v2492 = vld [vmem:[%s2491] ss:$2 sm:$0xf]
        %v2493 = vld [vmem:[%s15 + $0x1] sm:$0x1]
        %v2494 = vlaneseq
        %v2495 = vshrl.u32 %v2494, 7
        %v2496 = vsub.s32 0, %v2495
        %v2497 = vrot.slane %v2493, %v2496
        %v2498 = vmul.f32 %v2486, %v2497
        %v2499 = vmul.f32 %v2488, %v2497
        %v2500 = vmul.f32 %v2490, %v2497
        %v2501 = vmul.f32 %v2492, %v2497
        %v2502 = vadd.f32 %v2481, %v2498
        %v2503 = vadd.f32 %v2482, %v2499
        %v2504 = vadd.f32 %v2483, %v2500
        %v2505 = vadd.f32 %v2484, %v2501
        %s2506 = scalar_lea.vmem [#allocation2], 2
        %v2507 = vld [vmem:[%s2506] ss:$2 sm:$0xf]
        %s2508 = scalar_lea.vmem [#allocation2], 34
        %v2509 = vld [vmem:[%s2508] ss:$2 sm:$0xf]
        %s2510 = scalar_lea.vmem [#allocation2], 66
        %v2511 = vld [vmem:[%s2510] ss:$2 sm:$0xf]
        %s2512 = scalar_lea.vmem [#allocation2], 98
        %v2513 = vld [vmem:[%s2512] ss:$2 sm:$0xf]
        %v2514 = vld [vmem:[%s15 + $0x2] sm:$0x1]
        %v2515 = vlaneseq
        %v2516 = vshrl.u32 %v2515, 7
        %v2517 = vsub.s32 0, %v2516
        %v2518 = vrot.slane %v2514, %v2517
        %v2519 = vmul.f32 %v2507, %v2518
        %v2520 = vmul.f32 %v2509, %v2518
        %v2521 = vmul.f32 %v2511, %v2518
        %v2522 = vmul.f32 %v2513, %v2518
        %v2523 = vadd.f32 %v2502, %v2519
        %v2524 = vadd.f32 %v2503, %v2520
        %v2525 = vadd.f32 %v2504, %v2521
        %v2526 = vadd.f32 %v2505, %v2522
        %v2527 = vld [vmem:[%s1721] ss:$2 sm:$0xf]
        %s2528 = scalar_lea.vmem %s1721, 32 [#allocation2]
        %v2529 = vld [vmem:[%s2528] ss:$2 sm:$0xf]
        %s2530 = scalar_lea.vmem %s1721, 64 [#allocation2]
        %v2531 = vld [vmem:[%s2530] ss:$2 sm:$0xf]
        %s2532 = scalar_lea.vmem %s1721, 96 [#allocation2]
        %v2533 = vld [vmem:[%s2532] ss:$2 sm:$0xf]
        %v2534 = vld [vmem:[%s15 + $0x3] sm:$0x1]
        %v2535 = vlaneseq
        %v2536 = vshrl.u32 %v2535, 7
        %v2537 = vsub.s32 0, %v2536
        %v2538 = vrot.slane %v2534, %v2537
        %v2539 = vmul.f32 %v2527, %v2538
        %v2540 = vmul.f32 %v2529, %v2538
        %v2541 = vmul.f32 %v2531, %v2538
        %v2542 = vmul.f32 %v2533, %v2538
        %v2543 = vadd.f32 %v2523, %v2539
        %v2544 = vadd.f32 %v2524, %v2540
        %v2545 = vadd.f32 %v2525, %v2541
        %v2546 = vadd.f32 %v2526, %v2542
        %s2547 = scalar_lea.vmem %s1721, 1 [#allocation2]
        %v2548 = vld [vmem:[%s2547] ss:$2 sm:$0xf]
        %s2549 = scalar_lea.vmem %s1721, 33 [#allocation2]
        %v2550 = vld [vmem:[%s2549] ss:$2 sm:$0xf]
        %s2551 = scalar_lea.vmem %s1721, 65 [#allocation2]
        %v2552 = vld [vmem:[%s2551] ss:$2 sm:$0xf]
        %s2553 = scalar_lea.vmem %s1721, 97 [#allocation2]
        %v2554 = vld [vmem:[%s2553] ss:$2 sm:$0xf]
        %v2555 = vld [vmem:[%s15 + $0x4] sm:$0x1]
        %v2556 = vlaneseq
        %v2557 = vshrl.u32 %v2556, 7
        %v2558 = vsub.s32 0, %v2557
        %v2559 = vrot.slane %v2555, %v2558
        %v2560 = vmul.f32 %v2548, %v2559
        %v2561 = vmul.f32 %v2550, %v2559
        %v2562 = vmul.f32 %v2552, %v2559
        %v2563 = vmul.f32 %v2554, %v2559
        %v2564 = vadd.f32 %v2543, %v2560
        %v2565 = vadd.f32 %v2544, %v2561
        %v2566 = vadd.f32 %v2545, %v2562
        %v2567 = vadd.f32 %v2546, %v2563
        %s2568 = scalar_lea.vmem %s1721, 2 [#allocation2]
        %v2569 = vld [vmem:[%s2568] ss:$2 sm:$0xf]
        %s2570 = scalar_lea.vmem %s1721, 34 [#allocation2]
        %v2571 = vld [vmem:[%s2570] ss:$2 sm:$0xf]
        %s2572 = scalar_lea.vmem %s1721, 66 [#allocation2]
        %v2573 = vld [vmem:[%s2572] ss:$2 sm:$0xf]
        %s2574 = scalar_lea.vmem %s1721, 98 [#allocation2]
        %v2575 = vld [vmem:[%s2574] ss:$2 sm:$0xf]
        %v2576 = vld [vmem:[%s15 + $0x5] sm:$0x1]
        %v2577 = vlaneseq
        %v2578 = vshrl.u32 %v2577, 7
        %v2579 = vsub.s32 0, %v2578
        %v2580 = vrot.slane %v2576, %v2579
        %v2581 = vmul.f32 %v2569, %v2580
        %v2582 = vmul.f32 %v2571, %v2580
        %v2583 = vmul.f32 %v2573, %v2580
        %v2584 = vmul.f32 %v2575, %v2580
        %v2585 = vadd.f32 %v2564, %v2581
        %v2586 = vadd.f32 %v2565, %v2582
        %v2587 = vadd.f32 %v2566, %v2583
        %v2588 = vadd.f32 %v2567, %v2584
        %v2589 = vld [vmem:[%s1904] ss:$2 sm:$0xf]
        %s2590 = scalar_lea.vmem %s1904, 32 [#allocation2]
        %v2591 = vld [vmem:[%s2590] ss:$2 sm:$0xf]
        %s2592 = scalar_lea.vmem %s1904, 64 [#allocation2]
        %v2593 = vld [vmem:[%s2592] ss:$2 sm:$0xf]
        %s2594 = scalar_lea.vmem %s1904, 96 [#allocation2]
        %v2595 = vld [vmem:[%s2594] ss:$2 sm:$0xf]
        %v2596 = vld [vmem:[%s15 + $0x6] sm:$0x1]
        %v2597 = vlaneseq
        %v2598 = vshrl.u32 %v2597, 7
        %v2599 = vsub.s32 0, %v2598
        %v2600 = vrot.slane %v2596, %v2599
        %v2601 = vmul.f32 %v2589, %v2600
        %v2602 = vmul.f32 %v2591, %v2600
        %v2603 = vmul.f32 %v2593, %v2600
        %v2604 = vmul.f32 %v2595, %v2600
        %v2605 = vadd.f32 %v2585, %v2601
        %v2606 = vadd.f32 %v2586, %v2602
        %v2607 = vadd.f32 %v2587, %v2603
        %v2608 = vadd.f32 %v2588, %v2604
        %s2609 = scalar_lea.vmem %s1904, 1 [#allocation2]
        %v2610 = vld [vmem:[%s2609] ss:$2 sm:$0xf]
        %s2611 = scalar_lea.vmem %s1904, 33 [#allocation2]
        %v2612 = vld [vmem:[%s2611] ss:$2 sm:$0xf]
        %s2613 = scalar_lea.vmem %s1904, 65 [#allocation2]
        %v2614 = vld [vmem:[%s2613] ss:$2 sm:$0xf]
        %s2615 = scalar_lea.vmem %s1904, 97 [#allocation2]
        %v2616 = vld [vmem:[%s2615] ss:$2 sm:$0xf]
        %v2617 = vld [vmem:[%s15 + $0x7] sm:$0x1]
        %v2618 = vlaneseq
        %v2619 = vshrl.u32 %v2618, 7
        %v2620 = vsub.s32 0, %v2619
        %v2621 = vrot.slane %v2617, %v2620
        %v2622 = vmul.f32 %v2610, %v2621
        %v2623 = vmul.f32 %v2612, %v2621
        %v2624 = vmul.f32 %v2614, %v2621
        %v2625 = vmul.f32 %v2616, %v2621
        %v2626 = vadd.f32 %v2605, %v2622
        %v2627 = vadd.f32 %v2606, %v2623
        %v2628 = vadd.f32 %v2607, %v2624
        %v2629 = vadd.f32 %v2608, %v2625
        %s2630 = scalar_lea.vmem %s1904, 2 [#allocation2]
        %v2631 = vld [vmem:[%s2630] ss:$2 sm:$0xf]
        %s2632 = scalar_lea.vmem %s1904, 34 [#allocation2]
        %v2633 = vld [vmem:[%s2632] ss:$2 sm:$0xf]
        %s2634 = scalar_lea.vmem %s1904, 66 [#allocation2]
        %v2635 = vld [vmem:[%s2634] ss:$2 sm:$0xf]
        %s2636 = scalar_lea.vmem %s1904, 98 [#allocation2]
        %v2637 = vld [vmem:[%s2636] ss:$2 sm:$0xf]
        %v2638 = vld [vmem:[%s15 + $0x8] sm:$0x1]
        %v2639 = vlaneseq
        %v2640 = vshrl.u32 %v2639, 7
        %v2641 = vsub.s32 0, %v2640
        %v2642 = vrot.slane %v2638, %v2641
        %v2643 = vmul.f32 %v2631, %v2642
        %v2644 = vmul.f32 %v2633, %v2642
        %v2645 = vmul.f32 %v2635, %v2642
        %v2646 = vmul.f32 %v2637, %v2642
        %v2647 = vadd.f32 %v2626, %v2643
        %v2648 = vadd.f32 %v2627, %v2644
        %v2649 = vadd.f32 %v2628, %v2645
        %v2650 = vadd.f32 %v2629, %v2646
        %vm2651 = vcmask 257024
        %2652 = vst.msk [vmem:[#allocation3] sm:$0xf] %vm2651, %v2647
        %2653 = vst.msk [vmem:[#allocation3 + $0x4] sm:$0xf] %vm2651, %v2648
        %2654 = vst.msk [vmem:[#allocation3 + $0x8] sm:$0xf] %vm2651, %v2649
        %2655 = vst.msk [vmem:[#allocation3 + $0xc] sm:$0xf] %vm2651, %v2650
        %v2656 = vld [vmem:[#allocation3] sm:$0xff]
        %v2657 = vld [vmem:[#allocation3 + $0x8] sm:$0xff]
        %v2658 = vsel %vm900, %v2656, 0.0
        %2659 = vadd.xlane.f32.xlu0 %v2658
        %v2660 = vpop.xlane.xlu0 %2659
        %v2661 = vsel %vm900, %v2657, 0.0
        %2662 = vadd.xlane.f32.xlu0 %v2661
        %v2663 = vpop.xlane.xlu0 %2662
        %v2664 = vmul.f32 %v2660, %v2016
        %v2665 = vmul.f32 %v2663, %v2016
        %v2666 = vsub.f32 %v2656, %v2664
        %v2667 = vsub.f32 %v2657, %v2665
        %v2668 = vmul.f32 %v2666, %v2666
        %v2669 = vmul.f32 %v2667, %v2667
        %v2670 = vsel %vm900, %v2668, 0.0
        %2671 = vadd.xlane.f32.xlu0 %v2670
        %v2672 = vpop.xlane.xlu0 %2671
        %v2673 = vsel %vm900, %v2669, 0.0
        %2674 = vadd.xlane.f32.xlu0 %v2673
        %v2675 = vpop.xlane.xlu0 %2674
        %v2676 = vmul.f32 %v2672, %v2016
        %v2677 = vmul.f32 %v2675, %v2016
        %v2678 = vadd.f32 %v2676, 1e-05
        %v2679 = vadd.f32 %v2677, 1e-05
        %v2680 = vrsqrt.pop %v2678
        %v2681 = vrsqrt.pop %v2679
        %v2682 = vmul.f32 %v2666, %v2680
        %v2683 = vmul.f32 %v2667, %v2681
        %v2685 = vlaneseq
        %v2686 = vshrl.u32 %v2685, 7
        %v2687 = vsub.s32 0, %v2686
        %v2688 = vrot.slane %v1709, %v2687
        %v2690 = vmul.f32 %v2682, %v2688
        %v2691 = vmul.f32 %v2683, %v2688
        %v2693 = vlaneseq
        %v2694 = vshrl.u32 %v2693, 7
        %v2695 = vsub.s32 0, %v2694
        %v2696 = vrot.slane %v1710, %v2695
        %v2698 = vadd.f32 %v2690, %v2696
        %v2699 = vadd.f32 %v2691, %v2696
        %v2700 = vadd.f32 %v2698, 3.0
        %v2701 = vadd.f32 %v2699, 3.0
        %v2702 = vmax.f32 %v2700, 0.0
        %v2703 = vmax.f32 %v2701, 0.0
        %v2704 = vmin.f32 %v2702, 6.0
        %v2705 = vmin.f32 %v2703, 6.0
        %v2706 = vmul.f32 %v2704, 0.16666667
        %v2707 = vmul.f32 %v2705, 0.16666667
        %v2708 = vmul.f32 %v2698, %v2706
        %v2709 = vmul.f32 %v2699, %v2707
        %v2710 = vsel %vm900, %v2708, 0.0
        %v2711 = vsel %vm900, %v2709, 0.0
        %v2712 = vadd.f32 %v2710, %v2711
        %v2713 = vrot.slane %v2712, 4
        %v2714 = vadd.f32 %v2712, %v2713
        %v2715 = vrot.slane %v2714, 2
        %v2716 = vadd.f32 %v2714, %v2715
        %v2717 = vrot.slane %v2716, 1
        %v2718 = vadd.f32 %v2716, %v2717
        %v2719 = vrcp.pop 16.0
        %v2720 = vmul.f32 %v2718, %v2719
        %v2721 = vmul.f32 %v1711, %v2720
        %v2722 = vsel %vm900, %v2721, 0.0
        %2723 = vadd.xlane.f32.xlu0 %v2722
        %v2724 = vpop.xlane.xlu0 %2723
        %v2725 = vadd.f32 %v2724, %v1712
        %v2726 = vmax.f32 %v2725, 0.0
        %2728 = vset.pattern.permute.xlu0 0
        %2729 = vperm.xlu0 %2728, %v2726
        %v2730 = vpop.permute.xlu0 %2729
        %v2732 = vmul.f32 %v1713, %v2730
        %v2733 = vsel %vm900, %v2732, 0.0
        %v2734 = vrot.slane %v2733, 4
        %v2735 = vadd.f32 %v2733, %v2734
        %v2736 = vrot.slane %v2735, 2
        %v2737 = vadd.f32 %v2735, %v2736
        %v2738 = vrot.slane %v2737, 1
        %v2739 = vadd.f32 %v2737, %v2738
        %v2740 = vadd.f32 %v2739, %v1714
        %v2741 = vadd.f32 %v2740, 3.0
        %v2742 = vmax.f32 %v2741, 0.0
        %v2743 = vmin.f32 %v2742, 6.0
        %v2744 = vmul.f32 %v2743, 0.16666667
        %v2745 = vlaneseq
        %v2746 = vshrl.u32 %v2745, 7
        %v2747 = vsub.s32 0, %v2746
        %v2748 = vrot.slane %v2744, %v2747
        %v2749 = vmul.f32 %v2708, %v2748
        %v2750 = vmul.f32 %v2709, %v2748
        %v2751 = vpack.c.bf16 %v2750, %v2749
        %v2756 = vunpack.c.l.b16 %v1715
        %v2757 = vunpack.c.l.b16 %v1716
        %v2758 = vunpack.c.l.b16 %v1717
        %v2759 = vunpack.c.l.b16 %v1718
        %v2760 = vpack.c.b16 %v2757, %v2756
        %v2761 = vpack.c.b16 %v2759, %v2758
        %v2765 = vsel %vm900, %v2751, 0
        %2767 = vmatprep.subr.bf16.mxu0 0
        %2768 = vmatpush1.bf16.msra.mxu0 %v2760
        %2769 = vmatprep.subr.bf16.mxu0 0
        %2770 = vmatpush1.bf16.msra.mxu0 %v2761
        %2771 = vmatprep.subr.bf16.mxu0 0
        %2772 = vmatpush1.bf16.msra.mxu0 0
        %2773 = vmatprep.subr.bf16.mxu0 0
        %2774 = vmatpush1.bf16.msra.mxu0 0
        %2775 = vmatprep.subr.bf16.mxu0 0
        %2776 = vmatpush1.bf16.msra.mxu0 0
        %2777 = vmatprep.subr.bf16.mxu0 0
        %2778 = vmatpush1.bf16.msra.mxu0 0
        %2779 = vmatprep.subr.bf16.mxu0 0
        %2780 = vmatpush1.bf16.msra.mxu0 0
        %2781 = vmatprep.subr.bf16.mxu0 0
        %2782 = vmatpush1.bf16.msra.mxu0 0
        %2783 = vmatprep.subr.bf16.mxu0 0
        %2784 = vmatpush1.bf16.msra.mxu0 0
        %2785 = vmatprep.subr.bf16.mxu0 0
        %2786 = vmatpush1.bf16.msra.mxu0 0
        %2787 = vmatprep.subr.bf16.mxu0 0
        %2788 = vmatpush1.bf16.msra.mxu0 0
        %2789 = vmatprep.subr.bf16.mxu0 0
        %2790 = vmatpush1.bf16.msra.mxu0 0
        %2791 = vmatprep.subr.bf16.mxu0 0
        %2792 = vmatpush1.bf16.msra.mxu0 0
        %2793 = vmatprep.subr.bf16.mxu0 0
        %2794 = vmatpush1.bf16.msra.mxu0 0
        %2795 = vmatprep.subr.bf16.mxu0 0
        %2796 = vmatpush1.bf16.msra.mxu0 0
        %2797 = vmatprep.subr.bf16.mxu0 0
        %2798 = vmatpush1.bf16.msra.mxu0 0
        %2799 = vmatprep.mubr.bf16.mxu0 0
        %2800 = vmatmul.mubr.bf16.gmra.mrb[0].mxu0 %v2765
        %v2801 = vpop.f32.mrb[0].mxu0
        %v2802 = vadd.f32 0.0, %v2801
        %v2803 = vpop.f32.mrb[0].mxu0
        %v2804 = vpop.f32.mrb[0].mxu0
        %v2805 = vadd.f32 0.0, %v2804
        %v2806 = vpop.f32.mrb[0].mxu0
        %2807 = vdwg.mxu0
        %v2808 = vsel %vm900, %v2802, 0.0
        %2809 = vadd.xlane.f32.xlu0 %v2808
        %v2810 = vpop.xlane.xlu0 %2809
        %v2811 = vsel %vm900, %v2805, 0.0
        %2812 = vadd.xlane.f32.xlu0 %v2811
        %v2813 = vpop.xlane.xlu0 %2812
        %v2814 = vmul.f32 %v2810, %v2016
        %v2815 = vmul.f32 %v2813, %v2016
        %v2816 = vsub.f32 %v2802, %v2814
        %v2817 = vsub.f32 %v2805, %v2815
        %v2818 = vmul.f32 %v2816, %v2816
        %v2819 = vmul.f32 %v2817, %v2817
        %v2820 = vsel %vm900, %v2818, 0.0
        %2821 = vadd.xlane.f32.xlu0 %v2820
        %v2822 = vpop.xlane.xlu0 %2821
        %v2823 = vsel %vm900, %v2819, 0.0
        %2824 = vadd.xlane.f32.xlu0 %v2823
        %v2825 = vpop.xlane.xlu0 %2824
        %v2826 = vmul.f32 %v2822, %v2016
        %v2827 = vmul.f32 %v2825, %v2016
        %v2828 = vadd.f32 %v2826, 1e-05
        %v2829 = vadd.f32 %v2827, 1e-05
        %v2830 = vrsqrt.pop %v2828
        %v2831 = vrsqrt.pop %v2829
        %v2832 = vmul.f32 %v2816, %v2830
        %v2833 = vmul.f32 %v2817, %v2831
        %v2835 = vlaneseq
        %v2836 = vshrl.u32 %v2835, 7
        %v2837 = vsub.s32 0, %v2836
        %v2838 = vrot.slane %v1719, %v2837
        %v2840 = vmul.f32 %v2832, %v2838
        %v2841 = vmul.f32 %v2833, %v2838
        %v2843 = vlaneseq
        %v2844 = vshrl.u32 %v2843, 7
        %v2845 = vsub.s32 0, %v2844
        %v2846 = vrot.slane %v1720, %v2845
        %v2848 = vadd.f32 %v2840, %v2846
        %v2849 = vadd.f32 %v2841, %v2846
        %2850 = vst.msk [vmem:[%s1721 + $0x1] sm:$0xff] %vm900, %v1667
        %2851 = vst.msk [vmem:[%s1721 + $0x11] sm:$0xff] %vm900, %v1670
        %2852 = vst.msk [vmem:[%s1721 + $0x21] sm:$0xff] %vm900, %v1675
        %2853 = vst.msk [vmem:[%s1721 + $0x31] sm:$0xff] %vm900, %v1678
        %2854 = vst.msk [vmem:[%s1721 + $0x41] sm:$0xff] %vm900, %v1683
        %2855 = vst.msk [vmem:[%s1721 + $0x51] sm:$0xff] %vm900, %v1686
        %2856 = vst.msk [vmem:[%s1721 + $0x61] sm:$0xff] %vm900, %v1691
        %2857 = vst.msk [vmem:[%s1721 + $0x71] sm:$0xff] %vm900, %v1694
        %v2858 = vld [vmem:[#allocation2] sm:$0xff]
        %v2859 = vld [vmem:[#allocation2 + $0x10] sm:$0xff]
        %v2860 = vld [vmem:[#allocation2 + $0x20] sm:$0xff]
        %v2861 = vld [vmem:[#allocation2 + $0x30] sm:$0xff]
        %v2862 = vld [vmem:[#allocation2 + $0x40] sm:$0xff]
        %v2863 = vld [vmem:[#allocation2 + $0x50] sm:$0xff]
        %v2864 = vld [vmem:[#allocation2 + $0x60] sm:$0xff]
        %v2865 = vld [vmem:[#allocation2 + $0x70] sm:$0xff]
        %v2866 = vld [vmem:[%s5] sm:$0x1]
        %v2867 = vlaneseq
        %v2868 = vshrl.u32 %v2867, 7
        %v2869 = vsub.s32 0, %v2868
        %v2870 = vrot.slane %v2866, %v2869
        %v2871 = vmul.f32 %v2858, %v2870
        %v2872 = vmul.f32 %v2859, %v2870
        %v2873 = vmul.f32 %v2860, %v2870
        %v2874 = vmul.f32 %v2861, %v2870
        %v2875 = vmul.f32 %v2862, %v2870
        %v2876 = vmul.f32 %v2863, %v2870
        %v2877 = vmul.f32 %v2864, %v2870
        %v2878 = vmul.f32 %v2865, %v2870
        %v2879 = vadd.f32 %v2871, 0.0
        %v2880 = vadd.f32 %v2872, 0.0
        %v2881 = vadd.f32 %v2873, 0.0
        %v2882 = vadd.f32 %v2874, 0.0
        %v2883 = vadd.f32 %v2875, 0.0
        %v2884 = vadd.f32 %v2876, 0.0
        %v2885 = vadd.f32 %v2877, 0.0
        %v2886 = vadd.f32 %v2878, 0.0
        %v2887 = vld [vmem:[#allocation2 + $0x1] sm:$0xff]
        %v2888 = vld [vmem:[#allocation2 + $0x11] sm:$0xff]
        %v2889 = vld [vmem:[#allocation2 + $0x21] sm:$0xff]
        %v2890 = vld [vmem:[#allocation2 + $0x31] sm:$0xff]
        %v2891 = vld [vmem:[#allocation2 + $0x41] sm:$0xff]
        %v2892 = vld [vmem:[#allocation2 + $0x51] sm:$0xff]
        %v2893 = vld [vmem:[#allocation2 + $0x61] sm:$0xff]
        %v2894 = vld [vmem:[#allocation2 + $0x71] sm:$0xff]
        %v2895 = vld [vmem:[%s5 + $0x1] sm:$0x1]
        %v2896 = vlaneseq
        %v2897 = vshrl.u32 %v2896, 7
        %v2898 = vsub.s32 0, %v2897
        %v2899 = vrot.slane %v2895, %v2898
        %v2900 = vmul.f32 %v2887, %v2899
        %v2901 = vmul.f32 %v2888, %v2899
        %v2902 = vmul.f32 %v2889, %v2899
        %v2903 = vmul.f32 %v2890, %v2899
        %v2904 = vmul.f32 %v2891, %v2899
        %v2905 = vmul.f32 %v2892, %v2899
        %v2906 = vmul.f32 %v2893, %v2899
        %v2907 = vmul.f32 %v2894, %v2899
        %v2908 = vadd.f32 %v2879, %v2900
        %v2909 = vadd.f32 %v2880, %v2901
        %v2910 = vadd.f32 %v2881, %v2902
        %v2911 = vadd.f32 %v2882, %v2903
        %v2912 = vadd.f32 %v2883, %v2904
        %v2913 = vadd.f32 %v2884, %v2905
        %v2914 = vadd.f32 %v2885, %v2906
        %v2915 = vadd.f32 %v2886, %v2907
        %v2916 = vld [vmem:[#allocation2 + $0x2] sm:$0xff]
        %v2917 = vld [vmem:[#allocation2 + $0x12] sm:$0xff]
        %v2918 = vld [vmem:[#allocation2 + $0x22] sm:$0xff]
        %v2919 = vld [vmem:[#allocation2 + $0x32] sm:$0xff]
        %v2920 = vld [vmem:[#allocation2 + $0x42] sm:$0xff]
        %v2921 = vld [vmem:[#allocation2 + $0x52] sm:$0xff]
        %v2922 = vld [vmem:[#allocation2 + $0x62] sm:$0xff]
        %v2923 = vld [vmem:[#allocation2 + $0x72] sm:$0xff]
        %v2924 = vld [vmem:[%s5 + $0x2] sm:$0x1]
        %v2925 = vlaneseq
        %v2926 = vshrl.u32 %v2925, 7
        %v2927 = vsub.s32 0, %v2926
        %v2928 = vrot.slane %v2924, %v2927
        %v2929 = vmul.f32 %v2916, %v2928
        %v2930 = vmul.f32 %v2917, %v2928
        %v2931 = vmul.f32 %v2918, %v2928
        %v2932 = vmul.f32 %v2919, %v2928
        %v2933 = vmul.f32 %v2920, %v2928
        %v2934 = vmul.f32 %v2921, %v2928
        %v2935 = vmul.f32 %v2922, %v2928
        %v2936 = vmul.f32 %v2923, %v2928
        %v2937 = vadd.f32 %v2908, %v2929
        %v2938 = vadd.f32 %v2909, %v2930
        %v2939 = vadd.f32 %v2910, %v2931
        %v2940 = vadd.f32 %v2911, %v2932
        %v2941 = vadd.f32 %v2912, %v2933
        %v2942 = vadd.f32 %v2913, %v2934
        %v2943 = vadd.f32 %v2914, %v2935
        %v2944 = vadd.f32 %v2915, %v2936
        %v2945 = vld [vmem:[%s1721] sm:$0xff]
        %v2946 = vld [vmem:[%s1721 + $0x10] sm:$0xff]
        %v2947 = vld [vmem:[%s1721 + $0x20] sm:$0xff]
        %v2948 = vld [vmem:[%s1721 + $0x30] sm:$0xff]
        %v2949 = vld [vmem:[%s1721 + $0x40] sm:$0xff]
        %v2950 = vld [vmem:[%s1721 + $0x50] sm:$0xff]
        %v2951 = vld [vmem:[%s1721 + $0x60] sm:$0xff]
        %v2952 = vld [vmem:[%s1721 + $0x70] sm:$0xff]
        %v2953 = vld [vmem:[%s5 + $0x3] sm:$0x1]
        %v2954 = vlaneseq
        %v2955 = vshrl.u32 %v2954, 7
        %v2956 = vsub.s32 0, %v2955
        %v2957 = vrot.slane %v2953, %v2956
        %v2958 = vmul.f32 %v2945, %v2957
        %v2959 = vmul.f32 %v2946, %v2957
        %v2960 = vmul.f32 %v2947, %v2957
        %v2961 = vmul.f32 %v2948, %v2957
        %v2962 = vmul.f32 %v2949, %v2957
        %v2963 = vmul.f32 %v2950, %v2957
        %v2964 = vmul.f32 %v2951, %v2957
        %v2965 = vmul.f32 %v2952, %v2957
        %v2966 = vadd.f32 %v2937, %v2958
        %v2967 = vadd.f32 %v2938, %v2959
        %v2968 = vadd.f32 %v2939, %v2960
        %v2969 = vadd.f32 %v2940, %v2961
        %v2970 = vadd.f32 %v2941, %v2962
        %v2971 = vadd.f32 %v2942, %v2963
        %v2972 = vadd.f32 %v2943, %v2964
        %v2973 = vadd.f32 %v2944, %v2965
        %v2974 = vld [vmem:[%s1721 + $0x1] sm:$0xff]
        %v2975 = vld [vmem:[%s1721 + $0x11] sm:$0xff]
        %v2976 = vld [vmem:[%s1721 + $0x21] sm:$0xff]
        %v2977 = vld [vmem:[%s1721 + $0x31] sm:$0xff]
        %v2978 = vld [vmem:[%s1721 + $0x41] sm:$0xff]
        %v2979 = vld [vmem:[%s1721 + $0x51] sm:$0xff]
        %v2980 = vld [vmem:[%s1721 + $0x61] sm:$0xff]
        %v2981 = vld [vmem:[%s1721 + $0x71] sm:$0xff]
        %v2982 = vld [vmem:[%s5 + $0x4] sm:$0x1]
        %v2983 = vlaneseq
        %v2984 = vshrl.u32 %v2983, 7
        %v2985 = vsub.s32 0, %v2984
        %v2986 = vrot.slane %v2982, %v2985
        %v2987 = vmul.f32 %v2974, %v2986
        %v2988 = vmul.f32 %v2975, %v2986
        %v2989 = vmul.f32 %v2976, %v2986
        %v2990 = vmul.f32 %v2977, %v2986
        %v2991 = vmul.f32 %v2978, %v2986
        %v2992 = vmul.f32 %v2979, %v2986
        %v2993 = vmul.f32 %v2980, %v2986
        %v2994 = vmul.f32 %v2981, %v2986
        %v2995 = vadd.f32 %v2966, %v2987
        %v2996 = vadd.f32 %v2967, %v2988
        %v2997 = vadd.f32 %v2968, %v2989
        %v2998 = vadd.f32 %v2969, %v2990
        %v2999 = vadd.f32 %v2970, %v2991
        %v3000 = vadd.f32 %v2971, %v2992
        %v3001 = vadd.f32 %v2972, %v2993
        %v3002 = vadd.f32 %v2973, %v2994
        %v3003 = vld [vmem:[%s1721 + $0x2] sm:$0xff]
        %v3004 = vld [vmem:[%s1721 + $0x12] sm:$0xff]
        %v3005 = vld [vmem:[%s1721 + $0x22] sm:$0xff]
        %v3006 = vld [vmem:[%s1721 + $0x32] sm:$0xff]
        %v3007 = vld [vmem:[%s1721 + $0x42] sm:$0xff]
        %v3008 = vld [vmem:[%s1721 + $0x52] sm:$0xff]
        %v3009 = vld [vmem:[%s1721 + $0x62] sm:$0xff]
        %v3010 = vld [vmem:[%s1721 + $0x72] sm:$0xff]
        %v3011 = vld [vmem:[%s5 + $0x5] sm:$0x1]
        %v3012 = vlaneseq
        %v3013 = vshrl.u32 %v3012, 7
        %v3014 = vsub.s32 0, %v3013
        %v3015 = vrot.slane %v3011, %v3014
        %v3016 = vmul.f32 %v3003, %v3015
        %v3017 = vmul.f32 %v3004, %v3015
        %v3018 = vmul.f32 %v3005, %v3015
        %v3019 = vmul.f32 %v3006, %v3015
        %v3020 = vmul.f32 %v3007, %v3015
        %v3021 = vmul.f32 %v3008, %v3015
        %v3022 = vmul.f32 %v3009, %v3015
        %v3023 = vmul.f32 %v3010, %v3015
        %v3024 = vadd.f32 %v2995, %v3016
        %v3025 = vadd.f32 %v2996, %v3017
        %v3026 = vadd.f32 %v2997, %v3018
        %v3027 = vadd.f32 %v2998, %v3019
        %v3028 = vadd.f32 %v2999, %v3020
        %v3029 = vadd.f32 %v3000, %v3021
        %v3030 = vadd.f32 %v3001, %v3022
        %v3031 = vadd.f32 %v3002, %v3023
        %v3032 = vld [vmem:[%s1904] sm:$0xff]
        %v3033 = vld [vmem:[%s1904 + $0x10] sm:$0xff]
        %v3034 = vld [vmem:[%s1904 + $0x20] sm:$0xff]
        %v3035 = vld [vmem:[%s1904 + $0x30] sm:$0xff]
        %v3036 = vld [vmem:[%s1904 + $0x40] sm:$0xff]
        %v3037 = vld [vmem:[%s1904 + $0x50] sm:$0xff]
        %v3038 = vld [vmem:[%s1904 + $0x60] sm:$0xff]
        %v3039 = vld [vmem:[%s1904 + $0x70] sm:$0xff]
        %v3040 = vld [vmem:[%s5 + $0x6] sm:$0x1]
        %v3041 = vlaneseq
        %v3042 = vshrl.u32 %v3041, 7
        %v3043 = vsub.s32 0, %v3042
        %v3044 = vrot.slane %v3040, %v3043
        %v3045 = vmul.f32 %v3032, %v3044
        %v3046 = vmul.f32 %v3033, %v3044
        %v3047 = vmul.f32 %v3034, %v3044
        %v3048 = vmul.f32 %v3035, %v3044
        %v3049 = vmul.f32 %v3036, %v3044
        %v3050 = vmul.f32 %v3037, %v3044
        %v3051 = vmul.f32 %v3038, %v3044
        %v3052 = vmul.f32 %v3039, %v3044
        %v3053 = vadd.f32 %v3024, %v3045
        %v3054 = vadd.f32 %v3025, %v3046
        %v3055 = vadd.f32 %v3026, %v3047
        %v3056 = vadd.f32 %v3027, %v3048
        %v3057 = vadd.f32 %v3028, %v3049
        %v3058 = vadd.f32 %v3029, %v3050
        %v3059 = vadd.f32 %v3030, %v3051
        %v3060 = vadd.f32 %v3031, %v3052
        %v3061 = vld [vmem:[%s1904 + $0x1] sm:$0xff]
        %v3062 = vld [vmem:[%s1904 + $0x11] sm:$0xff]
        %v3063 = vld [vmem:[%s1904 + $0x21] sm:$0xff]
        %v3064 = vld [vmem:[%s1904 + $0x31] sm:$0xff]
        %v3065 = vld [vmem:[%s1904 + $0x41] sm:$0xff]
        %v3066 = vld [vmem:[%s1904 + $0x51] sm:$0xff]
        %v3067 = vld [vmem:[%s1904 + $0x61] sm:$0xff]
        %v3068 = vld [vmem:[%s1904 + $0x71] sm:$0xff]
        %v3069 = vld [vmem:[%s5 + $0x7] sm:$0x1]
        %v3070 = vlaneseq
        %v3071 = vshrl.u32 %v3070, 7
        %v3072 = vsub.s32 0, %v3071
        %v3073 = vrot.slane %v3069, %v3072
        %v3074 = vmul.f32 %v3061, %v3073
        %v3075 = vmul.f32 %v3062, %v3073
        %v3076 = vmul.f32 %v3063, %v3073
        %v3077 = vmul.f32 %v3064, %v3073
        %v3078 = vmul.f32 %v3065, %v3073
        %v3079 = vmul.f32 %v3066, %v3073
        %v3080 = vmul.f32 %v3067, %v3073
        %v3081 = vmul.f32 %v3068, %v3073
        %v3082 = vadd.f32 %v3053, %v3074
        %v3083 = vadd.f32 %v3054, %v3075
        %v3084 = vadd.f32 %v3055, %v3076
        %v3085 = vadd.f32 %v3056, %v3077
        %v3086 = vadd.f32 %v3057, %v3078
        %v3087 = vadd.f32 %v3058, %v3079
        %v3088 = vadd.f32 %v3059, %v3080
        %v3089 = vadd.f32 %v3060, %v3081
        %v3090 = vld [vmem:[%s1904 + $0x2] sm:$0xff]
        %v3091 = vld [vmem:[%s1904 + $0x12] sm:$0xff]
        %v3092 = vld [vmem:[%s1904 + $0x22] sm:$0xff]
        %v3093 = vld [vmem:[%s1904 + $0x32] sm:$0xff]
        %v3094 = vld [vmem:[%s1904 + $0x42] sm:$0xff]
        %v3095 = vld [vmem:[%s1904 + $0x52] sm:$0xff]
        %v3096 = vld [vmem:[%s1904 + $0x62] sm:$0xff]
        %v3097 = vld [vmem:[%s1904 + $0x72] sm:$0xff]
        %v3098 = vld [vmem:[%s5 + $0x8] sm:$0x1]
        %v3099 = vlaneseq
        %v3100 = vshrl.u32 %v3099, 7
        %v3101 = vsub.s32 0, %v3100
        %v3102 = vrot.slane %v3098, %v3101
        %v3103 = vmul.f32 %v3090, %v3102
        %v3104 = vmul.f32 %v3091, %v3102
        %v3105 = vmul.f32 %v3092, %v3102
        %v3106 = vmul.f32 %v3093, %v3102
        %v3107 = vmul.f32 %v3094, %v3102
        %v3108 = vmul.f32 %v3095, %v3102
        %v3109 = vmul.f32 %v3096, %v3102
        %v3110 = vmul.f32 %v3097, %v3102
        %v3111 = vadd.f32 %v3082, %v3103
        %v3112 = vadd.f32 %v3083, %v3104
        %v3113 = vadd.f32 %v3084, %v3105
        %v3114 = vadd.f32 %v3085, %v3106
        %v3115 = vadd.f32 %v3086, %v3107
        %v3116 = vadd.f32 %v3087, %v3108
        %v3117 = vadd.f32 %v3088, %v3109
        %v3118 = vadd.f32 %v3089, %v3110
        %v3119 = vsel %vm900, %v3111, 0.0
        %3120 = vadd.xlane.f32.xlu0 %v3119
        %v3121 = vpop.xlane.xlu0 %3120
        %v3122 = vsel %vm900, %v3112, 0.0
        %3123 = vadd.xlane.f32.xlu0 %v3122
        %v3124 = vpop.xlane.xlu0 %3123
        %v3125 = vsel %vm900, %v3113, 0.0
        %3126 = vadd.xlane.f32.xlu0 %v3125
        %v3127 = vpop.xlane.xlu0 %3126
        %v3128 = vsel %vm900, %v3114, 0.0
        %3129 = vadd.xlane.f32.xlu0 %v3128
        %v3130 = vpop.xlane.xlu0 %3129
        %v3131 = vsel %vm900, %v3115, 0.0
        %3132 = vadd.xlane.f32.xlu0 %v3131
        %v3133 = vpop.xlane.xlu0 %3132
        %v3134 = vsel %vm900, %v3116, 0.0
        %3135 = vadd.xlane.f32.xlu0 %v3134
        %v3136 = vpop.xlane.xlu0 %3135
        %v3137 = vsel %vm900, %v3117, 0.0
        %3138 = vadd.xlane.f32.xlu0 %v3137
        %v3139 = vpop.xlane.xlu0 %3138
        %v3140 = vsel %vm900, %v3118, 0.0
        %3141 = vadd.xlane.f32.xlu0 %v3140
        %v3142 = vpop.xlane.xlu0 %3141
        %v3143 = vmul.f32 %v3121, %v2016
        %v3144 = vmul.f32 %v3124, %v2016
        %v3145 = vmul.f32 %v3127, %v2016
        %v3146 = vmul.f32 %v3130, %v2016
        %v3147 = vmul.f32 %v3133, %v2016
        %v3148 = vmul.f32 %v3136, %v2016
        %v3149 = vmul.f32 %v3139, %v2016
        %v3150 = vmul.f32 %v3142, %v2016
        %v3151 = vsub.f32 %v3111, %v3143
        %v3152 = vsub.f32 %v3112, %v3144
        %v3153 = vsub.f32 %v3113, %v3145
        %v3154 = vsub.f32 %v3114, %v3146
        %v3155 = vsub.f32 %v3115, %v3147
        %v3156 = vsub.f32 %v3116, %v3148
        %v3157 = vsub.f32 %v3117, %v3149
        %v3158 = vsub.f32 %v3118, %v3150
        %v3159 = vmul.f32 %v3151, %v3151
        %v3160 = vmul.f32 %v3152, %v3152
        %v3161 = vmul.f32 %v3153, %v3153
        %v3162 = vmul.f32 %v3154, %v3154
        %v3163 = vmul.f32 %v3155, %v3155
        %v3164 = vmul.f32 %v3156, %v3156
        %v3165 = vmul.f32 %v3157, %v3157
        %v3166 = vmul.f32 %v3158, %v3158
        %v3167 = vsel %vm900, %v3159, 0.0
        %3168 = vadd.xlane.f32.xlu0 %v3167
        %v3169 = vpop.xlane.xlu0 %3168
        %v3170 = vsel %vm900, %v3160, 0.0
        %3171 = vadd.xlane.f32.xlu0 %v3170
        %v3172 = vpop.xlane.xlu0 %3171
        %v3173 = vsel %vm900, %v3161, 0.0
        %3174 = vadd.xlane.f32.xlu0 %v3173
        %v3175 = vpop.xlane.xlu0 %3174
        %v3176 = vsel %vm900, %v3162, 0.0
        %3177 = vadd.xlane.f32.xlu0 %v3176
        %v3178 = vpop.xlane.xlu0 %3177
        %v3179 = vsel %vm900, %v3163, 0.0
        %3180 = vadd.xlane.f32.xlu0 %v3179
        %v3181 = vpop.xlane.xlu0 %3180
        %v3182 = vsel %vm900, %v3164, 0.0
        %3183 = vadd.xlane.f32.xlu0 %v3182
        %v3184 = vpop.xlane.xlu0 %3183
        %v3185 = vsel %vm900, %v3165, 0.0
        %3186 = vadd.xlane.f32.xlu0 %v3185
        %v3187 = vpop.xlane.xlu0 %3186
        %v3188 = vsel %vm900, %v3166, 0.0
        %3189 = vadd.xlane.f32.xlu0 %v3188
        %v3190 = vpop.xlane.xlu0 %3189
        %v3191 = vmul.f32 %v3169, %v2016
        %v3192 = vmul.f32 %v3172, %v2016
        %v3193 = vmul.f32 %v3175, %v2016
        %v3194 = vmul.f32 %v3178, %v2016
        %v3195 = vmul.f32 %v3181, %v2016
        %v3196 = vmul.f32 %v3184, %v2016
        %v3197 = vmul.f32 %v3187, %v2016
        %v3198 = vmul.f32 %v3190, %v2016
        %v3199 = vadd.f32 %v3191, 1e-05
        %v3200 = vadd.f32 %v3192, 1e-05
        %v3201 = vadd.f32 %v3193, 1e-05
        %v3202 = vadd.f32 %v3194, 1e-05
        %v3203 = vadd.f32 %v3195, 1e-05
        %v3204 = vadd.f32 %v3196, 1e-05
        %v3205 = vadd.f32 %v3197, 1e-05
        %v3206 = vadd.f32 %v3198, 1e-05
        %v3207 = vrsqrt.pop %v3199
        %v3208 = vrsqrt.pop %v3200
        %v3209 = vrsqrt.pop %v3201
        %v3210 = vrsqrt.pop %v3202
        %v3211 = vrsqrt.pop %v3203
        %v3212 = vrsqrt.pop %v3204
        %v3213 = vrsqrt.pop %v3205
        %v3214 = vrsqrt.pop %v3206
        %v3215 = vmul.f32 %v3151, %v3207
        %v3216 = vmul.f32 %v3152, %v3208
        %v3217 = vmul.f32 %v3153, %v3209
        %v3218 = vmul.f32 %v3154, %v3210
        %v3219 = vmul.f32 %v3155, %v3211
        %v3220 = vmul.f32 %v3156, %v3212
        %v3221 = vmul.f32 %v3157, %v3213
        %v3222 = vmul.f32 %v3158, %v3214
        %v3223 = vmul.f32 %v3215, %v2101
        %v3224 = vmul.f32 %v3216, %v2101
        %v3225 = vmul.f32 %v3217, %v2101
        %v3226 = vmul.f32 %v3218, %v2101
        %v3227 = vmul.f32 %v3219, %v2101
        %v3228 = vmul.f32 %v3220, %v2101
        %v3229 = vmul.f32 %v3221, %v2101
        %v3230 = vmul.f32 %v3222, %v2101
        %v3231 = vadd.f32 %v3223, %v2115
        %v3232 = vadd.f32 %v3224, %v2115
        %v3233 = vadd.f32 %v3225, %v2115
        %v3234 = vadd.f32 %v3226, %v2115
        %v3235 = vadd.f32 %v3227, %v2115
        %v3236 = vadd.f32 %v3228, %v2115
        %v3237 = vadd.f32 %v3229, %v2115
        %v3238 = vadd.f32 %v3230, %v2115
        %v3239 = vadd.f32 %v3231, 3.0
        %v3240 = vadd.f32 %v3232, 3.0
        %v3241 = vadd.f32 %v3233, 3.0
        %v3242 = vadd.f32 %v3234, 3.0
        %v3243 = vadd.f32 %v3235, 3.0
        %v3244 = vadd.f32 %v3236, 3.0
        %v3245 = vadd.f32 %v3237, 3.0
        %v3246 = vadd.f32 %v3238, 3.0
        %v3247 = vmax.f32 %v3239, 0.0
        %v3248 = vmax.f32 %v3240, 0.0
        %v3249 = vmax.f32 %v3241, 0.0
        %v3250 = vmax.f32 %v3242, 0.0
        %v3251 = vmax.f32 %v3243, 0.0
        %v3252 = vmax.f32 %v3244, 0.0
        %v3253 = vmax.f32 %v3245, 0.0
        %v3254 = vmax.f32 %v3246, 0.0
        %v3255 = vmin.f32 %v3247, 6.0
        %v3256 = vmin.f32 %v3248, 6.0
        %v3257 = vmin.f32 %v3249, 6.0
        %v3258 = vmin.f32 %v3250, 6.0
        %v3259 = vmin.f32 %v3251, 6.0
        %v3260 = vmin.f32 %v3252, 6.0
        %v3261 = vmin.f32 %v3253, 6.0
        %v3262 = vmin.f32 %v3254, 6.0
        %v3263 = vmul.f32 %v3255, 0.16666667
        %v3264 = vmul.f32 %v3256, 0.16666667
        %v3265 = vmul.f32 %v3257, 0.16666667
        %v3266 = vmul.f32 %v3258, 0.16666667
        %v3267 = vmul.f32 %v3259, 0.16666667
        %v3268 = vmul.f32 %v3260, 0.16666667
        %v3269 = vmul.f32 %v3261, 0.16666667
        %v3270 = vmul.f32 %v3262, 0.16666667
        %v3271 = vmul.f32 %v3231, %v3263
        %v3272 = vmul.f32 %v3232, %v3264
        %v3273 = vmul.f32 %v3233, %v3265
        %v3274 = vmul.f32 %v3234, %v3266
        %v3275 = vmul.f32 %v3235, %v3267
        %v3276 = vmul.f32 %v3236, %v3268
        %v3277 = vmul.f32 %v3237, %v3269
        %v3278 = vmul.f32 %v3238, %v3270
        %v3279 = vsel %vm900, %v3271, 0.0
        %v3280 = vsel %vm900, %v3272, 0.0
        %v3281 = vadd.f32 %v3279, %v3280
        %v3282 = vsel %vm900, %v3273, 0.0
        %v3283 = vadd.f32 %v3281, %v3282
        %v3284 = vsel %vm900, %v3274, 0.0
        %v3285 = vadd.f32 %v3283, %v3284
        %v3286 = vsel %vm900, %v3275, 0.0
        %v3287 = vadd.f32 %v3285, %v3286
        %v3288 = vsel %vm900, %v3276, 0.0
        %v3289 = vadd.f32 %v3287, %v3288
        %v3290 = vsel %vm900, %v3277, 0.0
        %v3291 = vadd.f32 %v3289, %v3290
        %v3292 = vsel %vm900, %v3278, 0.0
        %v3293 = vadd.f32 %v3291, %v3292
        %v3294 = vrot.slane %v3293, 4
        %v3295 = vadd.f32 %v3293, %v3294
        %v3296 = vrot.slane %v3295, 2
        %v3297 = vadd.f32 %v3295, %v3296
        %v3298 = vrot.slane %v3297, 1
        %v3299 = vadd.f32 %v3297, %v3298
        %v3300 = vmul.f32 %v3299, %v2186
        %v3301 = vmul.f32 %v1699, %v3300
        %v3302 = vsel %vm900, %v3301, 0.0
        %3303 = vadd.xlane.f32.xlu0 %v3302
        %v3304 = vpop.xlane.xlu0 %3303
        %v3305 = vadd.f32 %v3304, %v1700
        %v3306 = vmax.f32 %v3305, 0.0
        %3308 = vset.pattern.permute.xlu0 0
        %3309 = vperm.xlu0 %3308, %v3306
        %v3310 = vpop.permute.xlu0 %3309
        %v3312 = vmul.f32 %v1701, %v3310
        %v3313 = vsel %vm900, %v3312, 0.0
        %v3314 = vrot.slane %v3313, 4
        %v3315 = vadd.f32 %v3313, %v3314
        %v3316 = vrot.slane %v3315, 2
        %v3317 = vadd.f32 %v3315, %v3316
        %v3318 = vrot.slane %v3317, 1
        %v3319 = vadd.f32 %v3317, %v3318
        %v3320 = vadd.f32 %v3319, %v1702
        %v3321 = vadd.f32 %v3320, 3.0
        %v3322 = vmax.f32 %v3321, 0.0
        %v3323 = vmin.f32 %v3322, 6.0
        %v3324 = vmul.f32 %v3323, 0.16666667
        %v3325 = vlaneseq
        %v3326 = vshrl.u32 %v3325, 7
        %v3327 = vsub.s32 0, %v3326
        %v3328 = vrot.slane %v3324, %v3327
        %v3329 = vmul.f32 %v3271, %v3328
        %v3330 = vmul.f32 %v3272, %v3328
        %v3331 = vmul.f32 %v3273, %v3328
        %v3332 = vmul.f32 %v3274, %v3328
        %v3333 = vmul.f32 %v3275, %v3328
        %v3334 = vmul.f32 %v3276, %v3328
        %v3335 = vmul.f32 %v3277, %v3328
        %v3336 = vmul.f32 %v3278, %v3328
        %v3337 = vpack.c.bf16 %v3330, %v3329
        %v3338 = vpack.c.bf16 %v3332, %v3331
        %v3339 = vpack.c.bf16 %v3334, %v3333
        %v3340 = vpack.c.bf16 %v3336, %v3335
        %v3342 = vsel %vm900, %v3337, 0
        %v3345 = vsel %vm900, %v3338, 0
        %v3348 = vsel %vm900, %v3339, 0
        %v3351 = vsel %vm900, %v3340, 0
        %3353 = vmatprep.subr.bf16.mxu0 0
        %3354 = vmatpush1.bf16.msra.mxu0 %v2236
        %3355 = vmatprep.subr.bf16.mxu0 0
        %3356 = vmatpush1.bf16.msra.mxu0 %v2237
        %3357 = vmatprep.subr.bf16.mxu0 0
        %3358 = vmatpush1.bf16.msra.mxu0 0
        %3359 = vmatprep.subr.bf16.mxu0 0
        %3360 = vmatpush1.bf16.msra.mxu0 0
        %3361 = vmatprep.subr.bf16.mxu0 0
        %3362 = vmatpush1.bf16.msra.mxu0 0
        %3363 = vmatprep.subr.bf16.mxu0 0
        %3364 = vmatpush1.bf16.msra.mxu0 0
        %3365 = vmatprep.subr.bf16.mxu0 0
        %3366 = vmatpush1.bf16.msra.mxu0 0
        %3367 = vmatprep.subr.bf16.mxu0 0
        %3368 = vmatpush1.bf16.msra.mxu0 0
        %3369 = vmatprep.subr.bf16.mxu0 0
        %3370 = vmatpush1.bf16.msra.mxu0 0
        %3371 = vmatprep.subr.bf16.mxu0 0
        %3372 = vmatpush1.bf16.msra.mxu0 0
        %3373 = vmatprep.subr.bf16.mxu0 0
        %3374 = vmatpush1.bf16.msra.mxu0 0
        %3375 = vmatprep.subr.bf16.mxu0 0
        %3376 = vmatpush1.bf16.msra.mxu0 0
        %3377 = vmatprep.subr.bf16.mxu0 0
        %3378 = vmatpush1.bf16.msra.mxu0 0
        %3379 = vmatprep.subr.bf16.mxu0 0
        %3380 = vmatpush1.bf16.msra.mxu0 0
        %3381 = vmatprep.subr.bf16.mxu0 0
        %3382 = vmatpush1.bf16.msra.mxu0 0
        %3383 = vmatprep.subr.bf16.mxu0 0
        %3384 = vmatpush1.bf16.msra.mxu0 0
        %3385 = vmatprep.mubr.bf16.mxu0 0
        %3386 = vmatmul.mubr.bf16.gmra.mrb[0].mxu0 %v3342
        %v3387 = vpop.f32.mrb[0].mxu0
        %v3388 = vadd.f32 0.0, %v3387
        %v3389 = vpop.f32.mrb[0].mxu0
        %v3390 = vpop.f32.mrb[0].mxu0
        %v3391 = vadd.f32 0.0, %v3390
        %v3392 = vpop.f32.mrb[0].mxu0
        %3393 = vmatprep.mubr.bf16.mxu0 0
        %3394 = vmatmul.mubr.bf16.gmra.mrb[0].mxu0 %v3345
        %v3395 = vpop.f32.mrb[0].mxu0
        %v3396 = vadd.f32 0.0, %v3395
        %v3397 = vpop.f32.mrb[0].mxu0
        %v3398 = vpop.f32.mrb[0].mxu0
        %v3399 = vadd.f32 0.0, %v3398
        %v3400 = vpop.f32.mrb[0].mxu0
        %3401 = vmatprep.mubr.bf16.mxu0 0
        %3402 = vmatmul.mubr.bf16.gmra.mrb[0].mxu0 %v3348
        %v3403 = vpop.f32.mrb[0].mxu0
        %v3404 = vadd.f32 0.0, %v3403
        %v3405 = vpop.f32.mrb[0].mxu0
        %v3406 = vpop.f32.mrb[0].mxu0
        %v3407 = vadd.f32 0.0, %v3406
        %v3408 = vpop.f32.mrb[0].mxu0
        %3409 = vmatprep.mubr.bf16.mxu0 0
        %3410 = vmatmul.mubr.bf16.gmra.mrb[0].mxu0 %v3351
        %v3411 = vpop.f32.mrb[0].mxu0
        %v3412 = vadd.f32 0.0, %v3411
        %v3413 = vpop.f32.mrb[0].mxu0
        %v3414 = vpop.f32.mrb[0].mxu0
        %v3415 = vadd.f32 0.0, %v3414
        %v3416 = vpop.f32.mrb[0].mxu0
        %3417 = vdwg.mxu0
        %v3418 = vsel %vm900, %v3388, 0.0
        %3419 = vadd.xlane.f32.xlu0 %v3418
        %v3420 = vpop.xlane.xlu0 %3419
        %v3421 = vsel %vm900, %v3391, 0.0
        %3422 = vadd.xlane.f32.xlu0 %v3421
        %v3423 = vpop.xlane.xlu0 %3422
        %v3424 = vsel %vm900, %v3396, 0.0
        %3425 = vadd.xlane.f32.xlu0 %v3424
        %v3426 = vpop.xlane.xlu0 %3425
        %v3427 = vsel %vm900, %v3399, 0.0
        %3428 = vadd.xlane.f32.xlu0 %v3427
        %v3429 = vpop.xlane.xlu0 %3428
        %v3430 = vsel %vm900, %v3404, 0.0
        %3431 = vadd.xlane.f32.xlu0 %v3430
        %v3432 = vpop.xlane.xlu0 %3431
        %v3433 = vsel %vm900, %v3407, 0.0
        %3434 = vadd.xlane.f32.xlu0 %v3433
        %v3435 = vpop.xlane.xlu0 %3434
        %v3436 = vsel %vm900, %v3412, 0.0
        %3437 = vadd.xlane.f32.xlu0 %v3436
        %v3438 = vpop.xlane.xlu0 %3437
        %v3439 = vsel %vm900, %v3415, 0.0
        %3440 = vadd.xlane.f32.xlu0 %v3439
        %v3441 = vpop.xlane.xlu0 %3440
        %v3442 = vmul.f32 %v3420, %v2016
        %v3443 = vmul.f32 %v3423, %v2016
        %v3444 = vmul.f32 %v3426, %v2016
        %v3445 = vmul.f32 %v3429, %v2016
        %v3446 = vmul.f32 %v3432, %v2016
        %v3447 = vmul.f32 %v3435, %v2016
        %v3448 = vmul.f32 %v3438, %v2016
        %v3449 = vmul.f32 %v3441, %v2016
        %v3450 = vsub.f32 %v3388, %v3442
        %v3451 = vsub.f32 %v3391, %v3443
        %v3452 = vsub.f32 %v3396, %v3444
        %v3453 = vsub.f32 %v3399, %v3445
        %v3454 = vsub.f32 %v3404, %v3446
        %v3455 = vsub.f32 %v3407, %v3447
        %v3456 = vsub.f32 %v3412, %v3448
        %v3457 = vsub.f32 %v3415, %v3449
        %v3458 = vmul.f32 %v3450, %v3450
        %v3459 = vmul.f32 %v3451, %v3451
        %v3460 = vmul.f32 %v3452, %v3452
        %v3461 = vmul.f32 %v3453, %v3453
        %v3462 = vmul.f32 %v3454, %v3454
        %v3463 = vmul.f32 %v3455, %v3455
        %v3464 = vmul.f32 %v3456, %v3456
        %v3465 = vmul.f32 %v3457, %v3457
        %v3466 = vsel %vm900, %v3458, 0.0
        %3467 = vadd.xlane.f32.xlu0 %v3466
        %v3468 = vpop.xlane.xlu0 %3467
        %v3469 = vsel %vm900, %v3459, 0.0
        %3470 = vadd.xlane.f32.xlu0 %v3469
        %v3471 = vpop.xlane.xlu0 %3470
        %v3472 = vsel %vm900, %v3460, 0.0
        %3473 = vadd.xlane.f32.xlu0 %v3472
        %v3474 = vpop.xlane.xlu0 %3473
        %v3475 = vsel %vm900, %v3461, 0.0
        %3476 = vadd.xlane.f32.xlu0 %v3475
        %v3477 = vpop.xlane.xlu0 %3476
        %v3478 = vsel %vm900, %v3462, 0.0
        %3479 = vadd.xlane.f32.xlu0 %v3478
        %v3480 = vpop.xlane.xlu0 %3479
        %v3481 = vsel %vm900, %v3463, 0.0
        %3482 = vadd.xlane.f32.xlu0 %v3481
        %v3483 = vpop.xlane.xlu0 %3482
        %v3484 = vsel %vm900, %v3464, 0.0
        %3485 = vadd.xlane.f32.xlu0 %v3484
        %v3486 = vpop.xlane.xlu0 %3485
        %v3487 = vsel %vm900, %v3465, 0.0
        %3488 = vadd.xlane.f32.xlu0 %v3487
        %v3489 = vpop.xlane.xlu0 %3488
        %v3490 = vmul.f32 %v3468, %v2016
        %v3491 = vmul.f32 %v3471, %v2016
        %v3492 = vmul.f32 %v3474, %v2016
        %v3493 = vmul.f32 %v3477, %v2016
        %v3494 = vmul.f32 %v3480, %v2016
        %v3495 = vmul.f32 %v3483, %v2016
        %v3496 = vmul.f32 %v3486, %v2016
        %v3497 = vmul.f32 %v3489, %v2016
        %v3498 = vadd.f32 %v3490, 1e-05
        %v3499 = vadd.f32 %v3491, 1e-05
        %v3500 = vadd.f32 %v3492, 1e-05
        %v3501 = vadd.f32 %v3493, 1e-05
        %v3502 = vadd.f32 %v3494, 1e-05
        %v3503 = vadd.f32 %v3495, 1e-05
        %v3504 = vadd.f32 %v3496, 1e-05
        %v3505 = vadd.f32 %v3497, 1e-05
        %v3506 = vrsqrt.pop %v3498
        %v3507 = vrsqrt.pop %v3499
        %v3508 = vrsqrt.pop %v3500
        %v3509 = vrsqrt.pop %v3501
        %v3510 = vrsqrt.pop %v3502
        %v3511 = vrsqrt.pop %v3503
        %v3512 = vrsqrt.pop %v3504
        %v3513 = vrsqrt.pop %v3505
        %v3514 = vmul.f32 %v3450, %v3506
        %v3515 = vmul.f32 %v3451, %v3507
        %v3516 = vmul.f32 %v3452, %v3508
        %v3517 = vmul.f32 %v3453, %v3509
        %v3518 = vmul.f32 %v3454, %v3510
        %v3519 = vmul.f32 %v3455, %v3511
        %v3520 = vmul.f32 %v3456, %v3512
        %v3521 = vmul.f32 %v3457, %v3513
        %v3522 = vmul.f32 %v3514, %v2425
        %v3523 = vmul.f32 %v3515, %v2425
        %v3524 = vmul.f32 %v3516, %v2425
        %v3525 = vmul.f32 %v3517, %v2425
        %v3526 = vmul.f32 %v3518, %v2425
        %v3527 = vmul.f32 %v3519, %v2425
        %v3528 = vmul.f32 %v3520, %v2425
        %v3529 = vmul.f32 %v3521, %v2425
        %v3530 = vadd.f32 %v3522, %v2439
        %v3531 = vadd.f32 %v3523, %v2439
        %v3532 = vadd.f32 %v3524, %v2439
        %v3533 = vadd.f32 %v3525, %v2439
        %v3534 = vadd.f32 %v3526, %v2439
        %v3535 = vadd.f32 %v3527, %v2439
        %v3536 = vadd.f32 %v3528, %v2439
        %v3537 = vadd.f32 %v3529, %v2439
        %v3538 = vadd.f32 %v3530, %v1667
        %v3539 = vadd.f32 %v3531, %v1670
        %v3540 = vadd.f32 %v3532, %v1675
        %v3541 = vadd.f32 %v3533, %v1678
        %v3542 = vadd.f32 %v3534, %v1683
        %v3543 = vadd.f32 %v3535, %v1686
        %v3544 = vadd.f32 %v3536, %v1691
        %v3545 = vadd.f32 %v3537, %v1694
        %3546 = vst.msk [vmem:[%s1721 + $0x1] sm:$0xff] %vm900, %v3538
        %3547 = vst.msk [vmem:[%s1721 + $0x11] sm:$0xff] %vm900, %v3539
        %3548 = vst.msk [vmem:[%s1721 + $0x21] sm:$0xff] %vm900, %v3540
        %3549 = vst.msk [vmem:[%s1721 + $0x31] sm:$0xff] %vm900, %v3541
        %3550 = vst.msk [vmem:[%s1721 + $0x41] sm:$0xff] %vm900, %v3542
        %3551 = vst.msk [vmem:[%s1721 + $0x51] sm:$0xff] %vm900, %v3543
        %3552 = vst.msk [vmem:[%s1721 + $0x61] sm:$0xff] %vm900, %v3544
        %3553 = vst.msk [vmem:[%s1721 + $0x71] sm:$0xff] %vm900, %v3545
        %v3554 = vld [vmem:[#allocation2] ss:$2 sm:$0xf]
        %v3555 = vld [vmem:[%s2466] ss:$2 sm:$0xf]
        %v3556 = vld [vmem:[%s2468] ss:$2 sm:$0xf]
        %v3557 = vld [vmem:[%s2470] ss:$2 sm:$0xf]
        %v3558 = vld [vmem:[%s15] sm:$0x1]
        %v3559 = vlaneseq
        %v3560 = vshrl.u32 %v3559, 7
        %v3561 = vsub.s32 0, %v3560
        %v3562 = vrot.slane %v3558, %v3561
        %v3563 = vmul.f32 %v3554, %v3562
        %v3564 = vmul.f32 %v3555, %v3562
        %v3565 = vmul.f32 %v3556, %v3562
        %v3566 = vmul.f32 %v3557, %v3562
        %v3567 = vadd.f32 %v3563, 0.0
        %v3568 = vadd.f32 %v3564, 0.0
        %v3569 = vadd.f32 %v3565, 0.0
        %v3570 = vadd.f32 %v3566, 0.0
        %v3571 = vld [vmem:[%s2485] ss:$2 sm:$0xf]
        %v3572 = vld [vmem:[%s2487] ss:$2 sm:$0xf]
        %v3573 = vld [vmem:[%s2489] ss:$2 sm:$0xf]
        %v3574 = vld [vmem:[%s2491] ss:$2 sm:$0xf]
        %v3575 = vld [vmem:[%s15 + $0x1] sm:$0x1]
        %v3576 = vlaneseq
        %v3577 = vshrl.u32 %v3576, 7
        %v3578 = vsub.s32 0, %v3577
        %v3579 = vrot.slane %v3575, %v3578
        %v3580 = vmul.f32 %v3571, %v3579
        %v3581 = vmul.f32 %v3572, %v3579
        %v3582 = vmul.f32 %v3573, %v3579
        %v3583 = vmul.f32 %v3574, %v3579
        %v3584 = vadd.f32 %v3567, %v3580
        %v3585 = vadd.f32 %v3568, %v3581
        %v3586 = vadd.f32 %v3569, %v3582
        %v3587 = vadd.f32 %v3570, %v3583
        %v3588 = vld [vmem:[%s2506] ss:$2 sm:$0xf]
        %v3589 = vld [vmem:[%s2508] ss:$2 sm:$0xf]
        %v3590 = vld [vmem:[%s2510] ss:$2 sm:$0xf]
        %v3591 = vld [vmem:[%s2512] ss:$2 sm:$0xf]
        %v3592 = vld [vmem:[%s15 + $0x2] sm:$0x1]
        %v3593 = vlaneseq
        %v3594 = vshrl.u32 %v3593, 7
        %v3595 = vsub.s32 0, %v3594
        %v3596 = vrot.slane %v3592, %v3595
        %v3597 = vmul.f32 %v3588, %v3596
        %v3598 = vmul.f32 %v3589, %v3596
        %v3599 = vmul.f32 %v3590, %v3596
        %v3600 = vmul.f32 %v3591, %v3596
        %v3601 = vadd.f32 %v3584, %v3597
        %v3602 = vadd.f32 %v3585, %v3598
        %v3603 = vadd.f32 %v3586, %v3599
        %v3604 = vadd.f32 %v3587, %v3600
        %v3605 = vld [vmem:[%s1721] ss:$2 sm:$0xf]
        %v3606 = vld [vmem:[%s2528] ss:$2 sm:$0xf]
        %v3607 = vld [vmem:[%s2530] ss:$2 sm:$0xf]
        %v3608 = vld [vmem:[%s2532] ss:$2 sm:$0xf]
        %v3609 = vld [vmem:[%s15 + $0x3] sm:$0x1]
        %v3610 = vlaneseq
        %v3611 = vshrl.u32 %v3610, 7
        %v3612 = vsub.s32 0, %v3611
        %v3613 = vrot.slane %v3609, %v3612
        %v3614 = vmul.f32 %v3605, %v3613
        %v3615 = vmul.f32 %v3606, %v3613
        %v3616 = vmul.f32 %v3607, %v3613
        %v3617 = vmul.f32 %v3608, %v3613
        %v3618 = vadd.f32 %v3601, %v3614
        %v3619 = vadd.f32 %v3602, %v3615
        %v3620 = vadd.f32 %v3603, %v3616
        %v3621 = vadd.f32 %v3604, %v3617
        %v3622 = vld [vmem:[%s2547] ss:$2 sm:$0xf]
        %v3623 = vld [vmem:[%s2549] ss:$2 sm:$0xf]
        %v3624 = vld [vmem:[%s2551] ss:$2 sm:$0xf]
        %v3625 = vld [vmem:[%s2553] ss:$2 sm:$0xf]
        %v3626 = vld [vmem:[%s15 + $0x4] sm:$0x1]
        %v3627 = vlaneseq
        %v3628 = vshrl.u32 %v3627, 7
        %v3629 = vsub.s32 0, %v3628
        %v3630 = vrot.slane %v3626, %v3629
        %v3631 = vmul.f32 %v3622, %v3630
        %v3632 = vmul.f32 %v3623, %v3630
        %v3633 = vmul.f32 %v3624, %v3630
        %v3634 = vmul.f32 %v3625, %v3630
        %v3635 = vadd.f32 %v3618, %v3631
        %v3636 = vadd.f32 %v3619, %v3632
        %v3637 = vadd.f32 %v3620, %v3633
        %v3638 = vadd.f32 %v3621, %v3634
        %v3639 = vld [vmem:[%s2568] ss:$2 sm:$0xf]
        %v3640 = vld [vmem:[%s2570] ss:$2 sm:$0xf]
        %v3641 = vld [vmem:[%s2572] ss:$2 sm:$0xf]
        %v3642 = vld [vmem:[%s2574] ss:$2 sm:$0xf]
        %v3643 = vld [vmem:[%s15 + $0x5] sm:$0x1]
        %v3644 = vlaneseq
        %v3645 = vshrl.u32 %v3644, 7
        %v3646 = vsub.s32 0, %v3645
        %v3647 = vrot.slane %v3643, %v3646
        %v3648 = vmul.f32 %v3639, %v3647
        %v3649 = vmul.f32 %v3640, %v3647
        %v3650 = vmul.f32 %v3641, %v3647
        %v3651 = vmul.f32 %v3642, %v3647
        %v3652 = vadd.f32 %v3635, %v3648
        %v3653 = vadd.f32 %v3636, %v3649
        %v3654 = vadd.f32 %v3637, %v3650
        %v3655 = vadd.f32 %v3638, %v3651
        %v3656 = vld [vmem:[%s1904] ss:$2 sm:$0xf]
        %v3657 = vld [vmem:[%s2590] ss:$2 sm:$0xf]
        %v3658 = vld [vmem:[%s2592] ss:$2 sm:$0xf]
        %v3659 = vld [vmem:[%s2594] ss:$2 sm:$0xf]
        %v3660 = vld [vmem:[%s15 + $0x6] sm:$0x1]
        %v3661 = vlaneseq
        %v3662 = vshrl.u32 %v3661, 7
        %v3663 = vsub.s32 0, %v3662
        %v3664 = vrot.slane %v3660, %v3663
        %v3665 = vmul.f32 %v3656, %v3664
        %v3666 = vmul.f32 %v3657, %v3664
        %v3667 = vmul.f32 %v3658, %v3664
        %v3668 = vmul.f32 %v3659, %v3664
        %v3669 = vadd.f32 %v3652, %v3665
        %v3670 = vadd.f32 %v3653, %v3666
        %v3671 = vadd.f32 %v3654, %v3667
        %v3672 = vadd.f32 %v3655, %v3668
        %v3673 = vld [vmem:[%s2609] ss:$2 sm:$0xf]
        %v3674 = vld [vmem:[%s2611] ss:$2 sm:$0xf]
        %v3675 = vld [vmem:[%s2613] ss:$2 sm:$0xf]
        %v3676 = vld [vmem:[%s2615] ss:$2 sm:$0xf]
        %v3677 = vld [vmem:[%s15 + $0x7] sm:$0x1]
        %v3678 = vlaneseq
        %v3679 = vshrl.u32 %v3678, 7
        %v3680 = vsub.s32 0, %v3679
        %v3681 = vrot.slane %v3677, %v3680
        %v3682 = vmul.f32 %v3673, %v3681
        %v3683 = vmul.f32 %v3674, %v3681
        %v3684 = vmul.f32 %v3675, %v3681
        %v3685 = vmul.f32 %v3676, %v3681
        %v3686 = vadd.f32 %v3669, %v3682
        %v3687 = vadd.f32 %v3670, %v3683
        %v3688 = vadd.f32 %v3671, %v3684
        %v3689 = vadd.f32 %v3672, %v3685
        %v3690 = vld [vmem:[%s2630] ss:$2 sm:$0xf]
        %v3691 = vld [vmem:[%s2632] ss:$2 sm:$0xf]
        %v3692 = vld [vmem:[%s2634] ss:$2 sm:$0xf]
        %v3693 = vld [vmem:[%s2636] ss:$2 sm:$0xf]
        %v3694 = vld [vmem:[%s15 + $0x8] sm:$0x1]
        %v3695 = vlaneseq
        %v3696 = vshrl.u32 %v3695, 7
        %v3697 = vsub.s32 0, %v3696
        %v3698 = vrot.slane %v3694, %v3697
        %v3699 = vmul.f32 %v3690, %v3698
        %v3700 = vmul.f32 %v3691, %v3698
        %v3701 = vmul.f32 %v3692, %v3698
        %v3702 = vmul.f32 %v3693, %v3698
        %v3703 = vadd.f32 %v3686, %v3699
        %v3704 = vadd.f32 %v3687, %v3700
        %v3705 = vadd.f32 %v3688, %v3701
        %v3706 = vadd.f32 %v3689, %v3702
        %3707 = vst.msk [vmem:[#allocation3] sm:$0xf] %vm2651, %v3703
        %3708 = vst.msk [vmem:[#allocation3 + $0x4] sm:$0xf] %vm2651, %v3704
        %3709 = vst.msk [vmem:[#allocation3 + $0x8] sm:$0xf] %vm2651, %v3705
        %3710 = vst.msk [vmem:[#allocation3 + $0xc] sm:$0xf] %vm2651, %v3706
        %v3711 = vld [vmem:[#allocation3] sm:$0xff]
        %v3712 = vld [vmem:[#allocation3 + $0x8] sm:$0xff]
        %v3713 = vsel %vm900, %v3711, 0.0
        %3714 = vadd.xlane.f32.xlu0 %v3713
        %v3715 = vpop.xlane.xlu0 %3714
        %v3716 = vsel %vm900, %v3712, 0.0
        %3717 = vadd.xlane.f32.xlu0 %v3716
        %v3718 = vpop.xlane.xlu0 %3717
        %v3719 = vmul.f32 %v3715, %v2016
        %v3720 = vmul.f32 %v3718, %v2016
        %v3721 = vsub.f32 %v3711, %v3719
        %v3722 = vsub.f32 %v3712, %v3720
        %v3723 = vmul.f32 %v3721, %v3721
        %v3724 = vmul.f32 %v3722, %v3722
        %v3725 = vsel %vm900, %v3723, 0.0
        %3726 = vadd.xlane.f32.xlu0 %v3725
        %v3727 = vpop.xlane.xlu0 %3726
        %v3728 = vsel %vm900, %v3724, 0.0
        %3729 = vadd.xlane.f32.xlu0 %v3728
        %v3730 = vpop.xlane.xlu0 %3729
        %v3731 = vmul.f32 %v3727, %v2016
        %v3732 = vmul.f32 %v3730, %v2016
        %v3733 = vadd.f32 %v3731, 1e-05
        %v3734 = vadd.f32 %v3732, 1e-05
        %v3735 = vrsqrt.pop %v3733
        %v3736 = vrsqrt.pop %v3734
        %v3737 = vmul.f32 %v3721, %v3735
        %v3738 = vmul.f32 %v3722, %v3736
        %v3739 = vmul.f32 %v3737, %v2688
        %v3740 = vmul.f32 %v3738, %v2688
        %v3741 = vadd.f32 %v3739, %v2696
        %v3742 = vadd.f32 %v3740, %v2696
        %v3743 = vadd.f32 %v3741, 3.0
        %v3744 = vadd.f32 %v3742, 3.0
        %v3745 = vmax.f32 %v3743, 0.0
        %v3746 = vmax.f32 %v3744, 0.0
        %v3747 = vmin.f32 %v3745, 6.0
        %v3748 = vmin.f32 %v3746, 6.0
        %v3749 = vmul.f32 %v3747, 0.16666667
        %v3750 = vmul.f32 %v3748, 0.16666667
        %v3751 = vmul.f32 %v3741, %v3749
        %v3752 = vmul.f32 %v3742, %v3750
        %v3753 = vsel %vm900, %v3751, 0.0
        %v3754 = vsel %vm900, %v3752, 0.0
        %v3755 = vadd.f32 %v3753, %v3754
        %v3756 = vrot.slane %v3755, 4
        %v3757 = vadd.f32 %v3755, %v3756
        %v3758 = vrot.slane %v3757, 2
        %v3759 = vadd.f32 %v3757, %v3758
        %v3760 = vrot.slane %v3759, 1
        %v3761 = vadd.f32 %v3759, %v3760
        %v3762 = vmul.f32 %v3761, %v2719
        %v3763 = vmul.f32 %v1711, %v3762
        %v3764 = vsel %vm900, %v3763, 0.0
        %3765 = vadd.xlane.f32.xlu0 %v3764
        %v3766 = vpop.xlane.xlu0 %3765
        %v3767 = vadd.f32 %v3766, %v1712
        %v3768 = vmax.f32 %v3767, 0.0
        %3770 = vset.pattern.permute.xlu0 0
        %3771 = vperm.xlu0 %3770, %v3768
        %v3772 = vpop.permute.xlu0 %3771
        %v3774 = vmul.f32 %v1713, %v3772
        %v3775 = vsel %vm900, %v3774, 0.0
        %v3776 = vrot.slane %v3775, 4
        %v3777 = vadd.f32 %v3775, %v3776
        %v3778 = vrot.slane %v3777, 2
        %v3779 = vadd.f32 %v3777, %v3778
        %v3780 = vrot.slane %v3779, 1
        %v3781 = vadd.f32 %v3779, %v3780
        %v3782 = vadd.f32 %v3781, %v1714
        %v3783 = vadd.f32 %v3782, 3.0
        %v3784 = vmax.f32 %v3783, 0.0
        %v3785 = vmin.f32 %v3784, 6.0
        %v3786 = vmul.f32 %v3785, 0.16666667
        %v3787 = vlaneseq
        %v3788 = vshrl.u32 %v3787, 7
        %v3789 = vsub.s32 0, %v3788
        %v3790 = vrot.slane %v3786, %v3789
        %v3791 = vmul.f32 %v3751, %v3790
        %v3792 = vmul.f32 %v3752, %v3790
        %v3793 = vpack.c.bf16 %v3792, %v3791
        %v3795 = vsel %vm900, %v3793, 0
        %3797 = vmatprep.subr.bf16.mxu0 0
        %3798 = vmatpush1.bf16.msra.mxu0 %v2760
        %3799 = vmatprep.subr.bf16.mxu0 0
        %3800 = vmatpush1.bf16.msra.mxu0 %v2761
        %3801 = vmatprep.subr.bf16.mxu0 0
        %3802 = vmatpush1.bf16.msra.mxu0 0
        %3803 = vmatprep.subr.bf16.mxu0 0
        %3804 = vmatpush1.bf16.msra.mxu0 0
        %3805 = vmatprep.subr.bf16.mxu0 0
        %3806 = vmatpush1.bf16.msra.mxu0 0
        %3807 = vmatprep.subr.bf16.mxu0 0
        %3808 = vmatpush1.bf16.msra.mxu0 0
        %3809 = vmatprep.subr.bf16.mxu0 0
        %3810 = vmatpush1.bf16.msra.mxu0 0
        %3811 = vmatprep.subr.bf16.mxu0 0
        %3812 = vmatpush1.bf16.msra.mxu0 0
        %3813 = vmatprep.subr.bf16.mxu0 0
        %3814 = vmatpush1.bf16.msra.mxu0 0
        %3815 = vmatprep.subr.bf16.mxu0 0
        %3816 = vmatpush1.bf16.msra.mxu0 0
        %3817 = vmatprep.subr.bf16.mxu0 0
        %3818 = vmatpush1.bf16.msra.mxu0 0
        %3819 = vmatprep.subr.bf16.mxu0 0
        %3820 = vmatpush1.bf16.msra.mxu0 0
        %3821 = vmatprep.subr.bf16.mxu0 0
        %3822 = vmatpush1.bf16.msra.mxu0 0
        %3823 = vmatprep.subr.bf16.mxu0 0
        %3824 = vmatpush1.bf16.msra.mxu0 0
        %3825 = vmatprep.subr.bf16.mxu0 0
        %3826 = vmatpush1.bf16.msra.mxu0 0
        %3827 = vmatprep.subr.bf16.mxu0 0
        %3828 = vmatpush1.bf16.msra.mxu0 0
        %3829 = vmatprep.mubr.bf16.mxu0 0
        %3830 = vmatmul.mubr.bf16.gmra.mrb[0].mxu0 %v3795
        %v3831 = vpop.f32.mrb[0].mxu0
        %v3832 = vadd.f32 0.0, %v3831
        %v3833 = vpop.f32.mrb[0].mxu0
        %v3834 = vpop.f32.mrb[0].mxu0
        %v3835 = vadd.f32 0.0, %v3834
        %v3836 = vpop.f32.mrb[0].mxu0
        %3837 = vdwg.mxu0
        %v3838 = vsel %vm900, %v3832, 0.0
        %3839 = vadd.xlane.f32.xlu0 %v3838
        %v3840 = vpop.xlane.xlu0 %3839
        %v3841 = vsel %vm900, %v3835, 0.0
        %3842 = vadd.xlane.f32.xlu0 %v3841
        %v3843 = vpop.xlane.xlu0 %3842
        %v3844 = vmul.f32 %v3840, %v2016
        %v3845 = vmul.f32 %v3843, %v2016
        %v3846 = vsub.f32 %v3832, %v3844
        %v3847 = vsub.f32 %v3835, %v3845
        %v3848 = vmul.f32 %v3846, %v3846
        %v3849 = vmul.f32 %v3847, %v3847
        %v3850 = vsel %vm900, %v3848, 0.0
        %3851 = vadd.xlane.f32.xlu0 %v3850
        %v3852 = vpop.xlane.xlu0 %3851
        %v3853 = vsel %vm900, %v3849, 0.0
        %3854 = vadd.xlane.f32.xlu0 %v3853
        %v3855 = vpop.xlane.xlu0 %3854
        %v3856 = vmul.f32 %v3852, %v2016
        %v3857 = vmul.f32 %v3855, %v2016
        %v3858 = vadd.f32 %v3856, 1e-05
        %v3859 = vadd.f32 %v3857, 1e-05
        %v3860 = vrsqrt.pop %v3858
        %v3861 = vrsqrt.pop %v3859
        %v3862 = vmul.f32 %v3846, %v3860
        %v3863 = vmul.f32 %v3847, %v3861
        %v3864 = vmul.f32 %v3862, %v2838
        %v3865 = vmul.f32 %v3863, %v2838
        %v3866 = vadd.f32 %v3864, %v2846
        %v3867 = vadd.f32 %v3865, %v2846
        %3868 = vst.msk [vmem:[%s896] sm:$0xff] %vm900, %v2848
        %3869 = vst.msk [vmem:[%s896 + $0x8] sm:$0xff] %vm900, %v2849
        %3870 = vst.msk [vmem:[%s896 + $0x10] sm:$0xff] %vm900, %v3866
        %3871 = vst.msk [vmem:[%s896 + $0x18] sm:$0xff] %vm900, %v3867
        %s3872 = sand.u32 %s585, 1
        %s3873 = scalar_lea.sflag [#allocation6], %s3872
        %s3874 = sand.u32 %s585, 1
        %s3875 = smul.addr %s3874, 32
        %s3876 = scalar_lea.vmem [#allocation21], %s3875
        // Predicated region
        $region161: #{ldp_block_forward.1} parent=119 // pred_check
          %p3877 = pneg %p595
        $region162: #{ldp_block_forward.1} parent=119 // pred_check_branch
          %3879 = sbr.rel (%p3877) target = $region164
        $region163: #{ldp_block_forward.1} parent=119 // pred_region
          %s3880 = smul.u32 2, %s47
          %s3882 = ssub.s32 512, 512
          %3883 = vsyncadd %s3873, %s3882
          %s3884 = smul.addr %s3880, 2
          %s3885 = smul.addr %s3884, 128
          %s3886 = scalar_lea.hbm %s25, %s3885
          %s3887 = sshll.u32 %s3876, 4
          %s3888 = int_to_ptr.vmem [resolvable:$true] %s3887
          %3893 = dma.vmem_to_hbm [thread:$0]  %s3888, 512, %s3886, %s3873, 128, 128, 8
        $region164: #{ldp_block_forward.1} parent=119 // pred_fallthru
          _
      $region120: #{ldp_block_forward.1} parent=5 // pred_fallthru
        _
      %p3894 = scmp.le.s32.totalorder 2, %s42
      // Predicated region
      $region165: #{ldp_block_forward.1} parent=5 // pred_check
        %p3895 = pneg %p3894
      $region166: #{ldp_block_forward.1} parent=5 // pred_check_branch
        %3897 = sbr.rel (%p3895) target = $region168
      $region167: #{ldp_block_forward.1} parent=5 // pred_region
        %s3898 = ssub.s32 %s42, 2
        // Predicated region
        $region169: #{ldp_block_forward.1} parent=167 // pred_check
          %p3899 = pneg %p601
        $region170: #{ldp_block_forward.1} parent=167 // pred_check_branch
          %3901 = sbr.rel (%p3899) target = $region172
        $region171: #{ldp_block_forward.1} parent=167 // pred_region
          %s3902 = sand.u32 %s586, 1
          %s3903 = scalar_lea.sflag [#allocation6], %s3902
          %s3904 = sand.u32 %s586, 1
          %s3905 = smul.addr %s3904, 32
          %s3906 = scalar_lea.vmem [#allocation21], %s3905
          %3907 = dma.done %s3903, 512
        $region172: #{ldp_block_forward.1} parent=167 // pred_fallthru
          _
      $region168: #{ldp_block_forward.1} parent=5 // pred_fallthru
        _
    $region6: #{ldp_block_forward.1} parent=1 // loop_footer
      %s46 = sadd.s32 1, %s42
    $region7: #{ldp_block_forward.1} parent=1 // loop_footer_branch
      %41 = sbr.rel target = $region3
    $region8: #{ldp_block_forward.1} parent=1 // loop_exit
      _
    %3908 = vsyncpa [#allocation5], 1
    %s3909 = scalar_lea.sflag [#allocation5], 1
    %3910 = vsyncpa %s3909, 1
    %3911 = vsyncpa [#allocation8], 1
    %3912 = vsyncpa [#allocation11], 1
    %3913 = vsyncpa [#allocation14], 1
    %3914 = vsyncpa [#allocation17], 1
    %3915 = vsyncpa [#allocation20], 1
    %3916 = vsyncpa [#allocation6], 1
    %s3917 = scalar_lea.sflag [#allocation6], 1
    %3918 = vsyncpa %s3917, 1

</llo_original>
